<compile_context>
chip_gen: v5e
topology: v5e:2x2
jax: 0.10.0
libtpu: 0.0.40
codegen_flags: <defaults>
</compile_context>

<pallas_src>
import functools

import numpy as np
import jax
import jax.numpy as jnp
from jax import lax
from jax.experimental import pallas as pl
from jax.experimental.pallas import tpu as pltpu


def _deform_kernel(patches_ref, y_ref, base_ref, woff_ref, boff_ref, breg_ref,
                   out_ref, *, K, H_in, W_in, C_out, chunk, n_chunks,
                   max_unrolled_chunks):
    """One (batch, position-tile) grid step.

    patches_ref : [CKK, TP]                   im2col columns (f32)
    y_ref       : [n_chunks, C_out, KK*chunk] pre-multiplied per-(chunk,tap) values (bf16)
    base_ref    : [2, TP]                     row0 = h*stride - pad, row1 = w*stride - pad
    woff_ref    : [2KK, CKK]                  offset weights, rows = [dy_0..dy_8 | dx_0..dx_8]
    boff_ref    : [2KK, 1]                    offset bias with the tap (i, j) origin folded in
    breg_ref    : [C_out, 1]
    out_ref     : [C_out, TP]                 lane-dense output tile (f32)
    """
    TP = patches_ref.shape[1]
    KK = K * K

    # --- offset conv, kept in f32 (it feeds floor / index math) ------------------
    offs = jnp.dot(woff_ref[...], patches_ref[...],
                   preferred_element_type=jnp.float32) + boff_ref[...]   # [2KK, TP]
    dy = offs[0:KK, :]           # [KK, TP]
    dx = offs[KK:2 * KK, :]      # [KK, TP]

    # --- sampling geometry for ALL taps at once, [KK, TP] (positions on lanes) ---
    y = base_ref[0:1, :] + dy    # tap row offset i already folded into boff
    x = base_ref[1:2, :] + dx    # tap col offset j already folded into boff
    y0 = jnp.floor(y)
    x0 = jnp.floor(x)
    ly = y - y0
    lx = x - x0
    y0i = y0.astype(jnp.int32)
    x0i = x0.astype(jnp.int32)
    base_idx = y0i * W_in + x0i  # flat index of the top-left corner, [KK, TP]

    vy0 = (y0i >= 0) & (y0i < H_in)
    vy1 = (y0i + 1 >= 0) & (y0i + 1 < H_in)
    vx0 = (x0i >= 0) & (x0i < W_in)
    vx1 = (x0i + 1 >= 0) & (x0i + 1 < W_in)

    # Validity-folded bilinear corner weights (invalid corner -> 0).  Folding here keeps
    # the select chain correct when an out-of-range corner's flat index aliases a
    # neighbouring row (e.g. x0 + 1 == W_in) and makes the HW zero-padding safe.
    w00 = jnp.where(vy0 & vx0, (1.0 - ly) * (1.0 - lx), 0.0)
    w01 = jnp.where(vy0 & vx1, (1.0 - ly) * lx, 0.0)
    w10 = jnp.where(vy1 & vx0, ly * (1.0 - lx), 0.0)
    w11 = jnp.where(vy1 & vx1, ly * lx, 0.0)

    # --- chunk-invariant 3-D slabs, hoisted out of the chunk loop ----------------
    shp3 = (KK, chunk, TP)
    s_iota = lax.broadcasted_iota(jnp.int32, shp3, 1)      # position within a chunk
    d0 = s_iota - base_idx[:, None, :]                     # [KK, chunk, TP]
    w00b = jnp.broadcast_to(w00[:, None, :], shp3)
    w01b = jnp.broadcast_to(w01[:, None, :], shp3)
    w10b = jnp.broadcast_to(w10[:, None, :], shp3)
    w11b = jnp.broadcast_to(w11[:, None, :], shp3)

    acc0 = jnp.zeros((C_out, TP), jnp.float32) + breg_ref[...]

    def chunk_step(c, acc):
        # d = (flat HW index of this chunk position) - (top-left corner flat index);
        # d in {0, 1, W, W+1} selects one of the 4 bilinear corners.
        d = d0 + c * chunk
        m = jnp.where(d == 0, w00b,
            jnp.where(d == 1, w01b,
            jnp.where(d == W_in, w10b,
            jnp.where(d == W_in + 1, w11b, 0.0))))          # [KK, chunk, TP]
        m = m.reshape(KK * chunk, TP).astype(jnp.bfloat16)
        # One fused bf16 MXU matmul per chunk over all KK taps (K-dim = KK*chunk).
        return acc + jnp.dot(y_ref[c], m, preferred_element_type=jnp.float32)

    # TODO(synk): per-tile chunk skip (@pl.when on min/max(base_idx) overlap) once the
    # accumulator moves to a VMEM scratch ref; pays off when HW >> chunk.
    if n_chunks <= max_unrolled_chunks:
        acc = acc0
        for c in range(n_chunks):
            acc = chunk_step(c, acc)
    else:
        acc = lax.fori_loop(0, n_chunks, chunk_step, acc0, unroll=2)

    out_ref[...] = jnp.maximum(acc, 0.0)    # already lane-dense [C_out, TP]


def deformable_conv2d_pallas(x, w_off, b_off, w_reg, b_reg, *,
                             stride=1, padding=1, tile_p=128,
                             max_unrolled_chunks=8):
    sh, sw = (stride, stride) if isinstance(stride, int) else stride
    B, C_in, H, W = x.shape
    C_out, _, K, _ = w_reg.shape
    KK = K * K
    CKK = C_in * KK
    H_out = (H + 2 * padding - K) // sh + 1
    W_out = (W + 2 * padding - K) // sw + 1
    P = H_out * W_out
    HW = H * W
    assert W >= 2, "corner select chain assumes W_in >= 2 (d==1 vs d==W_in)"
    assert tile_p % 128 == 0

    CHUNK = 128
    HW_pad = ((HW + CHUNK - 1) // CHUNK) * CHUNK       # pad flat image to 128-lane chunks
    n_chunks = HW_pad // CHUNK
    P_pad = ((P + tile_p - 1) // tile_p) * tile_p      # pad output positions to whole tiles

    x = x.astype(jnp.float32)

    # --- glue: im2col columns for the offset conv: [B, CKK, P_pad] (c-major, tap-minor) ---
    xp = jnp.pad(x, ((0, 0), (0, 0), (padding, padding), (padding, padding)))
    cols = []
    for i in range(K):
        for j in range(K):
            cols.append(xp[:, :, i:i + sh * H_out:sh, j:j + sw * W_out:sw])
    patches = jnp.stack(cols, axis=2).reshape(B, CKK, P)
    patches = jnp.pad(patches, ((0, 0), (0, 0), (0, P_pad - P)))

    # --- glue: pre-multiplied per-tap values, laid out per 128-lane HW chunk (bf16) -------
    #   y_vals[b, c, o, t*CHUNK + s] = sum_ci x[b, ci, flat = c*CHUNK + s] * w_reg[o, ci, i_t, j_t]
    x_flat = x.reshape(B, C_in, HW).transpose(0, 2, 1)                    # [B, HW, C_in]
    x_flat = jnp.pad(x_flat, ((0, 0), (0, HW_pad - HW), (0, 0)))
    wreg_taps = jnp.transpose(w_reg, (2, 3, 1, 0)).reshape(KK, C_in, C_out).astype(jnp.float32)
    y_full = jnp.einsum("bpc,tco->btop", x_flat, wreg_taps)               # [B, KK, C_out, HW_pad]
    y_vals = (y_full.reshape(B, KK, C_out, n_chunks, CHUNK)
              .transpose(0, 3, 2, 1, 4)
              .reshape(B, n_chunks, C_out, KK * CHUNK)
              .astype(jnp.bfloat16))                                      # bf16 MXU operand

    # --- glue: base sampling origin per output position: [2, P_pad] -----------------------
    hs = (jnp.arange(H_out) * sh - padding).astype(jnp.float32)
    ws = (jnp.arange(W_out) * sw - padding).astype(jnp.float32)
    base = jnp.stack(jnp.meshgrid(hs, ws, indexing="ij"), axis=-1).reshape(P, 2).T
    base = jnp.pad(base, ((0, 0), (0, P_pad - P)))

    # --- glue: weights; de-interleave offset channels into [dy block | dx block] and
    #     fold the constant per-tap origin (i, j) into the offset-conv bias. ---------------
    perm = np.concatenate([np.arange(0, 2 * KK, 2), np.arange(1, 2 * KK, 2)])
    woff_mat = w_off.reshape(2 * KK, CKK).astype(jnp.float32)[perm]       # [2KK, CKK]
    tap_ij = np.concatenate([np.repeat(np.arange(K), K),
                             np.tile(np.arange(K), K)]).astype(np.float32)
    boff_mat = (b_off.astype(jnp.float32)[perm] + tap_ij).reshape(2 * KK, 1)
    breg_mat = b_reg.astype(jnp.float32).reshape(C_out, 1)

    kernel = functools.partial(_deform_kernel, K=K, H_in=H, W_in=W, C_out=C_out,
                               chunk=CHUNK, n_chunks=n_chunks,
                               max_unrolled_chunks=max_unrolled_chunks)

    flops = 2 * B * P_pad * (CKK * 2 * KK + KK * HW_pad * C_out)
    bytes_accessed = (4 * B * CKK * P_pad + 2 * B * n_chunks * C_out * KK * CHUNK +
                      4 * 2 * P_pad + 4 * (2 * KK * CKK + 2 * KK + C_out) +
                      4 * B * C_out * P_pad)

    # TODO(synk): for very large HW*KK*C_out (v7x: 64 MiB VMEM) switch the Y operand to
    # memory_space=pl.ANY + manual per-chunk double-buffered DMA instead of full residency.
    out = pl.pallas_call(
        kernel,
        out_shape=jax.ShapeDtypeStruct((B, C_out, P_pad), jnp.float32),
        grid=(B, P_pad // tile_p),
        in_specs=[
            pl.BlockSpec((None, CKK, tile_p), lambda b, p: (b, 0, p)),                    # patches^T
            pl.BlockSpec((None, n_chunks, C_out, KK * CHUNK), lambda b, p: (b, 0, 0, 0)), # Y
            pl.BlockSpec((2, tile_p), lambda b, p: (0, p)),                               # base^T
            pl.BlockSpec((2 * KK, CKK), lambda b, p: (0, 0)),                             # W_off
            pl.BlockSpec((2 * KK, 1), lambda b, p: (0, 0)),                               # b_off
            pl.BlockSpec((C_out, 1), lambda b, p: (0, 0)),                                # b_reg
        ],
        out_specs=pl.BlockSpec((None, C_out, tile_p), lambda b, p: (b, 0, p)),
        compiler_params=pltpu.CompilerParams(
            # Batch axis "parallel": on a v7x megacore the split happens over B, so each
            # core keeps exactly one batch's Y slab resident; position tiles run
            # sequentially per core (Y index_map depends only on b -> no re-fetch).
            dimension_semantics=("parallel", "arbitrary"),
            vmem_limit_bytes=48 * 1024 * 1024),
        cost_estimate=pl.CostEstimate(flops=flops, transcendentals=0,
                                      bytes_accessed=bytes_accessed),
    )(patches, y_vals, base, woff_mat, boff_mat, breg_mat)

    # Output is already channel-major (NCHW-flat): slice the position padding and reshape.
    return out[:, :, :P].reshape(B, C_out, H_out, W_out)


# ----------------------- pure-JAX reference (for checking) -----------------------
def deformable_conv2d_ref(x, w_off, b_off, w_reg, b_reg, *, stride=1, padding=1):
    sh, sw = (stride, stride) if isinstance(stride, int) else stride
    K = w_reg.shape[-1]
    x = x.astype(jnp.float32)
    offset = lax.conv_general_dilated(
        x, w_off.astype(jnp.float32), (sh, sw),
        [(padding, padding), (padding, padding)],
        dimension_numbers=("NCHW", "OIHW", "NCHW")) + b_off[None, :, None, None]
    B, C, H, W = x.shape
    C_out = w_reg.shape[0]
    H_out, W_out = offset.shape[2], offset.shape[3]
    h_idx = jnp.arange(H_out)
    w_idx = jnp.arange(W_out)
    acc = jnp.zeros((B, C_out, H_out, W_out), jnp.float32) + b_reg[None, :, None, None]
    bi = jnp.arange(B)[:, None, None, None]
    ci = jnp.arange(C)[None, :, None, None]
    for t in range(K * K):
        i, j = t // K, t % K
        dy = offset[:, 2 * t]
        dx = offset[:, 2 * t + 1]
        y = h_idx[None, :, None] * sh - padding + i + dy
        xq = w_idx[None, None, :] * sw - padding + j + dx
        y0 = jnp.floor(y); x0 = jnp.floor(xq)
        ly = y - y0; lx = xq - x0
        y0i = y0.astype(jnp.int32); x0i = x0.astype(jnp.int32)
        sample = jnp.zeros((B, C, H_out, W_out), jnp.float32)
        for yi, xi, wgt in ((y0i, x0i, (1 - ly) * (1 - lx)),
                            (y0i, x0i + 1, (1 - ly) * lx),
                            (y0i + 1, x0i, ly * (1 - lx)),
                            (y0i + 1, x0i + 1, ly * lx)):
            valid = (yi >= 0) & (yi < H) & (xi >= 0) & (xi < W)
            yc = jnp.clip(yi, 0, H - 1)
            xc = jnp.clip(xi, 0, W - 1)
            v = x[bi, ci, yc[:, None], xc[:, None]]
            sample = sample + jnp.where(valid, wgt, 0.0)[:, None] * v
        acc = acc + jnp.einsum("bchw,oc->bohw", sample, w_reg[:, :, i, j].astype(jnp.float32))
    return jnp.maximum(acc, 0.0)


if __name__ == "__main__":
    B, C_in, H, W = 2, 4, 16, 16
    C_out, K, stride, padding = 8, 3, 1, 1

    key = jax.random.PRNGKey(0)
    k1, k2, k3, k4 = jax.random.split(key, 4)
    x = jax.random.normal(k1, (B, C_in, H, W), jnp.float32)

    # offset_conv params (module inits them to 0; use small deterministic values here
    # so the bilinear-sampling path is actually exercised)
    w_off = 0.1 * jax.random.normal(k2, (2 * K * K, C_in, K, K), jnp.float32)
    b_off = 0.05 * jax.random.normal(k3, (2 * K * K,), jnp.float32)
    # regular_conv params (bias=False in the module -> deform_conv2d bias defaults to 0)
    w_reg = jax.random.normal(k4, (C_out, C_in, K, K), jnp.float32) / (C_in * K * K) ** 0.5
    b_reg = jnp.zeros((C_out,), jnp.float32)

    out = deformable_conv2d_pallas(x, w_off, b_off, w_reg, b_reg,
                                   stride=stride, padding=padding)
    out = jax.block_until_ready(out)

    ref = jax.block_until_ready(
        deformable_conv2d_ref(x, w_off, b_off, w_reg, b_reg,
                              stride=stride, padding=padding))
    assert out.shape == (B, C_out, H, W)
    # Sampling matmul now runs in bf16 on the MXU (per perf review); parity vs the f32
    # reference is checked at 3e-2 (f32 accumulation, bf16 operand rounding only).
    max_err = float(jnp.max(jnp.abs(out - ref)))
    assert jnp.allclose(out, ref, rtol=3e-2, atol=3e-2), max_err

    print("KERNEL_OK")
</pallas_src>

<mosaic_0001>
module attributes {stable_mosaic.version = 11 : i64} {
  func.func @_deform_kernel(%arg0: i32, %arg1: i32, %arg2: memref<1x36x128xf32, #tpu.memory_space<vmem>>, %arg3: memref<1x2x8x1152xbf16, #tpu.memory_space<vmem>>, %arg4: memref<2x128xf32, #tpu.memory_space<vmem>>, %arg5: memref<18x36xf32, #tpu.memory_space<vmem>>, %arg6: memref<18x1xf32, #tpu.memory_space<vmem>>, %arg7: memref<8x1xf32, #tpu.memory_space<vmem>>, %arg8: memref<1x8x128xf32, #tpu.memory_space<vmem>>) attributes {dimension_semantics = [#tpu.dimension_semantics<parallel>, #tpu.dimension_semantics<arbitrary>], iteration_bounds = array<i64: 2, 2>, scalar_prefetch = 0 : i64, scratch_operands = 0 : i64, tpu.core_type = #tpu.core_type<tc>, window_params = [{transform_indices = @transform_0, window_bounds = array<i64: 1, 36, 128>}, {transform_indices = @transform_1, window_bounds = array<i64: 1, 2, 8, 1152>}, {transform_indices = @transform_2, window_bounds = array<i64: 2, 128>}, {pipeline_mode = #tpu.pipeline_mode<synchronous>, transform_indices = @transform_3, window_bounds = array<i64: 18, 36>}, {pipeline_mode = #tpu.pipeline_mode<synchronous>, transform_indices = @transform_4, window_bounds = array<i64: 18, 1>}, {pipeline_mode = #tpu.pipeline_mode<synchronous>, transform_indices = @transform_5, window_bounds = array<i64: 8, 1>}, {transform_indices = @transform_6, window_bounds = array<i64: 1, 8, 128>}]} {
    %c0 = arith.constant 0 : index
    %c0_0 = arith.constant 0 : index
    %0 = vector.load %arg5[%c0, %c0_0] : memref<18x36xf32, #tpu.memory_space<vmem>>, vector<18x36xf32>
    %c0_1 = arith.constant 0 : index
    %c0_2 = arith.constant 0 : index
    %c0_3 = arith.constant 0 : index
    %1 = vector.load %arg2[%c0_1, %c0_2, %c0_3] : memref<1x36x128xf32, #tpu.memory_space<vmem>>, vector<1x36x128xf32>
    %2 = vector.shape_cast %1 : vector<1x36x128xf32> to vector<36x128xf32>
    %cst = arith.constant dense<0.000000e+00> : vector<18x128xf32>
    %3 = tpu.matmul %0, %2, %cst {dimension_numbers = #tpu.dot_dimension_numbers<[1], [0], [0], [1], [0, 0, 1, 1], [], []>} : vector<18x36xf32>, vector<36x128xf32>, vector<18x128xf32> -> vector<18x128xf32>
    %c0_4 = arith.constant 0 : index
    %c0_5 = arith.constant 0 : index
    %4 = vector.load %arg6[%c0_4, %c0_5] : memref<18x1xf32, #tpu.memory_space<vmem>>, vector<18x1xf32>
    %5 = vector.broadcast %4 : vector<18x1xf32> to vector<18x128xf32>
    %6 = arith.addf %3, %5 : vector<18x128xf32>
    %7 = vector.extract_strided_slice %6 {offsets = [0, 0], sizes = [9, 128], strides = [1, 1]} : vector<18x128xf32> to vector<9x128xf32>
    %8 = vector.extract_strided_slice %6 {offsets = [9, 0], sizes = [9, 128], strides = [1, 1]} : vector<18x128xf32> to vector<9x128xf32>
    %c0_6 = arith.constant 0 : index
    %c0_7 = arith.constant 0 : index
    %9 = vector.load %arg4[%c0_6, %c0_7] : memref<2x128xf32, #tpu.memory_space<vmem>>, vector<1x128xf32>
    %10 = vector.broadcast %9 : vector<1x128xf32> to vector<9x128xf32>
    %11 = arith.addf %10, %7 : vector<9x128xf32>
    %c1 = arith.constant 1 : index
    %c0_8 = arith.constant 0 : index
    %12 = vector.load %arg4[%c1, %c0_8] : memref<2x128xf32, #tpu.memory_space<vmem>>, vector<1x128xf32>
    %13 = vector.broadcast %12 : vector<1x128xf32> to vector<9x128xf32>
    %14 = arith.addf %13, %8 : vector<9x128xf32>
    %15 = math.floor %11 : vector<9x128xf32>
    %16 = math.floor %14 : vector<9x128xf32>
    %17 = arith.subf %11, %15 : vector<9x128xf32>
    %18 = arith.subf %14, %16 : vector<9x128xf32>
    %19 = arith.fptosi %15 : vector<9x128xf32> to vector<9x128xi32>
    %20 = arith.fptosi %16 : vector<9x128xf32> to vector<9x128xi32>
    %c16_i32 = arith.constant 16 : i32
    %21 = vector.broadcast %c16_i32 : i32 to vector<9x128xi32>
    %22 = arith.muli %19, %21 : vector<9x128xi32>
    %23 = arith.addi %22, %20 : vector<9x128xi32>
    %c0_i32 = arith.constant 0 : i32
    %24 = vector.broadcast %c0_i32 : i32 to vector<9x128xi32>
    %25 = arith.cmpi sge, %19, %24 : vector<9x128xi32>
    %c16_i32_9 = arith.constant 16 : i32
    %26 = vector.broadcast %c16_i32_9 : i32 to vector<9x128xi32>
    %27 = arith.cmpi slt, %19, %26 : vector<9x128xi32>
    %28 = arith.andi %25, %27 : vector<9x128xi1>
    %c1_i32 = arith.constant 1 : i32
    %29 = vector.broadcast %c1_i32 : i32 to vector<9x128xi32>
    %30 = arith.addi %19, %29 : vector<9x128xi32>
    %c0_i32_10 = arith.constant 0 : i32
    %31 = vector.broadcast %c0_i32_10 : i32 to vector<9x128xi32>
    %32 = arith.cmpi sge, %30, %31 : vector<9x128xi32>
    %c1_i32_11 = arith.constant 1 : i32
    %33 = vector.broadcast %c1_i32_11 : i32 to vector<9x128xi32>
    %34 = arith.addi %19, %33 : vector<9x128xi32>
    %c16_i32_12 = arith.constant 16 : i32
    %35 = vector.broadcast %c16_i32_12 : i32 to vector<9x128xi32>
    %36 = arith.cmpi slt, %34, %35 : vector<9x128xi32>
    %37 = arith.andi %32, %36 : vector<9x128xi1>
    %c0_i32_13 = arith.constant 0 : i32
    %38 = vector.broadcast %c0_i32_13 : i32 to vector<9x128xi32>
    %39 = arith.cmpi sge, %20, %38 : vector<9x128xi32>
    %c16_i32_14 = arith.constant 16 : i32
    %40 = vector.broadcast %c16_i32_14 : i32 to vector<9x128xi32>
    %41 = arith.cmpi slt, %20, %40 : vector<9x128xi32>
    %42 = arith.andi %39, %41 : vector<9x128xi1>
    %c1_i32_15 = arith.constant 1 : i32
    %43 = vector.broadcast %c1_i32_15 : i32 to vector<9x128xi32>
    %44 = arith.addi %20, %43 : vector<9x128xi32>
    %c0_i32_16 = arith.constant 0 : i32
    %45 = vector.broadcast %c0_i32_16 : i32 to vector<9x128xi32>
    %46 = arith.cmpi sge, %44, %45 : vector<9x128xi32>
    %c1_i32_17 = arith.constant 1 : i32
    %47 = vector.broadcast %c1_i32_17 : i32 to vector<9x128xi32>
    %48 = arith.addi %20, %47 : vector<9x128xi32>
    %c16_i32_18 = arith.constant 16 : i32
    %49 = vector.broadcast %c16_i32_18 : i32 to vector<9x128xi32>
    %50 = arith.cmpi slt, %48, %49 : vector<9x128xi32>
    %51 = arith.andi %46, %50 : vector<9x128xi1>
    %52 = arith.andi %28, %42 : vector<9x128xi1>
    %cst_19 = arith.constant 1.000000e+00 : f32
    %53 = vector.broadcast %cst_19 : f32 to vector<9x128xf32>
    %54 = arith.subf %53, %17 : vector<9x128xf32>
    %cst_20 = arith.constant 1.000000e+00 : f32
    %55 = vector.broadcast %cst_20 : f32 to vector<9x128xf32>
    %56 = arith.subf %55, %18 : vector<9x128xf32>
    %57 = arith.mulf %54, %56 : vector<9x128xf32>
    %cst_21 = arith.constant 0.000000e+00 : f32
    %58 = vector.broadcast %cst_21 : f32 to vector<9x128xf32>
    %59 = arith.select %52, %57, %58 : vector<9x128xi1>, vector<9x128xf32>
    %60 = arith.andi %28, %51 : vector<9x128xi1>
    %cst_22 = arith.constant 1.000000e+00 : f32
    %61 = vector.broadcast %cst_22 : f32 to vector<9x128xf32>
    %62 = arith.subf %61, %17 : vector<9x128xf32>
    %63 = arith.mulf %62, %18 : vector<9x128xf32>
    %cst_23 = arith.constant 0.000000e+00 : f32
    %64 = vector.broadcast %cst_23 : f32 to vector<9x128xf32>
    %65 = arith.select %60, %63, %64 : vector<9x128xi1>, vector<9x128xf32>
    %66 = arith.andi %37, %42 : vector<9x128xi1>
    %cst_24 = arith.constant 1.000000e+00 : f32
    %67 = vector.broadcast %cst_24 : f32 to vector<9x128xf32>
    %68 = arith.subf %67, %18 : vector<9x128xf32>
    %69 = arith.mulf %17, %68 : vector<9x128xf32>
    %cst_25 = arith.constant 0.000000e+00 : f32
    %70 = vector.broadcast %cst_25 : f32 to vector<9x128xf32>
    %71 = arith.select %66, %69, %70 : vector<9x128xi1>, vector<9x128xf32>
    %72 = arith.andi %37, %51 : vector<9x128xi1>
    %73 = arith.mulf %17, %18 : vector<9x128xf32>
    %cst_26 = arith.constant 0.000000e+00 : f32
    %74 = vector.broadcast %cst_26 : f32 to vector<9x128xf32>
    %75 = arith.select %72, %73, %74 : vector<9x128xi1>, vector<9x128xf32>
    %76 = tpu.iota {dimensions = array<i32: 1>} : vector<9x128x128xi32>
    %77 = vector.shape_cast %23 : vector<9x128xi32> to vector<9x1x128xi32>
    %78 = vector.broadcast %77 : vector<9x1x128xi32> to vector<9x128x128xi32>
    %79 = arith.subi %76, %78 : vector<9x128x128xi32>
    %80 = vector.shape_cast %59 : vector<9x128xf32> to vector<9x1x128xf32>
    %81 = vector.shape_cast %80 : vector<9x1x128xf32> to vector<9x1x128xf32>
    %82 = vector.broadcast %81 : vector<9x1x128xf32> to vector<9x128x128xf32>
    %83 = vector.shape_cast %65 : vector<9x128xf32> to vector<9x1x128xf32>
    %84 = vector.shape_cast %83 : vector<9x1x128xf32> to vector<9x1x128xf32>
    %85 = vector.broadcast %84 : vector<9x1x128xf32> to vector<9x128x128xf32>
    %86 = vector.shape_cast %71 : vector<9x128xf32> to vector<9x1x128xf32>
    %87 = vector.shape_cast %86 : vector<9x1x128xf32> to vector<9x1x128xf32>
    %88 = vector.broadcast %87 : vector<9x1x128xf32> to vector<9x128x128xf32>
    %89 = vector.shape_cast %75 : vector<9x128xf32> to vector<9x1x128xf32>
    %90 = vector.shape_cast %89 : vector<9x1x128xf32> to vector<9x1x128xf32>
    %91 = vector.broadcast %90 : vector<9x1x128xf32> to vector<9x128x128xf32>
    %cst_27 = arith.constant 0.000000e+00 : f32
    %92 = vector.broadcast %cst_27 : f32 to vector<8x128xf32>
    %c0_28 = arith.constant 0 : index
    %c0_29 = arith.constant 0 : index
    %93 = vector.load %arg7[%c0_28, %c0_29] : memref<8x1xf32, #tpu.memory_space<vmem>>, vector<8x1xf32>
    %94 = vector.broadcast %93 : vector<8x1xf32> to vector<8x128xf32>
    %95 = arith.addf %92, %94 : vector<8x128xf32>
    %c0_i32_30 = arith.constant 0 : i32
    %96 = vector.broadcast %c0_i32_30 : i32 to vector<9x128x128xi32>
    %97 = arith.addi %79, %96 : vector<9x128x128xi32>
    %c0_i32_31 = arith.constant 0 : i32
    %98 = vector.broadcast %c0_i32_31 : i32 to vector<9x128x128xi32>
    %99 = arith.cmpi eq, %97, %98 : vector<9x128x128xi32>
    %c1_i32_32 = arith.constant 1 : i32
    %100 = vector.broadcast %c1_i32_32 : i32 to vector<9x128x128xi32>
    %101 = arith.cmpi eq, %97, %100 : vector<9x128x128xi32>
    %c16_i32_33 = arith.constant 16 : i32
    %102 = vector.broadcast %c16_i32_33 : i32 to vector<9x128x128xi32>
    %103 = arith.cmpi eq, %97, %102 : vector<9x128x128xi32>
    %c17_i32 = arith.constant 17 : i32
    %104 = vector.broadcast %c17_i32 : i32 to vector<9x128x128xi32>
    %105 = arith.cmpi eq, %97, %104 : vector<9x128x128xi32>
    %cst_34 = arith.constant 0.000000e+00 : f32
    %106 = vector.broadcast %cst_34 : f32 to vector<9x128x128xf32>
    %107 = arith.select %105, %91, %106 : vector<9x128x128xi1>, vector<9x128x128xf32>
    %108 = arith.select %103, %88, %107 : vector<9x128x128xi1>, vector<9x128x128xf32>
    %109 = arith.select %101, %85, %108 : vector<9x128x128xi1>, vector<9x128x128xf32>
    %110 = arith.select %99, %82, %109 : vector<9x128x128xi1>, vector<9x128x128xf32>
    %111 = vector.shape_cast %110 : vector<9x128x128xf32> to vector<1152x128xf32>
    %112 = arith.truncf %111 : vector<1152x128xf32> to vector<1152x128xbf16>
    %c0_35 = arith.constant 0 : index
    %c0_36 = arith.constant 0 : index
    %c0_37 = arith.constant 0 : index
    %c0_38 = arith.constant 0 : index
    %113 = vector.load %arg3[%c0_35, %c0_36, %c0_37, %c0_38] : memref<1x2x8x1152xbf16, #tpu.memory_space<vmem>>, vector<1x1x8x1152xbf16>
    %114 = vector.shape_cast %113 : vector<1x1x8x1152xbf16> to vector<8x1152xbf16>
    %cst_39 = arith.constant dense<0.000000e+00> : vector<8x128xf32>
    %115 = tpu.matmul %114, %112, %cst_39 {dimension_numbers = #tpu.dot_dimension_numbers<[1], [0], [0], [1], [0, 0, 1, 1], [], []>} : vector<8x1152xbf16>, vector<1152x128xbf16>, vector<8x128xf32> -> vector<8x128xf32>
    %116 = arith.addf %95, %115 : vector<8x128xf32>
    %c128_i32 = arith.constant 128 : i32
    %117 = vector.broadcast %c128_i32 : i32 to vector<9x128x128xi32>
    %118 = arith.addi %79, %117 : vector<9x128x128xi32>
    %c0_i32_40 = arith.constant 0 : i32
    %119 = vector.broadcast %c0_i32_40 : i32 to vector<9x128x128xi32>
    %120 = arith.cmpi eq, %118, %119 : vector<9x128x128xi32>
    %c1_i32_41 = arith.constant 1 : i32
    %121 = vector.broadcast %c1_i32_41 : i32 to vector<9x128x128xi32>
    %122 = arith.cmpi eq, %118, %121 : vector<9x128x128xi32>
    %c16_i32_42 = arith.constant 16 : i32
    %123 = vector.broadcast %c16_i32_42 : i32 to vector<9x128x128xi32>
    %124 = arith.cmpi eq, %118, %123 : vector<9x128x128xi32>
    %c17_i32_43 = arith.constant 17 : i32
    %125 = vector.broadcast %c17_i32_43 : i32 to vector<9x128x128xi32>
    %126 = arith.cmpi eq, %118, %125 : vector<9x128x128xi32>
    %cst_44 = arith.constant 0.000000e+00 : f32
    %127 = vector.broadcast %cst_44 : f32 to vector<9x128x128xf32>
    %128 = arith.select %126, %91, %127 : vector<9x128x128xi1>, vector<9x128x128xf32>
    %129 = arith.select %124, %88, %128 : vector<9x128x128xi1>, vector<9x128x128xf32>
    %130 = arith.select %122, %85, %129 : vector<9x128x128xi1>, vector<9x128x128xf32>
    %131 = arith.select %120, %82, %130 : vector<9x128x128xi1>, vector<9x128x128xf32>
    %132 = vector.shape_cast %131 : vector<9x128x128xf32> to vector<1152x128xf32>
    %133 = arith.truncf %132 : vector<1152x128xf32> to vector<1152x128xbf16>
    %c0_45 = arith.constant 0 : index
    %c1_46 = arith.constant 1 : index
    %c0_47 = arith.constant 0 : index
    %c0_48 = arith.constant 0 : index
    %134 = vector.load %arg3[%c0_45, %c1_46, %c0_47, %c0_48] : memref<1x2x8x1152xbf16, #tpu.memory_space<vmem>>, vector<1x1x8x1152xbf16>
    %135 = vector.shape_cast %134 : vector<1x1x8x1152xbf16> to vector<8x1152xbf16>
    %cst_49 = arith.constant dense<0.000000e+00> : vector<8x128xf32>
    %136 = tpu.matmul %135, %133, %cst_49 {dimension_numbers = #tpu.dot_dimension_numbers<[1], [0], [0], [1], [0, 0, 1, 1], [], []>} : vector<8x1152xbf16>, vector<1152x128xbf16>, vector<8x128xf32> -> vector<8x128xf32>
    %137 = arith.addf %116, %136 : vector<8x128xf32>
    %cst_50 = arith.constant 0.000000e+00 : f32
    %138 = vector.broadcast %cst_50 : f32 to vector<8x128xf32>
    %139 = arith.maximumf %137, %138 : vector<8x128xf32>
    %c0_51 = arith.constant 0 : index
    %c0_52 = arith.constant 0 : index
    %c0_53 = arith.constant 0 : index
    %140 = vector.load %arg8[%c0_51, %c0_52, %c0_53] : memref<1x8x128xf32, #tpu.memory_space<vmem>>, vector<1x8x128xf32>
    %141 = vector.shape_cast %140 : vector<1x8x128xf32> to vector<8x128xf32>
    %142 = vector.shape_cast %139 : vector<8x128xf32> to vector<1x8x128xf32>
    tpu.vector_store %arg8[%c0_51, %c0_52, %c0_53], %142 {strides = array<i32>} : memref<1x8x128xf32, #tpu.memory_space<vmem>>, vector<1x8x128xf32>,
    return
  }
  func.func @transform_0(%arg0: i32, %arg1: i32) -> (i32, i32, i32) {
    %c0_i32 = arith.constant 0 : i32
    %c0_i32_0 = arith.constant 0 : i32
    return %arg0, %c0_i32, %arg1 : i32, i32, i32
  }
  func.func @transform_1(%arg0: i32, %arg1: i32) -> (i32, i32, i32, i32) {
    %c0_i32 = arith.constant 0 : i32
    %c0_i32_0 = arith.constant 0 : i32
    %c0_i32_1 = arith.constant 0 : i32
    %c0_i32_2 = arith.constant 0 : i32
    return %arg0, %c0_i32, %c0_i32_0, %c0_i32_1 : i32, i32, i32, i32
  }
  func.func @transform_2(%arg0: i32, %arg1: i32) -> (i32, i32) {
    %c0_i32 = arith.constant 0 : i32
    %c0_i32_0 = arith.constant 0 : i32
    return %c0_i32, %arg1 : i32, i32
  }
  func.func @transform_3(%arg0: i32, %arg1: i32) -> (i32, i32) {
    %c0_i32 = arith.constant 0 : i32
    %c0_i32_0 = arith.constant 0 : i32
    %c0_i32_1 = arith.constant 0 : i32
    return %c0_i32, %c0_i32_0 : i32, i32
  }
  func.func @transform_4(%arg0: i32, %arg1: i32) -> (i32, i32) {
    %c0_i32 = arith.constant 0 : i32
    %c0_i32_0 = arith.constant 0 : i32
    %c0_i32_1 = arith.constant 0 : i32
    return %c0_i32, %c0_i32_0 : i32, i32
  }
  func.func @transform_5(%arg0: i32, %arg1: i32) -> (i32, i32) {
    %c0_i32 = arith.constant 0 : i32
    %c0_i32_0 = arith.constant 0 : i32
    %c0_i32_1 = arith.constant 0 : i32
    return %c0_i32, %c0_i32_0 : i32, i32
  }
  func.func @transform_6(%arg0: i32, %arg1: i32) -> (i32, i32, i32) {
    %c0_i32 = arith.constant 0 : i32
    %c0_i32_0 = arith.constant 0 : i32
    return %arg0, %c0_i32, %arg1 : i32, i32, i32
  }
}

</mosaic_0001>

<llo_original>
// kernel: tpu_custom_call.1
$region0: #{tpu_custom_call.1}
  #allocation0 [shape = 'u32[]', space=smem, size = 0x4, offset = 0x4, fixed_abs, tag = 'smem constant byte address 0x4 - core index']
  #allocation1 [shape = 'u32[72,128]{1,0:T(1,128)}', space=vmem, size = 0x9000, scoped, tag = 'internal scratch']
  %s0 = inlined_call_operand.vmem [shape: f32[2,36,256], index: 0, kind: input, shape index: {}]
  %s1 = inlined_call_operand.vmem [shape: bf16[2,2,8,1152], index: 1, kind: input, shape index: {}]
  %s2 = inlined_call_operand.vmem [shape: f32[2,256], index: 2, kind: input, shape index: {}]
  %s3 = inlined_call_operand.vmem [shape: f32[18,36], index: 3, kind: input, shape index: {}]
  %s4 = inlined_call_operand.vmem [shape: f32[18,1], index: 4, kind: input, shape index: {}]
  %s5 = inlined_call_operand.vmem [shape: f32[8,1], index: 5, kind: input, shape index: {}]
  %s6 = inlined_call_operand.hbm [shape: f32[2,8,256], index: 6, kind: output, shape index: {}]
  %s7 = sld [smem:[#allocation0]]
  $region95: #{tpu_custom_call.1} parent=0
    _
  %s9 = ssub.s32 1, %s7
  %s10 = scalar_select 0, %s9, %s7
  $region1: #{tpu_custom_call.1} parent=0
    #allocation2 [shape = 'u8[40960]{0}', space=vmem, size = 0xa000, scoped, tag = 'input window, operand 0']
    #allocation3 [shape = 'u8[8192]{0}', space=vmem, size = 0x2000, scoped, tag = 'output window, operand 0']
    #allocation4 [shape = 's32[2]{0}', space=sflag, size = 0x8, scoped, tag = 'scoped memory for tpu_custom_call.1']
    %11 = vsyncpa [#allocation4], 0
    %s12 = scalar_lea.sflag [#allocation4], 1
    %13 = vsyncpa %s12, 0
    loop: start=0, step=1, limit=6
    $region2: #{tpu_custom_call.1} parent=1 // loop_pre_header
      _
    $region3: #{tpu_custom_call.1} parent=1 // loop_header
      %s15 = sphi 0, %s19
      %p16 = scmp.ge.s32.totalorder %s15, 6
      %s22 = sphi 0, %s34
      %s23 = sphi 0, %s30
      %s24 = sphi 0, %s22
      %s25 = sphi 0, %s23
      %s26 = sphi 0, %s24
      %s27 = sphi 0, %s25
      %s39 = sphi 0, %s41
      %s42 = sphi 0, %s39
      %s43 = sphi 0, %s42
      %s59 = sphi 0, %s43
      %s65 = sphi 0, %s67
      %s68 = sphi 0, %s65
      %s69 = sphi 0, %s68
      %s85 = sphi 0, %s69
      %s91 = sphi 0, %s93
      %s94 = sphi 0, %s91
      %s95 = sphi 0, %s94
      %s111 = sphi 0, %s95
      %s115 = sphi 0, %s115
      %s117 = sphi 0, %s115
      %s118 = sphi 0, %s117
      %s132 = sphi 0, %s118
      %s136 = sphi 0, %s136
      %s138 = sphi 0, %s136
      %s139 = sphi 0, %s138
      %s153 = sphi 0, %s139
      %s157 = sphi 0, %s157
      %s159 = sphi 0, %s157
      %s160 = sphi 0, %s159
      %s174 = sphi 0, %s160
      %s182 = sphi 0, %s184
      %s185 = sphi 0, %s182
      %s186 = sphi 0, %s185
      %s202 = sphi 0, %s186
    $region4: #{tpu_custom_call.1} parent=1 // loop_header_branch
      %18 = sbr.rel (%p16) target = $region8
    $region5: #{tpu_custom_call.1} parent=1 // loop_body
      %s20 = ssub.s32 %s15, 1
      %s21 = ssub.s32 %s15, 2
      %s28 = sadd.s32 1, %s23
      %p29 = scmp.ge.s32.totalorder %s28, 2
      %s30 = scalar_select %p29, 0, %s28
      %s31 = sadd.s32 1, %s22
      %s32 = scalar_select %p29, %s31, %s22
      %p33 = scmp.ge.s32.totalorder %s32, 2
      %s34 = scalar_select %p33, 0, %s32
      %s35 = ssub.s32 %s22, %s34
      %s36 = ssub.s32 %s23, %s30
      %s37 = sor.u32 %s35, %s36
      %p38 = scmp.eq.s32.totalorder %s37, 0
      %s40 = sadd.s32 %s39, 1
      %s41 = scalar_select %p38, %s39, %s40
      %p44 = pneg %p38
      %p45 = scmp.eq.s32.totalorder %s15, 3
      %p46 = por %p44, %p45
      %p47 = scmp.ne.s32.totalorder %s39, %s42
      %p48 = scmp.eq.s32.totalorder %s15, 0
      %p49 = por %p47, %p48
      %p50 = scmp.ne.s32.totalorder %s39, %s42
      %p51 = scmp.eq.s32.totalorder %s20, 3
      %p52 = por %p50, %p51
      %p53 = scmp.ne.s32.totalorder %s42, %s43
      %p54 = scmp.eq.s32.totalorder %s20, 0
      %p55 = por %p53, %p54
      %p56 = scmp.ne.s32.totalorder %s42, %s43
      %p57 = scmp.eq.s32.totalorder %s21, 3
      %p58 = por %p56, %p57
      %p60 = scmp.ne.s32.totalorder %s43, %s59
      %p61 = scmp.eq.s32.totalorder %s21, 0
      %p62 = por %p60, %p61
      %s63 = ssub.s32 %s22, %s34
      %p64 = scmp.eq.s32.totalorder %s63, 0
      %s66 = sadd.s32 %s65, 1
      %s67 = scalar_select %p64, %s65, %s66
      %p70 = pneg %p64
      %p71 = scmp.eq.s32.totalorder %s15, 3
      %p72 = por %p70, %p71
      %p73 = scmp.ne.s32.totalorder %s65, %s68
      %p74 = scmp.eq.s32.totalorder %s15, 0
      %p75 = por %p73, %p74
      %p76 = scmp.ne.s32.totalorder %s65, %s68
      %p77 = scmp.eq.s32.totalorder %s20, 3
      %p78 = por %p76, %p77
      %p79 = scmp.ne.s32.totalorder %s68, %s69
      %p80 = scmp.eq.s32.totalorder %s20, 0
      %p81 = por %p79, %p80
      %p82 = scmp.ne.s32.totalorder %s68, %s69
      %p83 = scmp.eq.s32.totalorder %s21, 3
      %p84 = por %p82, %p83
      %p86 = scmp.ne.s32.totalorder %s69, %s85
      %p87 = scmp.eq.s32.totalorder %s21, 0
      %p88 = por %p86, %p87
      %s89 = ssub.s32 %s23, %s30
      %p90 = scmp.eq.s32.totalorder %s89, 0
      %s92 = sadd.s32 %s91, 1
      %s93 = scalar_select %p90, %s91, %s92
      %p96 = pneg %p90
      %p97 = scmp.eq.s32.totalorder %s15, 3
      %p98 = por %p96, %p97
      %p99 = scmp.ne.s32.totalorder %s91, %s94
      %p100 = scmp.eq.s32.totalorder %s15, 0
      %p101 = por %p99, %p100
      %p102 = scmp.ne.s32.totalorder %s91, %s94
      %p103 = scmp.eq.s32.totalorder %s20, 3
      %p104 = por %p102, %p103
      %p105 = scmp.ne.s32.totalorder %s94, %s95
      %p106 = scmp.eq.s32.totalorder %s20, 0
      %p107 = por %p105, %p106
      %p108 = scmp.ne.s32.totalorder %s94, %s95
      %p109 = scmp.eq.s32.totalorder %s21, 3
      %p110 = por %p108, %p109
      %p112 = scmp.ne.s32.totalorder %s95, %s111
      %p113 = scmp.eq.s32.totalorder %s21, 0
      %p114 = por %p112, %p113
      %s116 = sadd.s32 %s115, 1
      %p119 = scmp.eq.s32.totalorder %s15, 3
      %p120 = scmp.ne.s32.totalorder %s115, %s117
      %p121 = scmp.eq.s32.totalorder %s15, 0
      %p122 = por %p120, %p121
      %p123 = scmp.ne.s32.totalorder %s115, %s117
      %p124 = scmp.eq.s32.totalorder %s20, 3
      %p125 = por %p123, %p124
      %p126 = scmp.ne.s32.totalorder %s117, %s118
      %p127 = scmp.eq.s32.totalorder %s20, 0
      %p128 = por %p126, %p127
      %p129 = scmp.ne.s32.totalorder %s117, %s118
      %p130 = scmp.eq.s32.totalorder %s21, 3
      %p131 = por %p129, %p130
      %p133 = scmp.ne.s32.totalorder %s118, %s132
      %p134 = scmp.eq.s32.totalorder %s21, 0
      %p135 = por %p133, %p134
      %s137 = sadd.s32 %s136, 1
      %p140 = scmp.eq.s32.totalorder %s15, 3
      %p141 = scmp.ne.s32.totalorder %s136, %s138
      %p142 = scmp.eq.s32.totalorder %s15, 0
      %p143 = por %p141, %p142
      %p144 = scmp.ne.s32.totalorder %s136, %s138
      %p145 = scmp.eq.s32.totalorder %s20, 3
      %p146 = por %p144, %p145
      %p147 = scmp.ne.s32.totalorder %s138, %s139
      %p148 = scmp.eq.s32.totalorder %s20, 0
      %p149 = por %p147, %p148
      %p150 = scmp.ne.s32.totalorder %s138, %s139
      %p151 = scmp.eq.s32.totalorder %s21, 3
      %p152 = por %p150, %p151
      %p154 = scmp.ne.s32.totalorder %s139, %s153
      %p155 = scmp.eq.s32.totalorder %s21, 0
      %p156 = por %p154, %p155
      %s158 = sadd.s32 %s157, 1
      %p161 = scmp.eq.s32.totalorder %s15, 3
      %p162 = scmp.ne.s32.totalorder %s157, %s159
      %p163 = scmp.eq.s32.totalorder %s15, 0
      %p164 = por %p162, %p163
      %p165 = scmp.ne.s32.totalorder %s157, %s159
      %p166 = scmp.eq.s32.totalorder %s20, 3
      %p167 = por %p165, %p166
      %p168 = scmp.ne.s32.totalorder %s159, %s160
      %p169 = scmp.eq.s32.totalorder %s20, 0
      %p170 = por %p168, %p169
      %p171 = scmp.ne.s32.totalorder %s159, %s160
      %p172 = scmp.eq.s32.totalorder %s21, 3
      %p173 = por %p171, %p172
      %p175 = scmp.ne.s32.totalorder %s160, %s174
      %p176 = scmp.eq.s32.totalorder %s21, 0
      %p177 = por %p175, %p176
      %s178 = ssub.s32 %s22, %s34
      %s179 = ssub.s32 %s23, %s30
      %s180 = sor.u32 %s178, %s179
      %p181 = scmp.eq.s32.totalorder %s180, 0
      %s183 = sadd.s32 %s182, 1
      %s184 = scalar_select %p181, %s182, %s183
      %p187 = pneg %p181
      %p188 = scmp.eq.s32.totalorder %s15, 3
      %p189 = por %p187, %p188
      %p190 = scmp.ne.s32.totalorder %s182, %s185
      %p191 = scmp.eq.s32.totalorder %s15, 0
      %p192 = por %p190, %p191
      %p193 = scmp.ne.s32.totalorder %s182, %s185
      %p194 = scmp.eq.s32.totalorder %s20, 3
      %p195 = por %p193, %p194
      %p196 = scmp.ne.s32.totalorder %s185, %s186
      %p197 = scmp.eq.s32.totalorder %s20, 0
      %p198 = por %p196, %p197
      %p199 = scmp.ne.s32.totalorder %s185, %s186
      %p200 = scmp.eq.s32.totalorder %s21, 3
      %p201 = por %p199, %p200
      %p203 = scmp.ne.s32.totalorder %s186, %s202
      %p204 = scmp.eq.s32.totalorder %s21, 0
      %p205 = por %p203, %p204
      %p206 = scmp.le.s32.totalorder 1, %s15
      %p207 = scmp.lt.s32.totalorder %s15, 5
      %p208 = pnand %p206, %p207
      %p209 = pneg %p208
      // Predicated region
      $region9: #{tpu_custom_call.1} parent=5 // pred_check
        _
      $region10: #{tpu_custom_call.1} parent=5 // pred_check_branch
        %211 = sbr.rel (%p208) target = $region12
      $region11: #{tpu_custom_call.1} parent=5 // pred_region
        %s212 = ssub.s32 %s15, 1
        // Predicated region
        $region13: #{tpu_custom_call.1} parent=11 // pred_check
          %p213 = pneg %p128
        $region14: #{tpu_custom_call.1} parent=11 // pred_check_branch
          %215 = sbr.rel (%p213) target = $region16
        $region15: #{tpu_custom_call.1} parent=11 // pred_region
          _
        $region16: #{tpu_custom_call.1} parent=11 // pred_fallthru
          _
        // Predicated region
        $region17: #{tpu_custom_call.1} parent=11 // pred_check
          %p216 = pneg %p149
        $region18: #{tpu_custom_call.1} parent=11 // pred_check_branch
          %218 = sbr.rel (%p216) target = $region20
        $region19: #{tpu_custom_call.1} parent=11 // pred_region
          _
        $region20: #{tpu_custom_call.1} parent=11 // pred_fallthru
          _
        // Predicated region
        $region21: #{tpu_custom_call.1} parent=11 // pred_check
          %p219 = pneg %p170
        $region22: #{tpu_custom_call.1} parent=11 // pred_check_branch
          %221 = sbr.rel (%p219) target = $region24
        $region23: #{tpu_custom_call.1} parent=11 // pred_region
          _
        $region24: #{tpu_custom_call.1} parent=11 // pred_fallthru
          _
      $region12: #{tpu_custom_call.1} parent=5 // pred_fallthru
        _
      %p222 = scmp.lt.s32.totalorder %s15, 4
      // Predicated region
      $region25: #{tpu_custom_call.1} parent=5 // pred_check
        %p223 = pneg %p222
      $region26: #{tpu_custom_call.1} parent=5 // pred_check_branch
        %225 = sbr.rel (%p223) target = $region28
      $region27: #{tpu_custom_call.1} parent=5 // pred_region
        // Predicated region
        $region29: #{tpu_custom_call.1} parent=27 // pred_check
          %p226 = pneg %p49
        $region30: #{tpu_custom_call.1} parent=27 // pred_check_branch
          %228 = sbr.rel (%p226) target = $region32
        $region31: #{tpu_custom_call.1} parent=27 // pred_region
          %s229 = sand.u32 %s39, 1
          %s230 = sand.u32 %s39, 1
          %s231 = smul.addr %s230, 40
          %s232 = scalar_lea.vmem [#allocation2], %s231
          %s233 = smul.addr %s22, 10
          %s234 = sadd.s32 %s23, %s233
          %s235 = smul.addr %s234, 8
          %s236 = scalar_lea.vmem %s0, %s235
          // Predicated region
          $region33: #{tpu_custom_call.1} parent=31 // pred_check
            _
          $region34: #{tpu_custom_call.1} parent=31 // pred_check_branch
            %238 = sbr.rel (0) target = $region36
          $region35: #{tpu_custom_call.1} parent=31 // pred_region
            // Predicated region
            $region37: #{tpu_custom_call.1} parent=35 // pred_check
              _
            $region38: #{tpu_custom_call.1} parent=35 // pred_check_branch
              %240 = sbr.rel (0) target = $region40
            $region39: #{tpu_custom_call.1} parent=35 // pred_region
              // Predicated region
              $region52: #{tpu_custom_call.1} parent=39 // pred_check
                _
              $region53: #{tpu_custom_call.1} parent=39 // pred_check_branch
                %264 = sbr.rel (0) target = $region55
              $region54: #{tpu_custom_call.1} parent=39 // pred_region
                loop: start=0, step=1, limit=1
                $region56: #{tpu_custom_call.1} parent=54 // loop_pre_header
                  _
                $region57: #{tpu_custom_call.1} parent=54 // loop_header
                  %s266 = sphi 0, %s270
                  %p267 = scmp.ge.s32.totalorder %s266, 1
                  %s271 = sphi %s236, %s236
                  %s272 = sphi %s232, %s232
                $region58: #{tpu_custom_call.1} parent=54 // loop_header_branch
                  %269 = sbr.rel (%p267) target = $region62
                $region59: #{tpu_custom_call.1} parent=54 // loop_body
                  %v273 = vld [vmem:[%s271] sm:$0xff]
                  %274 = vst [vmem:[%s272] sm:$0xff] %v273
                  %v275 = vld [vmem:[%s271 + $0x10] sm:$0xff]
                  %276 = vst [vmem:[%s272 + $0x8] sm:$0xff] %v275
                  %v277 = vld [vmem:[%s271 + $0x20] sm:$0xff]
                  %278 = vst [vmem:[%s272 + $0x10] sm:$0xff] %v277
                  %v279 = vld [vmem:[%s271 + $0x30] sm:$0xff]
                  %280 = vst [vmem:[%s272 + $0x18] sm:$0xff] %v279
                  %v281 = vld [vmem:[%s271 + $0x40] sm:$0xff]
                  %282 = vst [vmem:[%s272 + $0x20] sm:$0xff] %v281
                $region60: #{tpu_custom_call.1} parent=54 // loop_footer
                  %s270 = sadd.s32 1, %s266
                $region61: #{tpu_custom_call.1} parent=54 // loop_footer_branch
                  %265 = sbr.rel target = $region57
                $region62: #{tpu_custom_call.1} parent=54 // loop_exit
                  _
              $region55: #{tpu_custom_call.1} parent=39 // pred_fallthru
                _
              // Predicated region
              $region63: #{tpu_custom_call.1} parent=39 // pred_check
                _
              $region64: #{tpu_custom_call.1} parent=39 // pred_check_branch
                %284 = sbr.rel target = $region66
              $region65: #{tpu_custom_call.1} parent=39 // pred_region
                _
              $region66: #{tpu_custom_call.1} parent=39 // pred_fallthru
                _
            $region40: #{tpu_custom_call.1} parent=35 // pred_fallthru
              _
            // Predicated region
            $region41: #{tpu_custom_call.1} parent=35 // pred_check
              _
            $region42: #{tpu_custom_call.1} parent=35 // pred_check_branch
              %242 = sbr.rel target = $region44
            $region43: #{tpu_custom_call.1} parent=35 // pred_region
              %s244 = ssub.s32 256, 1
              loop: start=0, step=1, limit=1
              $region45: #{tpu_custom_call.1} parent=43 // loop_pre_header
                _
              $region46: #{tpu_custom_call.1} parent=43 // loop_header
                %s246 = sphi 0, %s250
                %p247 = scmp.ge.s32.totalorder %s246, 1
                %s251 = sphi %s236, %s236
                %s252 = sphi %s232, %s232
              $region47: #{tpu_custom_call.1} parent=43 // loop_header_branch
                %249 = sbr.rel (%p247) target = $region51
              $region48: #{tpu_custom_call.1} parent=43 // loop_body
                %v253 = vld [vmem:[%s251] sm:%s244]
                %254 = vst [vmem:[%s252] sm:%s244] %v253
                %v255 = vld [vmem:[%s251 + $0x10] sm:%s244]
                %256 = vst [vmem:[%s252 + $0x8] sm:%s244] %v255
                %v257 = vld [vmem:[%s251 + $0x20] sm:%s244]
                %258 = vst [vmem:[%s252 + $0x10] sm:%s244] %v257
                %v259 = vld [vmem:[%s251 + $0x30] sm:%s244]
                %260 = vst [vmem:[%s252 + $0x18] sm:%s244] %v259
                %v261 = vld [vmem:[%s251 + $0x40] sm:%s244]
                %262 = vst [vmem:[%s252 + $0x20] sm:%s244] %v261
              $region49: #{tpu_custom_call.1} parent=43 // loop_footer
                %s250 = sadd.s32 1, %s246
              $region50: #{tpu_custom_call.1} parent=43 // loop_footer_branch
                %245 = sbr.rel target = $region46
              $region51: #{tpu_custom_call.1} parent=43 // loop_exit
                _
            $region44: #{tpu_custom_call.1} parent=35 // pred_fallthru
              _
          $region36: #{tpu_custom_call.1} parent=31 // pred_fallthru
            _
          %285 = vnop
        $region32: #{tpu_custom_call.1} parent=27 // pred_fallthru
          _
        // Predicated region
        $region67: #{tpu_custom_call.1} parent=27 // pred_check
          %p286 = pneg %p75
        $region68: #{tpu_custom_call.1} parent=27 // pred_check_branch
          %288 = sbr.rel (%p286) target = $region70
        $region69: #{tpu_custom_call.1} parent=27 // pred_region
          %p289 = scmp.lt.s32.totalorder %s22, 1
          %s290 = scalar_select %p289, %s22, 1
          %s291 = smul.addr %s290, 18
          %s292 = smul.addr %s291, 4
          %s293 = scalar_lea.vmem %s1, %s292
        $region70: #{tpu_custom_call.1} parent=27 // pred_fallthru
          _
        // Predicated region
        $region71: #{tpu_custom_call.1} parent=27 // pred_check
          %p294 = pneg %p101
        $region72: #{tpu_custom_call.1} parent=27 // pred_check_branch
          %296 = sbr.rel (%p294) target = $region74
        $region73: #{tpu_custom_call.1} parent=27 // pred_region
          %p297 = scmp.lt.s32.totalorder %s23, 1
          %s298 = scalar_select %p297, %s23, 1
          %s299 = smul.addr %s298, 2
          %s300 = scalar_lea.vmem %s2, %s299
        $region74: #{tpu_custom_call.1} parent=27 // pred_fallthru
          _
      $region28: #{tpu_custom_call.1} parent=5 // pred_fallthru
        _
      %p301 = scmp.le.s32.totalorder 1, %s15
      %p302 = scmp.lt.s32.totalorder %s15, 5
      %p303 = pnand %p301, %p302
      %p304 = pneg %p303
      // Predicated region
      $region75: #{tpu_custom_call.1} parent=5 // pred_check
        _
      $region76: #{tpu_custom_call.1} parent=5 // pred_check_branch
        %306 = sbr.rel (%p303) target = $region78
      $region77: #{tpu_custom_call.1} parent=5 // pred_region
        %s307 = ssub.s32 %s15, 1
        %s308 = sand.u32 %s42, 1
        %s309 = sand.u32 %s42, 1
        %s310 = smul.addr %s309, 40
        %s311 = scalar_lea.vmem [#allocation2], %s310
        // Predicated region
        $region79: #{tpu_custom_call.1} parent=77 // pred_check
          %p312 = pneg %p55
        $region80: #{tpu_custom_call.1} parent=77 // pred_check_branch
          %314 = sbr.rel (%p312) target = $region82
        $region81: #{tpu_custom_call.1} parent=77 // pred_region
          _
        $region82: #{tpu_custom_call.1} parent=77 // pred_fallthru
          _
        %s315 = sand.u32 %s42, 1
        %s316 = sand.u32 %s42, 1
        %s317 = smul.addr %s316, 40
        %s318 = scalar_lea.vmem [#allocation2], %s317
        %p319 = pneg %p55
        %p320 = pneg %p52
        %p321 = scmp.lt.s32.totalorder %s24, 1
        %s322 = scalar_select %p321, %s24, 1
        %s323 = smul.addr %s322, 18
        %s324 = smul.addr %s323, 4
        %s325 = scalar_lea.vmem %s1, %s324
        %p326 = pneg %p81
        %p327 = pneg %p78
        %p328 = scmp.lt.s32.totalorder %s25, 1
        %s329 = scalar_select %p328, %s25, 1
        %s330 = smul.addr %s329, 2
        %s331 = scalar_lea.vmem %s2, %s330
        %p332 = pneg %p107
        %p333 = pneg %p104
        %p334 = pneg %p128
        %p335 = pneg %p125
        %p336 = pneg %p149
        %p337 = pneg %p146
        %p338 = pneg %p170
        %p339 = pneg %p167
        %p340 = pneg %p198
        %p341 = pneg %p195
        %s342 = sand.u32 %s185, 1
        %s343 = scalar_lea.sflag [#allocation4], %s342
        %s344 = sand.u32 %s185, 1
        %s345 = smul.addr %s344, 8
        %s346 = scalar_lea.vmem [#allocation3], %s345
        %p347 = scmp.lt.s32.totalorder %s24, 1
        %s348 = scalar_select %p347, %s24, 1
        %s349 = smul.addr %s348, 18
        %s350 = smul.addr %s349, 4
        %s351 = scalar_lea.vmem %s1, %s350
        %p352 = scmp.lt.s32.totalorder %s25, 1
        %s353 = scalar_select %p352, %s25, 1
        %s354 = smul.addr %s353, 2
        %s355 = scalar_lea.vmem %s2, %s354
        %v356 = vld [vmem:[%s3] sm:$0xff]
        %v357 = vld [vmem:[%s3 + $0x8] sm:$0xff]
        %v358 = vld [vmem:[%s3 + $0x10] sm:$0x3]
        %v359 = vld [vmem:[%s311] sm:$0xff]
        %v360 = vld [vmem:[%s311 + $0x8] sm:$0xff]
        %v361 = vld [vmem:[%s311 + $0x10] sm:$0xff]
        %v362 = vld [vmem:[%s311 + $0x18] sm:$0xff]
        %v363 = vld [vmem:[%s311 + $0x20] sm:$0xf]
        %v364 = vld [vmem:[%s4] sm:$0xff]
        %v365 = vld [vmem:[%s4 + $0x8] sm:$0xff]
        %v366 = vld [vmem:[%s4 + $0x10] sm:$0x3]
        %368 = vset.pattern.permute.xlu0 0
        %369 = vperm.xlu0 %368, %v364
        %v370 = vpop.permute.xlu0 %369
        %373 = vset.pattern.permute.xlu0 0
        %374 = vperm.xlu0 %373, %v365
        %v375 = vpop.permute.xlu0 %374
        %378 = vset.pattern.permute.xlu0 0
        %379 = vperm.xlu0 %378, %v366
        %v380 = vpop.permute.xlu0 %379
        %vm382 = vcmask 293888
        %v384 = vsel %vm382, %v356, 0
        %v387 = vsel %vm382, %v357, 0
        %v390 = vsel %vm382, %v358, 0
        %vm392 = vcmask 1043456
        %v394 = vsel %vm392, %v363, 0
        %396 = vmatpush.msra.mxu0 0.0
        %397 = vmatpush.msra.mxu0 0.0
        %398 = vmatpush.msra.mxu0 0.0
        %399 = vmatpush.msra.mxu0 0.0
        %400 = vmatpush.msra.mxu0 0.0
        %401 = vmatpush.msra.mxu0 0.0
        %402 = vmatpush.msra.mxu0 0.0
        %403 = vmatpush.msra.mxu0 0.0
        %404 = vmatpush.msra.mxu0 0.0
        %405 = vmatpush.msra.mxu0 0.0
        %406 = vmatpush.msra.mxu0 0.0
        %407 = vmatpush.msra.mxu0 %v394
        %408 = vmatpush.msra.mxu0 %v362
        %409 = vmatpush.msra.mxu0 %v361
        %410 = vmatpush.msra.mxu0 %v360
        %411 = vmatpush.msra.mxu0 %v359
        %412 = vmatmul.f32.gmra.mxu0 %v384
        %v413 = vpop.f32.mrf.mxu0
        %v414 = vadd.f32 %v370, %v413
        %415 = vmatmul.f32.gmra.mxu0 %v387
        %v416 = vpop.f32.mrf.mxu0
        %v417 = vadd.f32 %v375, %v416
        %418 = vmatmul.f32.gmra.mxu0 %v390
        %v419 = vpop.f32.mrf.mxu0
        %v420 = vadd.f32 %v380, %v419
        %421 = vdwg.mxu0
        %v422 = vld [vmem:[%s355] sm:$0x1]
        %v423 = vperm.slane %v422, 0
        %v424 = vadd.f32 %v423, %v414
        %v425 = vadd.f32 %v423, %v417
        %v426 = vld [vmem:[%s355 + $0x1] sm:$0x1]
        %v427 = vperm.slane %v426, 0
        %v428 = vadd.f32 %v427, %v417
        %v429 = vadd.f32 %v427, %v420
        %v430 = vfloor.f32 %v424
        %v431 = vfloor.f32 %v425
        %v432 = vfloor.f32 %v428
        %v433 = vfloor.f32 %v429
        %v434 = vsub.f32 %v424, %v430
        %v435 = vsub.f32 %v425, %v431
        %v436 = vsub.f32 %v428, %v432
        %v437 = vsub.f32 %v429, %v433
        %v438 = vcvt.f32.s32.to.zero.pseudo %v430
        %v439 = vcvt.f32.s32.to.zero.pseudo %v431
        %v440 = vcvt.f32.s32.to.zero.pseudo %v432
        %v441 = vcvt.f32.s32.to.zero.pseudo %v433
        %v442 = vmul.u32 %v438, 16
        %v443 = vmul.u32 %v439, 16
        %vm444 = vcmask 1046528
        %v445 = vrot.slane %v440, 1
        %v446 = vrot.slane %v441, 1
        %v447 = vsel %vm444, %v445, %v446
        %v448 = vadd.s32 %v442, %v447
        %v449 = vadd.s32 %v443, %v446
        %vm450 = vcmp.ge.s32.totalorder %v438, 0
        %vm451 = vcmp.ge.s32.totalorder %v439, 0
        %vm452 = vcmp.lt.s32.totalorder %v438, 16
        %vm453 = vcmp.lt.s32.totalorder %v439, 16
        %vm454 = vmand %vm450, %vm452
        %vm455 = vmand %vm451, %vm453
        %v456 = vadd.s32 %v438, 1
        %v457 = vadd.s32 %v439, 1
        %vm458 = vcmp.ge.s32.totalorder %v456, 0
        %vm459 = vcmp.ge.s32.totalorder %v457, 0
        %vm460 = vcmp.lt.s32.totalorder %v456, 16
        %vm461 = vcmp.lt.s32.totalorder %v457, 16
        %vm462 = vmand %vm458, %vm460
        %vm463 = vmand %vm459, %vm461
        %vm464 = vcmp.ge.s32.totalorder %v440, 0
        %vm465 = vcmp.ge.s32.totalorder %v441, 0
        %vm466 = vcmp.lt.s32.totalorder %v440, 16
        %vm467 = vcmp.lt.s32.totalorder %v441, 16
        %vm468 = vmand %vm464, %vm466
        %vm469 = vmand %vm465, %vm467
        %v470 = vadd.s32 %v440, 1
        %v471 = vadd.s32 %v441, 1
        %vm472 = vcmp.ge.s32.totalorder %v470, 0
        %vm473 = vcmp.ge.s32.totalorder %v471, 0
        %vm474 = vcmp.lt.s32.totalorder %v470, 16
        %vm475 = vcmp.lt.s32.totalorder %v471, 16
        %vm476 = vmand %vm472, %vm474
        %vm477 = vmand %vm473, %vm475
        %v478 = vsel %vm468, 1, 0
        %v479 = vsel %vm469, 1, 0
        %v480 = vrot.slane %v478, 1
        %v481 = vrot.slane %v479, 1
        %v482 = vsel %vm444, %v480, %v481
        %vm483 = vcmp.ne.s32.totalorder %v482, 0
        %vm484 = vcmp.ne.s32.totalorder %v481, 0
        %vm485 = vmand %vm454, %vm483
        %vm486 = vmand %vm455, %vm484
        %v487 = vsub.f32 1.0, %v434
        %v488 = vsub.f32 1.0, %v435
        %v489 = vsub.f32 1.0, %v436
        %v490 = vsub.f32 1.0, %v437
        %v493 = vrot.slane %v489, 1
        %v494 = vrot.slane %v490, 1
        %v495 = vsel %vm444, %v493, %v494
        %v498 = vmul.f32 %v487, %v495
        %v499 = vmul.f32 %v488, %v494
        %v500 = vsel %vm485, %v498, 0.0
        %v501 = vsel %vm486, %v499, 0.0
        %v502 = vsel %vm476, 1, 0
        %v503 = vsel %vm477, 1, 0
        %v504 = vrot.slane %v502, 1
        %v505 = vrot.slane %v503, 1
        %v506 = vsel %vm444, %v504, %v505
        %vm507 = vcmp.ne.s32.totalorder %v506, 0
        %vm508 = vcmp.ne.s32.totalorder %v505, 0
        %vm509 = vmand %vm454, %vm507
        %vm510 = vmand %vm455, %vm508
        %v513 = vrot.slane %v436, 1
        %v514 = vrot.slane %v437, 1
        %v515 = vsel %vm444, %v513, %v514
        %v518 = vmul.f32 %v487, %v515
        %v519 = vmul.f32 %v488, %v514
        %v520 = vsel %vm509, %v518, 0.0
        %v521 = vsel %vm510, %v519, 0.0
        %vm522 = vmand %vm462, %vm483
        %vm523 = vmand %vm463, %vm484
        %v524 = vmul.f32 %v434, %v495
        %v525 = vmul.f32 %v435, %v494
        %v526 = vsel %vm522, %v524, 0.0
        %v527 = vsel %vm523, %v525, 0.0
        %vm528 = vmand %vm462, %vm507
        %vm529 = vmand %vm463, %vm508
        %v530 = vmul.f32 %v434, %v515
        %v531 = vmul.f32 %v435, %v514
        %v532 = vsel %vm528, %v530, 0.0
        %v533 = vsel %vm529, %v531, 0.0
        %v534 = vlaneseq
        %v535 = vshrl.u32 %v534, 7
        %v536 = vadd.s32 %v535, 8
        %v537 = vadd.s32 %v535, 16
        %v538 = vadd.s32 %v535, 24
        %v539 = vadd.s32 %v535, 32
        %v540 = vadd.s32 %v535, 40
        %v541 = vadd.s32 %v535, 48
        %v542 = vadd.s32 %v535, 56
        %v543 = vadd.s32 %v535, 64
        %v544 = vadd.s32 %v535, 72
        %v545 = vadd.s32 %v535, 80
        %v546 = vadd.s32 %v535, 88
        %v547 = vadd.s32 %v535, 96
        %v548 = vadd.s32 %v535, 104
        %v549 = vadd.s32 %v535, 112
        %v550 = vadd.s32 %v535, 120
        %v551 = vrot.slane %v448, 1
        %v552 = vrot.slane %v448, 2
        %v553 = vrot.slane %v448, 3
        %v554 = vrot.slane %v448, 4
        %v555 = vrot.slane %v448, 5
        %v556 = vrot.slane %v448, 6
        %v557 = vrot.slane %v448, 7
        %v558 = vperm.slane %v448, 0
        %v559 = vperm.slane %v551, 0
        %v560 = vperm.slane %v552, 0
        %v561 = vperm.slane %v553, 0
        %v562 = vperm.slane %v554, 0
        %v563 = vperm.slane %v555, 0
        %v564 = vperm.slane %v556, 0
        %v565 = vperm.slane %v557, 0
        %v566 = vperm.slane %v449, 0
        %v567 = vsub.s32 %v535, %v558
        %v568 = vsub.s32 %v536, %v558
        %v569 = vsub.s32 %v537, %v558
        %v570 = vsub.s32 %v538, %v558
        %v571 = vsub.s32 %v539, %v558
        %v572 = vsub.s32 %v540, %v558
        %v573 = vsub.s32 %v541, %v558
        %v574 = vsub.s32 %v542, %v558
        %v575 = vsub.s32 %v543, %v558
        %v576 = vsub.s32 %v544, %v558
        %v577 = vsub.s32 %v545, %v558
        %v578 = vsub.s32 %v546, %v558
        %v579 = vsub.s32 %v547, %v558
        %v580 = vsub.s32 %v548, %v558
        %v581 = vsub.s32 %v549, %v558
        %v582 = vsub.s32 %v550, %v558
        %v583 = vsub.s32 %v535, %v559
        %v584 = vsub.s32 %v536, %v559
        %v585 = vsub.s32 %v537, %v559
        %v586 = vsub.s32 %v538, %v559
        %v587 = vsub.s32 %v539, %v559
        %v588 = vsub.s32 %v540, %v559
        %v589 = vsub.s32 %v541, %v559
        %v590 = vsub.s32 %v542, %v559
        %v591 = vsub.s32 %v543, %v559
        %v592 = vsub.s32 %v544, %v559
        %v593 = vsub.s32 %v545, %v559
        %v594 = vsub.s32 %v546, %v559
        %v595 = vsub.s32 %v547, %v559
        %v596 = vsub.s32 %v548, %v559
        %v597 = vsub.s32 %v549, %v559
        %v598 = vsub.s32 %v550, %v559
        %v599 = vsub.s32 %v535, %v560
        %v600 = vsub.s32 %v536, %v560
        %v601 = vsub.s32 %v537, %v560
        %v602 = vsub.s32 %v538, %v560
        %v603 = vsub.s32 %v539, %v560
        %v604 = vsub.s32 %v540, %v560
        %v605 = vsub.s32 %v541, %v560
        %v606 = vsub.s32 %v542, %v560
        %v607 = vsub.s32 %v543, %v560
        %v608 = vsub.s32 %v544, %v560
        %v609 = vsub.s32 %v545, %v560
        %v610 = vsub.s32 %v546, %v560
        %v611 = vsub.s32 %v547, %v560
        %v612 = vsub.s32 %v548, %v560
        %v613 = vsub.s32 %v549, %v560
        %v614 = vsub.s32 %v550, %v560
        %v615 = vsub.s32 %v535, %v561
        %v616 = vsub.s32 %v536, %v561
        %v617 = vsub.s32 %v537, %v561
        %v618 = vsub.s32 %v538, %v561
        %v619 = vsub.s32 %v539, %v561
        %v620 = vsub.s32 %v540, %v561
        %v621 = vsub.s32 %v541, %v561
        %v622 = vsub.s32 %v542, %v561
        %v623 = vsub.s32 %v543, %v561
        %v624 = vsub.s32 %v544, %v561
        %v625 = vsub.s32 %v545, %v561
        %v626 = vsub.s32 %v546, %v561
        %v627 = vsub.s32 %v547, %v561
        %v628 = vsub.s32 %v548, %v561
        %v629 = vsub.s32 %v549, %v561
        %v630 = vsub.s32 %v550, %v561
        %v631 = vsub.s32 %v535, %v562
        %v632 = vsub.s32 %v536, %v562
        %v633 = vsub.s32 %v537, %v562
        %v634 = vsub.s32 %v538, %v562
        %v635 = vsub.s32 %v539, %v562
        %v636 = vsub.s32 %v540, %v562
        %v637 = vsub.s32 %v541, %v562
        %v638 = vsub.s32 %v542, %v562
        %v639 = vsub.s32 %v543, %v562
        %v640 = vsub.s32 %v544, %v562
        %v641 = vsub.s32 %v545, %v562
        %v642 = vsub.s32 %v546, %v562
        %v643 = vsub.s32 %v547, %v562
        %v644 = vsub.s32 %v548, %v562
        %v645 = vsub.s32 %v549, %v562
        %v646 = vsub.s32 %v550, %v562
        %v647 = vsub.s32 %v535, %v563
        %v648 = vsub.s32 %v536, %v563
        %v649 = vsub.s32 %v537, %v563
        %v650 = vsub.s32 %v538, %v563
        %v651 = vsub.s32 %v539, %v563
        %v652 = vsub.s32 %v540, %v563
        %v653 = vsub.s32 %v541, %v563
        %v654 = vsub.s32 %v542, %v563
        %v655 = vsub.s32 %v543, %v563
        %v656 = vsub.s32 %v544, %v563
        %v657 = vsub.s32 %v545, %v563
        %v658 = vsub.s32 %v546, %v563
        %v659 = vsub.s32 %v547, %v563
        %v660 = vsub.s32 %v548, %v563
        %v661 = vsub.s32 %v549, %v563
        %v662 = vsub.s32 %v550, %v563
        %v663 = vsub.s32 %v535, %v564
        %v664 = vsub.s32 %v536, %v564
        %v665 = vsub.s32 %v537, %v564
        %v666 = vsub.s32 %v538, %v564
        %v667 = vsub.s32 %v539, %v564
        %v668 = vsub.s32 %v540, %v564
        %v669 = vsub.s32 %v541, %v564
        %v670 = vsub.s32 %v542, %v564
        %v671 = vsub.s32 %v543, %v564
        %v672 = vsub.s32 %v544, %v564
        %v673 = vsub.s32 %v545, %v564
        %v674 = vsub.s32 %v546, %v564
        %v675 = vsub.s32 %v547, %v564
        %v676 = vsub.s32 %v548, %v564
        %v677 = vsub.s32 %v549, %v564
        %v678 = vsub.s32 %v550, %v564
        %v679 = vsub.s32 %v535, %v565
        %v680 = vsub.s32 %v536, %v565
        %v681 = vsub.s32 %v537, %v565
        %v682 = vsub.s32 %v538, %v565
        %v683 = vsub.s32 %v539, %v565
        %v684 = vsub.s32 %v540, %v565
        %v685 = vsub.s32 %v541, %v565
        %v686 = vsub.s32 %v542, %v565
        %v687 = vsub.s32 %v543, %v565
        %v688 = vsub.s32 %v544, %v565
        %v689 = vsub.s32 %v545, %v565
        %v690 = vsub.s32 %v546, %v565
        %v691 = vsub.s32 %v547, %v565
        %v692 = vsub.s32 %v548, %v565
        %v693 = vsub.s32 %v549, %v565
        %v694 = vsub.s32 %v550, %v565
        %v695 = vsub.s32 %v535, %v566
        %v696 = vsub.s32 %v536, %v566
        %v697 = vsub.s32 %v537, %v566
        %v698 = vsub.s32 %v538, %v566
        %v699 = vsub.s32 %v539, %v566
        %v700 = vsub.s32 %v540, %v566
        %v701 = vsub.s32 %v541, %v566
        %v702 = vsub.s32 %v542, %v566
        %v703 = vsub.s32 %v543, %v566
        %v704 = vsub.s32 %v544, %v566
        %v705 = vsub.s32 %v545, %v566
        %v706 = vsub.s32 %v546, %v566
        %v707 = vsub.s32 %v547, %v566
        %v708 = vsub.s32 %v548, %v566
        %v709 = vsub.s32 %v549, %v566
        %v710 = vsub.s32 %v550, %v566
        %v713 = vrot.slane %v500, 1
        %v714 = vrot.slane %v500, 2
        %v715 = vrot.slane %v500, 3
        %v716 = vrot.slane %v500, 4
        %v717 = vrot.slane %v500, 5
        %v718 = vrot.slane %v500, 6
        %v719 = vrot.slane %v500, 7
        %v720 = vperm.slane %v500, 0
        %v721 = vperm.slane %v713, 0
        %v722 = vperm.slane %v714, 0
        %v723 = vperm.slane %v715, 0
        %v724 = vperm.slane %v716, 0
        %v725 = vperm.slane %v717, 0
        %v726 = vperm.slane %v718, 0
        %v727 = vperm.slane %v719, 0
        %v728 = vperm.slane %v501, 0
        %v740 = vrot.slane %v520, 1
        %v741 = vrot.slane %v520, 2
        %v742 = vrot.slane %v520, 3
        %v743 = vrot.slane %v520, 4
        %v744 = vrot.slane %v520, 5
        %v745 = vrot.slane %v520, 6
        %v746 = vrot.slane %v520, 7
        %v747 = vperm.slane %v520, 0
        %v748 = vperm.slane %v740, 0
        %v749 = vperm.slane %v741, 0
        %v750 = vperm.slane %v742, 0
        %v751 = vperm.slane %v743, 0
        %v752 = vperm.slane %v744, 0
        %v753 = vperm.slane %v745, 0
        %v754 = vperm.slane %v746, 0
        %v755 = vperm.slane %v521, 0
        %v767 = vrot.slane %v526, 1
        %v768 = vrot.slane %v526, 2
        %v769 = vrot.slane %v526, 3
        %v770 = vrot.slane %v526, 4
        %v771 = vrot.slane %v526, 5
        %v772 = vrot.slane %v526, 6
        %v773 = vrot.slane %v526, 7
        %v774 = vperm.slane %v526, 0
        %v775 = vperm.slane %v767, 0
        %v776 = vperm.slane %v768, 0
        %v777 = vperm.slane %v769, 0
        %v778 = vperm.slane %v770, 0
        %v779 = vperm.slane %v771, 0
        %v780 = vperm.slane %v772, 0
        %v781 = vperm.slane %v773, 0
        %v782 = vperm.slane %v527, 0
        %v794 = vrot.slane %v532, 1
        %v795 = vrot.slane %v532, 2
        %v796 = vrot.slane %v532, 3
        %v797 = vrot.slane %v532, 4
        %v798 = vrot.slane %v532, 5
        %v799 = vrot.slane %v532, 6
        %v800 = vrot.slane %v532, 7
        %v801 = vperm.slane %v532, 0
        %v802 = vperm.slane %v794, 0
        %v803 = vperm.slane %v795, 0
        %v804 = vperm.slane %v796, 0
        %v805 = vperm.slane %v797, 0
        %v806 = vperm.slane %v798, 0
        %v807 = vperm.slane %v799, 0
        %v808 = vperm.slane %v800, 0
        %v809 = vperm.slane %v533, 0
        %v819 = vld [vmem:[%s5] sm:$0xff]
        %821 = vset.pattern.permute.xlu0 0
        %822 = vperm.xlu0 %821, %v819
        %v823 = vpop.permute.xlu0 %822
        %v825 = vadd.f32 %v823, 0.0
        %vm826 = vcmp.eq.s32.totalorder %v567, 0
        %vm827 = vcmp.eq.s32.totalorder %v568, 0
        %vm828 = vcmp.eq.s32.totalorder %v569, 0
        %vm829 = vcmp.eq.s32.totalorder %v570, 0
        %vm830 = vcmp.eq.s32.totalorder %v571, 0
        %vm831 = vcmp.eq.s32.totalorder %v572, 0
        %vm832 = vcmp.eq.s32.totalorder %v573, 0
        %vm833 = vcmp.eq.s32.totalorder %v574, 0
        %vm834 = vcmp.eq.s32.totalorder %v575, 0
        %vm835 = vcmp.eq.s32.totalorder %v576, 0
        %vm836 = vcmp.eq.s32.totalorder %v577, 0
        %vm837 = vcmp.eq.s32.totalorder %v578, 0
        %vm838 = vcmp.eq.s32.totalorder %v579, 0
        %vm839 = vcmp.eq.s32.totalorder %v580, 0
        %vm840 = vcmp.eq.s32.totalorder %v581, 0
        %vm841 = vcmp.eq.s32.totalorder %v582, 0
        %vm842 = vcmp.eq.s32.totalorder %v583, 0
        %vm843 = vcmp.eq.s32.totalorder %v584, 0
        %vm844 = vcmp.eq.s32.totalorder %v585, 0
        %vm845 = vcmp.eq.s32.totalorder %v586, 0
        %vm846 = vcmp.eq.s32.totalorder %v587, 0
        %vm847 = vcmp.eq.s32.totalorder %v588, 0
        %vm848 = vcmp.eq.s32.totalorder %v589, 0
        %vm849 = vcmp.eq.s32.totalorder %v590, 0
        %vm850 = vcmp.eq.s32.totalorder %v591, 0
        %vm851 = vcmp.eq.s32.totalorder %v592, 0
        %vm852 = vcmp.eq.s32.totalorder %v593, 0
        %vm853 = vcmp.eq.s32.totalorder %v594, 0
        %vm854 = vcmp.eq.s32.totalorder %v595, 0
        %vm855 = vcmp.eq.s32.totalorder %v596, 0
        %vm856 = vcmp.eq.s32.totalorder %v597, 0
        %vm857 = vcmp.eq.s32.totalorder %v598, 0
        %vm858 = vcmp.eq.s32.totalorder %v599, 0
        %vm859 = vcmp.eq.s32.totalorder %v600, 0
        %vm860 = vcmp.eq.s32.totalorder %v601, 0
        %vm861 = vcmp.eq.s32.totalorder %v602, 0
        %vm862 = vcmp.eq.s32.totalorder %v603, 0
        %vm863 = vcmp.eq.s32.totalorder %v604, 0
        %vm864 = vcmp.eq.s32.totalorder %v605, 0
        %vm865 = vcmp.eq.s32.totalorder %v606, 0
        %vm866 = vcmp.eq.s32.totalorder %v607, 0
        %vm867 = vcmp.eq.s32.totalorder %v608, 0
        %vm868 = vcmp.eq.s32.totalorder %v609, 0
        %vm869 = vcmp.eq.s32.totalorder %v610, 0
        %vm870 = vcmp.eq.s32.totalorder %v611, 0
        %vm871 = vcmp.eq.s32.totalorder %v612, 0
        %vm872 = vcmp.eq.s32.totalorder %v613, 0
        %vm873 = vcmp.eq.s32.totalorder %v614, 0
        %vm874 = vcmp.eq.s32.totalorder %v615, 0
        %vm875 = vcmp.eq.s32.totalorder %v616, 0
        %vm876 = vcmp.eq.s32.totalorder %v617, 0
        %vm877 = vcmp.eq.s32.totalorder %v618, 0
        %vm878 = vcmp.eq.s32.totalorder %v619, 0
        %vm879 = vcmp.eq.s32.totalorder %v620, 0
        %vm880 = vcmp.eq.s32.totalorder %v621, 0
        %vm881 = vcmp.eq.s32.totalorder %v622, 0
        %vm882 = vcmp.eq.s32.totalorder %v623, 0
        %vm883 = vcmp.eq.s32.totalorder %v624, 0
        %vm884 = vcmp.eq.s32.totalorder %v625, 0
        %vm885 = vcmp.eq.s32.totalorder %v626, 0
        %vm886 = vcmp.eq.s32.totalorder %v627, 0
        %vm887 = vcmp.eq.s32.totalorder %v628, 0
        %vm888 = vcmp.eq.s32.totalorder %v629, 0
        %vm889 = vcmp.eq.s32.totalorder %v630, 0
        %vm890 = vcmp.eq.s32.totalorder %v631, 0
        %vm891 = vcmp.eq.s32.totalorder %v632, 0
        %vm892 = vcmp.eq.s32.totalorder %v633, 0
        %vm893 = vcmp.eq.s32.totalorder %v634, 0
        %vm894 = vcmp.eq.s32.totalorder %v635, 0
        %vm895 = vcmp.eq.s32.totalorder %v636, 0
        %vm896 = vcmp.eq.s32.totalorder %v637, 0
        %vm897 = vcmp.eq.s32.totalorder %v638, 0
        %vm898 = vcmp.eq.s32.totalorder %v639, 0
        %vm899 = vcmp.eq.s32.totalorder %v640, 0
        %vm900 = vcmp.eq.s32.totalorder %v641, 0
        %vm901 = vcmp.eq.s32.totalorder %v642, 0
        %vm902 = vcmp.eq.s32.totalorder %v643, 0
        %vm903 = vcmp.eq.s32.totalorder %v644, 0
        %vm904 = vcmp.eq.s32.totalorder %v645, 0
        %vm905 = vcmp.eq.s32.totalorder %v646, 0
        %vm906 = vcmp.eq.s32.totalorder %v647, 0
        %vm907 = vcmp.eq.s32.totalorder %v648, 0
        %vm908 = vcmp.eq.s32.totalorder %v649, 0
        %vm909 = vcmp.eq.s32.totalorder %v650, 0
        %vm910 = vcmp.eq.s32.totalorder %v651, 0
        %vm911 = vcmp.eq.s32.totalorder %v652, 0
        %vm912 = vcmp.eq.s32.totalorder %v653, 0
        %vm913 = vcmp.eq.s32.totalorder %v654, 0
        %vm914 = vcmp.eq.s32.totalorder %v655, 0
        %vm915 = vcmp.eq.s32.totalorder %v656, 0
        %vm916 = vcmp.eq.s32.totalorder %v657, 0
        %vm917 = vcmp.eq.s32.totalorder %v658, 0
        %vm918 = vcmp.eq.s32.totalorder %v659, 0
        %vm919 = vcmp.eq.s32.totalorder %v660, 0
        %vm920 = vcmp.eq.s32.totalorder %v661, 0
        %vm921 = vcmp.eq.s32.totalorder %v662, 0
        %vm922 = vcmp.eq.s32.totalorder %v663, 0
        %vm923 = vcmp.eq.s32.totalorder %v664, 0
        %vm924 = vcmp.eq.s32.totalorder %v665, 0
        %vm925 = vcmp.eq.s32.totalorder %v666, 0
        %vm926 = vcmp.eq.s32.totalorder %v667, 0
        %vm927 = vcmp.eq.s32.totalorder %v668, 0
        %vm928 = vcmp.eq.s32.totalorder %v669, 0
        %vm929 = vcmp.eq.s32.totalorder %v670, 0
        %vm930 = vcmp.eq.s32.totalorder %v671, 0
        %vm931 = vcmp.eq.s32.totalorder %v672, 0
        %vm932 = vcmp.eq.s32.totalorder %v673, 0
        %vm933 = vcmp.eq.s32.totalorder %v674, 0
        %vm934 = vcmp.eq.s32.totalorder %v675, 0
        %vm935 = vcmp.eq.s32.totalorder %v676, 0
        %vm936 = vcmp.eq.s32.totalorder %v677, 0
        %vm937 = vcmp.eq.s32.totalorder %v678, 0
        %vm938 = vcmp.eq.s32.totalorder %v679, 0
        %vm939 = vcmp.eq.s32.totalorder %v680, 0
        %vm940 = vcmp.eq.s32.totalorder %v681, 0
        %vm941 = vcmp.eq.s32.totalorder %v682, 0
        %vm942 = vcmp.eq.s32.totalorder %v683, 0
        %vm943 = vcmp.eq.s32.totalorder %v684, 0
        %vm944 = vcmp.eq.s32.totalorder %v685, 0
        %vm945 = vcmp.eq.s32.totalorder %v686, 0
        %vm946 = vcmp.eq.s32.totalorder %v687, 0
        %vm947 = vcmp.eq.s32.totalorder %v688, 0
        %vm948 = vcmp.eq.s32.totalorder %v689, 0
        %vm949 = vcmp.eq.s32.totalorder %v690, 0
        %vm950 = vcmp.eq.s32.totalorder %v691, 0
        %vm951 = vcmp.eq.s32.totalorder %v692, 0
        %vm952 = vcmp.eq.s32.totalorder %v693, 0
        %vm953 = vcmp.eq.s32.totalorder %v694, 0
        %vm954 = vcmp.eq.s32.totalorder %v695, 0
        %vm955 = vcmp.eq.s32.totalorder %v696, 0
        %vm956 = vcmp.eq.s32.totalorder %v697, 0
        %vm957 = vcmp.eq.s32.totalorder %v698, 0
        %vm958 = vcmp.eq.s32.totalorder %v699, 0
        %vm959 = vcmp.eq.s32.totalorder %v700, 0
        %vm960 = vcmp.eq.s32.totalorder %v701, 0
        %vm961 = vcmp.eq.s32.totalorder %v702, 0
        %vm962 = vcmp.eq.s32.totalorder %v703, 0
        %vm963 = vcmp.eq.s32.totalorder %v704, 0
        %vm964 = vcmp.eq.s32.totalorder %v705, 0
        %vm965 = vcmp.eq.s32.totalorder %v706, 0
        %vm966 = vcmp.eq.s32.totalorder %v707, 0
        %vm967 = vcmp.eq.s32.totalorder %v708, 0
        %vm968 = vcmp.eq.s32.totalorder %v709, 0
        %vm969 = vcmp.eq.s32.totalorder %v710, 0
        %vm970 = vcmp.eq.s32.totalorder %v567, 1
        %vm971 = vcmp.eq.s32.totalorder %v568, 1
        %vm972 = vcmp.eq.s32.totalorder %v569, 1
        %vm973 = vcmp.eq.s32.totalorder %v570, 1
        %vm974 = vcmp.eq.s32.totalorder %v571, 1
        %vm975 = vcmp.eq.s32.totalorder %v572, 1
        %vm976 = vcmp.eq.s32.totalorder %v573, 1
        %vm977 = vcmp.eq.s32.totalorder %v574, 1
        %vm978 = vcmp.eq.s32.totalorder %v575, 1
        %vm979 = vcmp.eq.s32.totalorder %v576, 1
        %vm980 = vcmp.eq.s32.totalorder %v577, 1
        %vm981 = vcmp.eq.s32.totalorder %v578, 1
        %vm982 = vcmp.eq.s32.totalorder %v579, 1
        %vm983 = vcmp.eq.s32.totalorder %v580, 1
        %vm984 = vcmp.eq.s32.totalorder %v581, 1
        %vm985 = vcmp.eq.s32.totalorder %v582, 1
        %vm986 = vcmp.eq.s32.totalorder %v583, 1
        %vm987 = vcmp.eq.s32.totalorder %v584, 1
        %vm988 = vcmp.eq.s32.totalorder %v585, 1
        %vm989 = vcmp.eq.s32.totalorder %v586, 1
        %vm990 = vcmp.eq.s32.totalorder %v587, 1
        %vm991 = vcmp.eq.s32.totalorder %v588, 1
        %vm992 = vcmp.eq.s32.totalorder %v589, 1
        %vm993 = vcmp.eq.s32.totalorder %v590, 1
        %vm994 = vcmp.eq.s32.totalorder %v591, 1
        %vm995 = vcmp.eq.s32.totalorder %v592, 1
        %vm996 = vcmp.eq.s32.totalorder %v593, 1
        %vm997 = vcmp.eq.s32.totalorder %v594, 1
        %vm998 = vcmp.eq.s32.totalorder %v595, 1
        %vm999 = vcmp.eq.s32.totalorder %v596, 1
        %vm1000 = vcmp.eq.s32.totalorder %v597, 1
        %vm1001 = vcmp.eq.s32.totalorder %v598, 1
        %vm1002 = vcmp.eq.s32.totalorder %v599, 1
        %vm1003 = vcmp.eq.s32.totalorder %v600, 1
        %vm1004 = vcmp.eq.s32.totalorder %v601, 1
        %vm1005 = vcmp.eq.s32.totalorder %v602, 1
        %vm1006 = vcmp.eq.s32.totalorder %v603, 1
        %vm1007 = vcmp.eq.s32.totalorder %v604, 1
        %vm1008 = vcmp.eq.s32.totalorder %v605, 1
        %vm1009 = vcmp.eq.s32.totalorder %v606, 1
        %vm1010 = vcmp.eq.s32.totalorder %v607, 1
        %vm1011 = vcmp.eq.s32.totalorder %v608, 1
        %vm1012 = vcmp.eq.s32.totalorder %v609, 1
        %vm1013 = vcmp.eq.s32.totalorder %v610, 1
        %vm1014 = vcmp.eq.s32.totalorder %v611, 1
        %vm1015 = vcmp.eq.s32.totalorder %v612, 1
        %vm1016 = vcmp.eq.s32.totalorder %v613, 1
        %vm1017 = vcmp.eq.s32.totalorder %v614, 1
        %vm1018 = vcmp.eq.s32.totalorder %v615, 1
        %vm1019 = vcmp.eq.s32.totalorder %v616, 1
        %vm1020 = vcmp.eq.s32.totalorder %v617, 1
        %vm1021 = vcmp.eq.s32.totalorder %v618, 1
        %vm1022 = vcmp.eq.s32.totalorder %v619, 1
        %vm1023 = vcmp.eq.s32.totalorder %v620, 1
        %vm1024 = vcmp.eq.s32.totalorder %v621, 1
        %vm1025 = vcmp.eq.s32.totalorder %v622, 1
        %vm1026 = vcmp.eq.s32.totalorder %v623, 1
        %vm1027 = vcmp.eq.s32.totalorder %v624, 1
        %vm1028 = vcmp.eq.s32.totalorder %v625, 1
        %vm1029 = vcmp.eq.s32.totalorder %v626, 1
        %vm1030 = vcmp.eq.s32.totalorder %v627, 1
        %vm1031 = vcmp.eq.s32.totalorder %v628, 1
        %vm1032 = vcmp.eq.s32.totalorder %v629, 1
        %vm1033 = vcmp.eq.s32.totalorder %v630, 1
        %vm1034 = vcmp.eq.s32.totalorder %v631, 1
        %vm1035 = vcmp.eq.s32.totalorder %v632, 1
        %vm1036 = vcmp.eq.s32.totalorder %v633, 1
        %vm1037 = vcmp.eq.s32.totalorder %v634, 1
        %vm1038 = vcmp.eq.s32.totalorder %v635, 1
        %vm1039 = vcmp.eq.s32.totalorder %v636, 1
        %vm1040 = vcmp.eq.s32.totalorder %v637, 1
        %vm1041 = vcmp.eq.s32.totalorder %v638, 1
        %vm1042 = vcmp.eq.s32.totalorder %v639, 1
        %vm1043 = vcmp.eq.s32.totalorder %v640, 1
        %vm1044 = vcmp.eq.s32.totalorder %v641, 1
        %vm1045 = vcmp.eq.s32.totalorder %v642, 1
        %vm1046 = vcmp.eq.s32.totalorder %v643, 1
        %vm1047 = vcmp.eq.s32.totalorder %v644, 1
        %vm1048 = vcmp.eq.s32.totalorder %v645, 1
        %vm1049 = vcmp.eq.s32.totalorder %v646, 1
        %vm1050 = vcmp.eq.s32.totalorder %v647, 1
        %vm1051 = vcmp.eq.s32.totalorder %v648, 1
        %vm1052 = vcmp.eq.s32.totalorder %v649, 1
        %vm1053 = vcmp.eq.s32.totalorder %v650, 1
        %vm1054 = vcmp.eq.s32.totalorder %v651, 1
        %vm1055 = vcmp.eq.s32.totalorder %v652, 1
        %vm1056 = vcmp.eq.s32.totalorder %v653, 1
        %vm1057 = vcmp.eq.s32.totalorder %v654, 1
        %vm1058 = vcmp.eq.s32.totalorder %v655, 1
        %vm1059 = vcmp.eq.s32.totalorder %v656, 1
        %vm1060 = vcmp.eq.s32.totalorder %v657, 1
        %vm1061 = vcmp.eq.s32.totalorder %v658, 1
        %vm1062 = vcmp.eq.s32.totalorder %v659, 1
        %vm1063 = vcmp.eq.s32.totalorder %v660, 1
        %vm1064 = vcmp.eq.s32.totalorder %v661, 1
        %vm1065 = vcmp.eq.s32.totalorder %v662, 1
        %vm1066 = vcmp.eq.s32.totalorder %v663, 1
        %vm1067 = vcmp.eq.s32.totalorder %v664, 1
        %vm1068 = vcmp.eq.s32.totalorder %v665, 1
        %vm1069 = vcmp.eq.s32.totalorder %v666, 1
        %vm1070 = vcmp.eq.s32.totalorder %v667, 1
        %vm1071 = vcmp.eq.s32.totalorder %v668, 1
        %vm1072 = vcmp.eq.s32.totalorder %v669, 1
        %vm1073 = vcmp.eq.s32.totalorder %v670, 1
        %vm1074 = vcmp.eq.s32.totalorder %v671, 1
        %vm1075 = vcmp.eq.s32.totalorder %v672, 1
        %vm1076 = vcmp.eq.s32.totalorder %v673, 1
        %vm1077 = vcmp.eq.s32.totalorder %v674, 1
        %vm1078 = vcmp.eq.s32.totalorder %v675, 1
        %vm1079 = vcmp.eq.s32.totalorder %v676, 1
        %vm1080 = vcmp.eq.s32.totalorder %v677, 1
        %vm1081 = vcmp.eq.s32.totalorder %v678, 1
        %vm1082 = vcmp.eq.s32.totalorder %v679, 1
        %vm1083 = vcmp.eq.s32.totalorder %v680, 1
        %vm1084 = vcmp.eq.s32.totalorder %v681, 1
        %vm1085 = vcmp.eq.s32.totalorder %v682, 1
        %vm1086 = vcmp.eq.s32.totalorder %v683, 1
        %vm1087 = vcmp.eq.s32.totalorder %v684, 1
        %vm1088 = vcmp.eq.s32.totalorder %v685, 1
        %vm1089 = vcmp.eq.s32.totalorder %v686, 1
        %vm1090 = vcmp.eq.s32.totalorder %v687, 1
        %vm1091 = vcmp.eq.s32.totalorder %v688, 1
        %vm1092 = vcmp.eq.s32.totalorder %v689, 1
        %vm1093 = vcmp.eq.s32.totalorder %v690, 1
        %vm1094 = vcmp.eq.s32.totalorder %v691, 1
        %vm1095 = vcmp.eq.s32.totalorder %v692, 1
        %vm1096 = vcmp.eq.s32.totalorder %v693, 1
        %vm1097 = vcmp.eq.s32.totalorder %v694, 1
        %vm1098 = vcmp.eq.s32.totalorder %v695, 1
        %vm1099 = vcmp.eq.s32.totalorder %v696, 1
        %vm1100 = vcmp.eq.s32.totalorder %v697, 1
        %vm1101 = vcmp.eq.s32.totalorder %v698, 1
        %vm1102 = vcmp.eq.s32.totalorder %v699, 1
        %vm1103 = vcmp.eq.s32.totalorder %v700, 1
        %vm1104 = vcmp.eq.s32.totalorder %v701, 1
        %vm1105 = vcmp.eq.s32.totalorder %v702, 1
        %vm1106 = vcmp.eq.s32.totalorder %v703, 1
        %vm1107 = vcmp.eq.s32.totalorder %v704, 1
        %vm1108 = vcmp.eq.s32.totalorder %v705, 1
        %vm1109 = vcmp.eq.s32.totalorder %v706, 1
        %vm1110 = vcmp.eq.s32.totalorder %v707, 1
        %vm1111 = vcmp.eq.s32.totalorder %v708, 1
        %vm1112 = vcmp.eq.s32.totalorder %v709, 1
        %vm1113 = vcmp.eq.s32.totalorder %v710, 1
        %vm1114 = vcmp.eq.s32.totalorder %v567, 16
        %vm1115 = vcmp.eq.s32.totalorder %v568, 16
        %vm1116 = vcmp.eq.s32.totalorder %v569, 16
        %vm1117 = vcmp.eq.s32.totalorder %v570, 16
        %vm1118 = vcmp.eq.s32.totalorder %v571, 16
        %vm1119 = vcmp.eq.s32.totalorder %v572, 16
        %vm1120 = vcmp.eq.s32.totalorder %v573, 16
        %vm1121 = vcmp.eq.s32.totalorder %v574, 16
        %vm1122 = vcmp.eq.s32.totalorder %v575, 16
        %vm1123 = vcmp.eq.s32.totalorder %v576, 16
        %vm1124 = vcmp.eq.s32.totalorder %v577, 16
        %vm1125 = vcmp.eq.s32.totalorder %v578, 16
        %vm1126 = vcmp.eq.s32.totalorder %v579, 16
        %vm1127 = vcmp.eq.s32.totalorder %v580, 16
        %vm1128 = vcmp.eq.s32.totalorder %v581, 16
        %vm1129 = vcmp.eq.s32.totalorder %v582, 16
        %vm1130 = vcmp.eq.s32.totalorder %v583, 16
        %vm1131 = vcmp.eq.s32.totalorder %v584, 16
        %vm1132 = vcmp.eq.s32.totalorder %v585, 16
        %vm1133 = vcmp.eq.s32.totalorder %v586, 16
        %vm1134 = vcmp.eq.s32.totalorder %v587, 16
        %vm1135 = vcmp.eq.s32.totalorder %v588, 16
        %vm1136 = vcmp.eq.s32.totalorder %v589, 16
        %vm1137 = vcmp.eq.s32.totalorder %v590, 16
        %vm1138 = vcmp.eq.s32.totalorder %v591, 16
        %vm1139 = vcmp.eq.s32.totalorder %v592, 16
        %vm1140 = vcmp.eq.s32.totalorder %v593, 16
        %vm1141 = vcmp.eq.s32.totalorder %v594, 16
        %vm1142 = vcmp.eq.s32.totalorder %v595, 16
        %vm1143 = vcmp.eq.s32.totalorder %v596, 16
        %vm1144 = vcmp.eq.s32.totalorder %v597, 16
        %vm1145 = vcmp.eq.s32.totalorder %v598, 16
        %vm1146 = vcmp.eq.s32.totalorder %v599, 16
        %vm1147 = vcmp.eq.s32.totalorder %v600, 16
        %vm1148 = vcmp.eq.s32.totalorder %v601, 16
        %vm1149 = vcmp.eq.s32.totalorder %v602, 16
        %vm1150 = vcmp.eq.s32.totalorder %v603, 16
        %vm1151 = vcmp.eq.s32.totalorder %v604, 16
        %vm1152 = vcmp.eq.s32.totalorder %v605, 16
        %vm1153 = vcmp.eq.s32.totalorder %v606, 16
        %vm1154 = vcmp.eq.s32.totalorder %v607, 16
        %vm1155 = vcmp.eq.s32.totalorder %v608, 16
        %vm1156 = vcmp.eq.s32.totalorder %v609, 16
        %vm1157 = vcmp.eq.s32.totalorder %v610, 16
        %vm1158 = vcmp.eq.s32.totalorder %v611, 16
        %vm1159 = vcmp.eq.s32.totalorder %v612, 16
        %vm1160 = vcmp.eq.s32.totalorder %v613, 16
        %vm1161 = vcmp.eq.s32.totalorder %v614, 16
        %vm1162 = vcmp.eq.s32.totalorder %v615, 16
        %vm1163 = vcmp.eq.s32.totalorder %v616, 16
        %vm1164 = vcmp.eq.s32.totalorder %v617, 16
        %vm1165 = vcmp.eq.s32.totalorder %v618, 16
        %vm1166 = vcmp.eq.s32.totalorder %v619, 16
        %vm1167 = vcmp.eq.s32.totalorder %v620, 16
        %vm1168 = vcmp.eq.s32.totalorder %v621, 16
        %vm1169 = vcmp.eq.s32.totalorder %v622, 16
        %vm1170 = vcmp.eq.s32.totalorder %v623, 16
        %vm1171 = vcmp.eq.s32.totalorder %v624, 16
        %vm1172 = vcmp.eq.s32.totalorder %v625, 16
        %vm1173 = vcmp.eq.s32.totalorder %v626, 16
        %vm1174 = vcmp.eq.s32.totalorder %v627, 16
        %vm1175 = vcmp.eq.s32.totalorder %v628, 16
        %vm1176 = vcmp.eq.s32.totalorder %v629, 16
        %vm1177 = vcmp.eq.s32.totalorder %v630, 16
        %vm1178 = vcmp.eq.s32.totalorder %v631, 16
        %vm1179 = vcmp.eq.s32.totalorder %v632, 16
        %vm1180 = vcmp.eq.s32.totalorder %v633, 16
        %vm1181 = vcmp.eq.s32.totalorder %v634, 16
        %vm1182 = vcmp.eq.s32.totalorder %v635, 16
        %vm1183 = vcmp.eq.s32.totalorder %v636, 16
        %vm1184 = vcmp.eq.s32.totalorder %v637, 16
        %vm1185 = vcmp.eq.s32.totalorder %v638, 16
        %vm1186 = vcmp.eq.s32.totalorder %v639, 16
        %vm1187 = vcmp.eq.s32.totalorder %v640, 16
        %vm1188 = vcmp.eq.s32.totalorder %v641, 16
        %vm1189 = vcmp.eq.s32.totalorder %v642, 16
        %vm1190 = vcmp.eq.s32.totalorder %v643, 16
        %vm1191 = vcmp.eq.s32.totalorder %v644, 16
        %vm1192 = vcmp.eq.s32.totalorder %v645, 16
        %vm1193 = vcmp.eq.s32.totalorder %v646, 16
        %vm1194 = vcmp.eq.s32.totalorder %v647, 16
        %vm1195 = vcmp.eq.s32.totalorder %v648, 16
        %vm1196 = vcmp.eq.s32.totalorder %v649, 16
        %vm1197 = vcmp.eq.s32.totalorder %v650, 16
        %vm1198 = vcmp.eq.s32.totalorder %v651, 16
        %vm1199 = vcmp.eq.s32.totalorder %v652, 16
        %vm1200 = vcmp.eq.s32.totalorder %v653, 16
        %vm1201 = vcmp.eq.s32.totalorder %v654, 16
        %vm1202 = vcmp.eq.s32.totalorder %v655, 16
        %vm1203 = vcmp.eq.s32.totalorder %v656, 16
        %vm1204 = vcmp.eq.s32.totalorder %v657, 16
        %vm1205 = vcmp.eq.s32.totalorder %v658, 16
        %vm1206 = vcmp.eq.s32.totalorder %v659, 16
        %vm1207 = vcmp.eq.s32.totalorder %v660, 16
        %vm1208 = vcmp.eq.s32.totalorder %v661, 16
        %vm1209 = vcmp.eq.s32.totalorder %v662, 16
        %vm1210 = vcmp.eq.s32.totalorder %v663, 16
        %vm1211 = vcmp.eq.s32.totalorder %v664, 16
        %vm1212 = vcmp.eq.s32.totalorder %v665, 16
        %vm1213 = vcmp.eq.s32.totalorder %v666, 16
        %vm1214 = vcmp.eq.s32.totalorder %v667, 16
        %vm1215 = vcmp.eq.s32.totalorder %v668, 16
        %vm1216 = vcmp.eq.s32.totalorder %v669, 16
        %vm1217 = vcmp.eq.s32.totalorder %v670, 16
        %vm1218 = vcmp.eq.s32.totalorder %v671, 16
        %vm1219 = vcmp.eq.s32.totalorder %v672, 16
        %vm1220 = vcmp.eq.s32.totalorder %v673, 16
        %vm1221 = vcmp.eq.s32.totalorder %v674, 16
        %vm1222 = vcmp.eq.s32.totalorder %v675, 16
        %vm1223 = vcmp.eq.s32.totalorder %v676, 16
        %vm1224 = vcmp.eq.s32.totalorder %v677, 16
        %vm1225 = vcmp.eq.s32.totalorder %v678, 16
        %vm1226 = vcmp.eq.s32.totalorder %v679, 16
        %vm1227 = vcmp.eq.s32.totalorder %v680, 16
        %vm1228 = vcmp.eq.s32.totalorder %v681, 16
        %vm1229 = vcmp.eq.s32.totalorder %v682, 16
        %vm1230 = vcmp.eq.s32.totalorder %v683, 16
        %vm1231 = vcmp.eq.s32.totalorder %v684, 16
        %vm1232 = vcmp.eq.s32.totalorder %v685, 16
        %vm1233 = vcmp.eq.s32.totalorder %v686, 16
        %vm1234 = vcmp.eq.s32.totalorder %v687, 16
        %vm1235 = vcmp.eq.s32.totalorder %v688, 16
        %vm1236 = vcmp.eq.s32.totalorder %v689, 16
        %vm1237 = vcmp.eq.s32.totalorder %v690, 16
        %vm1238 = vcmp.eq.s32.totalorder %v691, 16
        %vm1239 = vcmp.eq.s32.totalorder %v692, 16
        %vm1240 = vcmp.eq.s32.totalorder %v693, 16
        %vm1241 = vcmp.eq.s32.totalorder %v694, 16
        %vm1242 = vcmp.eq.s32.totalorder %v695, 16
        %vm1243 = vcmp.eq.s32.totalorder %v696, 16
        %vm1244 = vcmp.eq.s32.totalorder %v697, 16
        %vm1245 = vcmp.eq.s32.totalorder %v698, 16
        %vm1246 = vcmp.eq.s32.totalorder %v699, 16
        %vm1247 = vcmp.eq.s32.totalorder %v700, 16
        %vm1248 = vcmp.eq.s32.totalorder %v701, 16
        %vm1249 = vcmp.eq.s32.totalorder %v702, 16
        %vm1250 = vcmp.eq.s32.totalorder %v703, 16
        %vm1251 = vcmp.eq.s32.totalorder %v704, 16
        %vm1252 = vcmp.eq.s32.totalorder %v705, 16
        %vm1253 = vcmp.eq.s32.totalorder %v706, 16
        %vm1254 = vcmp.eq.s32.totalorder %v707, 16
        %vm1255 = vcmp.eq.s32.totalorder %v708, 16
        %vm1256 = vcmp.eq.s32.totalorder %v709, 16
        %vm1257 = vcmp.eq.s32.totalorder %v710, 16
        %vm1258 = vcmp.eq.s32.totalorder %v567, 17
        %vm1259 = vcmp.eq.s32.totalorder %v568, 17
        %vm1260 = vcmp.eq.s32.totalorder %v569, 17
        %vm1261 = vcmp.eq.s32.totalorder %v570, 17
        %vm1262 = vcmp.eq.s32.totalorder %v571, 17
        %vm1263 = vcmp.eq.s32.totalorder %v572, 17
        %vm1264 = vcmp.eq.s32.totalorder %v573, 17
        %vm1265 = vcmp.eq.s32.totalorder %v574, 17
        %vm1266 = vcmp.eq.s32.totalorder %v575, 17
        %vm1267 = vcmp.eq.s32.totalorder %v576, 17
        %vm1268 = vcmp.eq.s32.totalorder %v577, 17
        %vm1269 = vcmp.eq.s32.totalorder %v578, 17
        %vm1270 = vcmp.eq.s32.totalorder %v579, 17
        %vm1271 = vcmp.eq.s32.totalorder %v580, 17
        %vm1272 = vcmp.eq.s32.totalorder %v581, 17
        %vm1273 = vcmp.eq.s32.totalorder %v582, 17
        %vm1274 = vcmp.eq.s32.totalorder %v583, 17
        %vm1275 = vcmp.eq.s32.totalorder %v584, 17
        %vm1276 = vcmp.eq.s32.totalorder %v585, 17
        %vm1277 = vcmp.eq.s32.totalorder %v586, 17
        %vm1278 = vcmp.eq.s32.totalorder %v587, 17
        %vm1279 = vcmp.eq.s32.totalorder %v588, 17
        %vm1280 = vcmp.eq.s32.totalorder %v589, 17
        %vm1281 = vcmp.eq.s32.totalorder %v590, 17
        %vm1282 = vcmp.eq.s32.totalorder %v591, 17
        %vm1283 = vcmp.eq.s32.totalorder %v592, 17
        %vm1284 = vcmp.eq.s32.totalorder %v593, 17
        %vm1285 = vcmp.eq.s32.totalorder %v594, 17
        %vm1286 = vcmp.eq.s32.totalorder %v595, 17
        %vm1287 = vcmp.eq.s32.totalorder %v596, 17
        %vm1288 = vcmp.eq.s32.totalorder %v597, 17
        %vm1289 = vcmp.eq.s32.totalorder %v598, 17
        %vm1290 = vcmp.eq.s32.totalorder %v599, 17
        %vm1291 = vcmp.eq.s32.totalorder %v600, 17
        %vm1292 = vcmp.eq.s32.totalorder %v601, 17
        %vm1293 = vcmp.eq.s32.totalorder %v602, 17
        %vm1294 = vcmp.eq.s32.totalorder %v603, 17
        %vm1295 = vcmp.eq.s32.totalorder %v604, 17
        %vm1296 = vcmp.eq.s32.totalorder %v605, 17
        %vm1297 = vcmp.eq.s32.totalorder %v606, 17
        %vm1298 = vcmp.eq.s32.totalorder %v607, 17
        %vm1299 = vcmp.eq.s32.totalorder %v608, 17
        %vm1300 = vcmp.eq.s32.totalorder %v609, 17
        %vm1301 = vcmp.eq.s32.totalorder %v610, 17
        %vm1302 = vcmp.eq.s32.totalorder %v611, 17
        %vm1303 = vcmp.eq.s32.totalorder %v612, 17
        %vm1304 = vcmp.eq.s32.totalorder %v613, 17
        %vm1305 = vcmp.eq.s32.totalorder %v614, 17
        %vm1306 = vcmp.eq.s32.totalorder %v615, 17
        %vm1307 = vcmp.eq.s32.totalorder %v616, 17
        %vm1308 = vcmp.eq.s32.totalorder %v617, 17
        %vm1309 = vcmp.eq.s32.totalorder %v618, 17
        %vm1310 = vcmp.eq.s32.totalorder %v619, 17
        %vm1311 = vcmp.eq.s32.totalorder %v620, 17
        %vm1312 = vcmp.eq.s32.totalorder %v621, 17
        %vm1313 = vcmp.eq.s32.totalorder %v622, 17
        %vm1314 = vcmp.eq.s32.totalorder %v623, 17
        %vm1315 = vcmp.eq.s32.totalorder %v624, 17
        %vm1316 = vcmp.eq.s32.totalorder %v625, 17
        %vm1317 = vcmp.eq.s32.totalorder %v626, 17
        %vm1318 = vcmp.eq.s32.totalorder %v627, 17
        %vm1319 = vcmp.eq.s32.totalorder %v628, 17
        %vm1320 = vcmp.eq.s32.totalorder %v629, 17
        %vm1321 = vcmp.eq.s32.totalorder %v630, 17
        %vm1322 = vcmp.eq.s32.totalorder %v631, 17
        %vm1323 = vcmp.eq.s32.totalorder %v632, 17
        %vm1324 = vcmp.eq.s32.totalorder %v633, 17
        %vm1325 = vcmp.eq.s32.totalorder %v634, 17
        %vm1326 = vcmp.eq.s32.totalorder %v635, 17
        %vm1327 = vcmp.eq.s32.totalorder %v636, 17
        %vm1328 = vcmp.eq.s32.totalorder %v637, 17
        %vm1329 = vcmp.eq.s32.totalorder %v638, 17
        %vm1330 = vcmp.eq.s32.totalorder %v639, 17
        %vm1331 = vcmp.eq.s32.totalorder %v640, 17
        %vm1332 = vcmp.eq.s32.totalorder %v641, 17
        %vm1333 = vcmp.eq.s32.totalorder %v642, 17
        %vm1334 = vcmp.eq.s32.totalorder %v643, 17
        %vm1335 = vcmp.eq.s32.totalorder %v644, 17
        %vm1336 = vcmp.eq.s32.totalorder %v645, 17
        %vm1337 = vcmp.eq.s32.totalorder %v646, 17
        %vm1338 = vcmp.eq.s32.totalorder %v647, 17
        %vm1339 = vcmp.eq.s32.totalorder %v648, 17
        %vm1340 = vcmp.eq.s32.totalorder %v649, 17
        %vm1341 = vcmp.eq.s32.totalorder %v650, 17
        %vm1342 = vcmp.eq.s32.totalorder %v651, 17
        %vm1343 = vcmp.eq.s32.totalorder %v652, 17
        %vm1344 = vcmp.eq.s32.totalorder %v653, 17
        %vm1345 = vcmp.eq.s32.totalorder %v654, 17
        %vm1346 = vcmp.eq.s32.totalorder %v655, 17
        %vm1347 = vcmp.eq.s32.totalorder %v656, 17
        %vm1348 = vcmp.eq.s32.totalorder %v657, 17
        %vm1349 = vcmp.eq.s32.totalorder %v658, 17
        %vm1350 = vcmp.eq.s32.totalorder %v659, 17
        %vm1351 = vcmp.eq.s32.totalorder %v660, 17
        %vm1352 = vcmp.eq.s32.totalorder %v661, 17
        %vm1353 = vcmp.eq.s32.totalorder %v662, 17
        %vm1354 = vcmp.eq.s32.totalorder %v663, 17
        %vm1355 = vcmp.eq.s32.totalorder %v664, 17
        %vm1356 = vcmp.eq.s32.totalorder %v665, 17
        %vm1357 = vcmp.eq.s32.totalorder %v666, 17
        %vm1358 = vcmp.eq.s32.totalorder %v667, 17
        %vm1359 = vcmp.eq.s32.totalorder %v668, 17
        %vm1360 = vcmp.eq.s32.totalorder %v669, 17
        %vm1361 = vcmp.eq.s32.totalorder %v670, 17
        %vm1362 = vcmp.eq.s32.totalorder %v671, 17
        %vm1363 = vcmp.eq.s32.totalorder %v672, 17
        %vm1364 = vcmp.eq.s32.totalorder %v673, 17
        %vm1365 = vcmp.eq.s32.totalorder %v674, 17
        %vm1366 = vcmp.eq.s32.totalorder %v675, 17
        %vm1367 = vcmp.eq.s32.totalorder %v676, 17
        %vm1368 = vcmp.eq.s32.totalorder %v677, 17
        %vm1369 = vcmp.eq.s32.totalorder %v678, 17
        %vm1370 = vcmp.eq.s32.totalorder %v679, 17
        %vm1371 = vcmp.eq.s32.totalorder %v680, 17
        %vm1372 = vcmp.eq.s32.totalorder %v681, 17
        %vm1373 = vcmp.eq.s32.totalorder %v682, 17
        %vm1374 = vcmp.eq.s32.totalorder %v683, 17
        %vm1375 = vcmp.eq.s32.totalorder %v684, 17
        %vm1376 = vcmp.eq.s32.totalorder %v685, 17
        %vm1377 = vcmp.eq.s32.totalorder %v686, 17
        %vm1378 = vcmp.eq.s32.totalorder %v687, 17
        %vm1379 = vcmp.eq.s32.totalorder %v688, 17
        %vm1380 = vcmp.eq.s32.totalorder %v689, 17
        %vm1381 = vcmp.eq.s32.totalorder %v690, 17
        %vm1382 = vcmp.eq.s32.totalorder %v691, 17
        %vm1383 = vcmp.eq.s32.totalorder %v692, 17
        %vm1384 = vcmp.eq.s32.totalorder %v693, 17
        %vm1385 = vcmp.eq.s32.totalorder %v694, 17
        %vm1386 = vcmp.eq.s32.totalorder %v695, 17
        %vm1387 = vcmp.eq.s32.totalorder %v696, 17
        %vm1388 = vcmp.eq.s32.totalorder %v697, 17
        %vm1389 = vcmp.eq.s32.totalorder %v698, 17
        %vm1390 = vcmp.eq.s32.totalorder %v699, 17
        %vm1391 = vcmp.eq.s32.totalorder %v700, 17
        %vm1392 = vcmp.eq.s32.totalorder %v701, 17
        %vm1393 = vcmp.eq.s32.totalorder %v702, 17
        %vm1394 = vcmp.eq.s32.totalorder %v703, 17
        %vm1395 = vcmp.eq.s32.totalorder %v704, 17
        %vm1396 = vcmp.eq.s32.totalorder %v705, 17
        %vm1397 = vcmp.eq.s32.totalorder %v706, 17
        %vm1398 = vcmp.eq.s32.totalorder %v707, 17
        %vm1399 = vcmp.eq.s32.totalorder %v708, 17
        %vm1400 = vcmp.eq.s32.totalorder %v709, 17
        %vm1401 = vcmp.eq.s32.totalorder %v710, 17
        %v1402 = vsel %vm1258, %v801, 0.0
        %v1403 = vsel %vm1259, %v801, 0.0
        %v1404 = vsel %vm1260, %v801, 0.0
        %v1405 = vsel %vm1261, %v801, 0.0
        %v1406 = vsel %vm1262, %v801, 0.0
        %v1407 = vsel %vm1263, %v801, 0.0
        %v1408 = vsel %vm1264, %v801, 0.0
        %v1409 = vsel %vm1265, %v801, 0.0
        %v1410 = vsel %vm1266, %v801, 0.0
        %v1411 = vsel %vm1267, %v801, 0.0
        %v1412 = vsel %vm1268, %v801, 0.0
        %v1413 = vsel %vm1269, %v801, 0.0
        %v1414 = vsel %vm1270, %v801, 0.0
        %v1415 = vsel %vm1271, %v801, 0.0
        %v1416 = vsel %vm1272, %v801, 0.0
        %v1417 = vsel %vm1273, %v801, 0.0
        %v1418 = vsel %vm1274, %v802, 0.0
        %v1419 = vsel %vm1275, %v802, 0.0
        %v1420 = vsel %vm1276, %v802, 0.0
        %v1421 = vsel %vm1277, %v802, 0.0
        %v1422 = vsel %vm1278, %v802, 0.0
        %v1423 = vsel %vm1279, %v802, 0.0
        %v1424 = vsel %vm1280, %v802, 0.0
        %v1425 = vsel %vm1281, %v802, 0.0
        %v1426 = vsel %vm1282, %v802, 0.0
        %v1427 = vsel %vm1283, %v802, 0.0
        %v1428 = vsel %vm1284, %v802, 0.0
        %v1429 = vsel %vm1285, %v802, 0.0
        %v1430 = vsel %vm1286, %v802, 0.0
        %v1431 = vsel %vm1287, %v802, 0.0
        %v1432 = vsel %vm1288, %v802, 0.0
        %v1433 = vsel %vm1289, %v802, 0.0
        %v1434 = vsel %vm1290, %v803, 0.0
        %v1435 = vsel %vm1291, %v803, 0.0
        %v1436 = vsel %vm1292, %v803, 0.0
        %v1437 = vsel %vm1293, %v803, 0.0
        %v1438 = vsel %vm1294, %v803, 0.0
        %v1439 = vsel %vm1295, %v803, 0.0
        %v1440 = vsel %vm1296, %v803, 0.0
        %v1441 = vsel %vm1297, %v803, 0.0
        %v1442 = vsel %vm1298, %v803, 0.0
        %v1443 = vsel %vm1299, %v803, 0.0
        %v1444 = vsel %vm1300, %v803, 0.0
        %v1445 = vsel %vm1301, %v803, 0.0
        %v1446 = vsel %vm1302, %v803, 0.0
        %v1447 = vsel %vm1303, %v803, 0.0
        %v1448 = vsel %vm1304, %v803, 0.0
        %v1449 = vsel %vm1305, %v803, 0.0
        %v1450 = vsel %vm1306, %v804, 0.0
        %v1451 = vsel %vm1307, %v804, 0.0
        %v1452 = vsel %vm1308, %v804, 0.0
        %v1453 = vsel %vm1309, %v804, 0.0
        %v1454 = vsel %vm1310, %v804, 0.0
        %v1455 = vsel %vm1311, %v804, 0.0
        %v1456 = vsel %vm1312, %v804, 0.0
        %v1457 = vsel %vm1313, %v804, 0.0
        %v1458 = vsel %vm1314, %v804, 0.0
        %v1459 = vsel %vm1315, %v804, 0.0
        %v1460 = vsel %vm1316, %v804, 0.0
        %v1461 = vsel %vm1317, %v804, 0.0
        %v1462 = vsel %vm1318, %v804, 0.0
        %v1463 = vsel %vm1319, %v804, 0.0
        %v1464 = vsel %vm1320, %v804, 0.0
        %v1465 = vsel %vm1321, %v804, 0.0
        %v1466 = vsel %vm1322, %v805, 0.0
        %v1467 = vsel %vm1323, %v805, 0.0
        %v1468 = vsel %vm1324, %v805, 0.0
        %v1469 = vsel %vm1325, %v805, 0.0
        %v1470 = vsel %vm1326, %v805, 0.0
        %v1471 = vsel %vm1327, %v805, 0.0
        %v1472 = vsel %vm1328, %v805, 0.0
        %v1473 = vsel %vm1329, %v805, 0.0
        %v1474 = vsel %vm1330, %v805, 0.0
        %v1475 = vsel %vm1331, %v805, 0.0
        %v1476 = vsel %vm1332, %v805, 0.0
        %v1477 = vsel %vm1333, %v805, 0.0
        %v1478 = vsel %vm1334, %v805, 0.0
        %v1479 = vsel %vm1335, %v805, 0.0
        %v1480 = vsel %vm1336, %v805, 0.0
        %v1481 = vsel %vm1337, %v805, 0.0
        %v1482 = vsel %vm1338, %v806, 0.0
        %v1483 = vsel %vm1339, %v806, 0.0
        %v1484 = vsel %vm1340, %v806, 0.0
        %v1485 = vsel %vm1341, %v806, 0.0
        %v1486 = vsel %vm1342, %v806, 0.0
        %v1487 = vsel %vm1343, %v806, 0.0
        %v1488 = vsel %vm1344, %v806, 0.0
        %v1489 = vsel %vm1345, %v806, 0.0
        %v1490 = vsel %vm1346, %v806, 0.0
        %v1491 = vsel %vm1347, %v806, 0.0
        %v1492 = vsel %vm1348, %v806, 0.0
        %v1493 = vsel %vm1349, %v806, 0.0
        %v1494 = vsel %vm1350, %v806, 0.0
        %v1495 = vsel %vm1351, %v806, 0.0
        %v1496 = vsel %vm1352, %v806, 0.0
        %v1497 = vsel %vm1353, %v806, 0.0
        %v1498 = vsel %vm1354, %v807, 0.0
        %v1499 = vsel %vm1355, %v807, 0.0
        %v1500 = vsel %vm1356, %v807, 0.0
        %v1501 = vsel %vm1357, %v807, 0.0
        %v1502 = vsel %vm1358, %v807, 0.0
        %v1503 = vsel %vm1359, %v807, 0.0
        %v1504 = vsel %vm1360, %v807, 0.0
        %v1505 = vsel %vm1361, %v807, 0.0
        %v1506 = vsel %vm1362, %v807, 0.0
        %v1507 = vsel %vm1363, %v807, 0.0
        %v1508 = vsel %vm1364, %v807, 0.0
        %v1509 = vsel %vm1365, %v807, 0.0
        %v1510 = vsel %vm1366, %v807, 0.0
        %v1511 = vsel %vm1367, %v807, 0.0
        %v1512 = vsel %vm1368, %v807, 0.0
        %v1513 = vsel %vm1369, %v807, 0.0
        %v1514 = vsel %vm1370, %v808, 0.0
        %v1515 = vsel %vm1371, %v808, 0.0
        %v1516 = vsel %vm1372, %v808, 0.0
        %v1517 = vsel %vm1373, %v808, 0.0
        %v1518 = vsel %vm1374, %v808, 0.0
        %v1519 = vsel %vm1375, %v808, 0.0
        %v1520 = vsel %vm1376, %v808, 0.0
        %v1521 = vsel %vm1377, %v808, 0.0
        %v1522 = vsel %vm1378, %v808, 0.0
        %v1523 = vsel %vm1379, %v808, 0.0
        %v1524 = vsel %vm1380, %v808, 0.0
        %v1525 = vsel %vm1381, %v808, 0.0
        %v1526 = vsel %vm1382, %v808, 0.0
        %v1527 = vsel %vm1383, %v808, 0.0
        %v1528 = vsel %vm1384, %v808, 0.0
        %v1529 = vsel %vm1385, %v808, 0.0
        %v1530 = vsel %vm1386, %v809, 0.0
        %v1531 = vsel %vm1387, %v809, 0.0
        %v1532 = vsel %vm1388, %v809, 0.0
        %v1533 = vsel %vm1389, %v809, 0.0
        %v1534 = vsel %vm1390, %v809, 0.0
        %v1535 = vsel %vm1391, %v809, 0.0
        %v1536 = vsel %vm1392, %v809, 0.0
        %v1537 = vsel %vm1393, %v809, 0.0
        %v1538 = vsel %vm1394, %v809, 0.0
        %v1539 = vsel %vm1395, %v809, 0.0
        %v1540 = vsel %vm1396, %v809, 0.0
        %v1541 = vsel %vm1397, %v809, 0.0
        %v1542 = vsel %vm1398, %v809, 0.0
        %v1543 = vsel %vm1399, %v809, 0.0
        %v1544 = vsel %vm1400, %v809, 0.0
        %v1545 = vsel %vm1401, %v809, 0.0
        %v1546 = vsel %vm1114, %v774, %v1402
        %v1547 = vsel %vm1115, %v774, %v1403
        %v1548 = vsel %vm1116, %v774, %v1404
        %v1549 = vsel %vm1117, %v774, %v1405
        %v1550 = vsel %vm1118, %v774, %v1406
        %v1551 = vsel %vm1119, %v774, %v1407
        %v1552 = vsel %vm1120, %v774, %v1408
        %v1553 = vsel %vm1121, %v774, %v1409
        %v1554 = vsel %vm1122, %v774, %v1410
        %v1555 = vsel %vm1123, %v774, %v1411
        %v1556 = vsel %vm1124, %v774, %v1412
        %v1557 = vsel %vm1125, %v774, %v1413
        %v1558 = vsel %vm1126, %v774, %v1414
        %v1559 = vsel %vm1127, %v774, %v1415
        %v1560 = vsel %vm1128, %v774, %v1416
        %v1561 = vsel %vm1129, %v774, %v1417
        %v1562 = vsel %vm1130, %v775, %v1418
        %v1563 = vsel %vm1131, %v775, %v1419
        %v1564 = vsel %vm1132, %v775, %v1420
        %v1565 = vsel %vm1133, %v775, %v1421
        %v1566 = vsel %vm1134, %v775, %v1422
        %v1567 = vsel %vm1135, %v775, %v1423
        %v1568 = vsel %vm1136, %v775, %v1424
        %v1569 = vsel %vm1137, %v775, %v1425
        %v1570 = vsel %vm1138, %v775, %v1426
        %v1571 = vsel %vm1139, %v775, %v1427
        %v1572 = vsel %vm1140, %v775, %v1428
        %v1573 = vsel %vm1141, %v775, %v1429
        %v1574 = vsel %vm1142, %v775, %v1430
        %v1575 = vsel %vm1143, %v775, %v1431
        %v1576 = vsel %vm1144, %v775, %v1432
        %v1577 = vsel %vm1145, %v775, %v1433
        %v1578 = vsel %vm1146, %v776, %v1434
        %v1579 = vsel %vm1147, %v776, %v1435
        %v1580 = vsel %vm1148, %v776, %v1436
        %v1581 = vsel %vm1149, %v776, %v1437
        %v1582 = vsel %vm1150, %v776, %v1438
        %v1583 = vsel %vm1151, %v776, %v1439
        %v1584 = vsel %vm1152, %v776, %v1440
        %v1585 = vsel %vm1153, %v776, %v1441
        %v1586 = vsel %vm1154, %v776, %v1442
        %v1587 = vsel %vm1155, %v776, %v1443
        %v1588 = vsel %vm1156, %v776, %v1444
        %v1589 = vsel %vm1157, %v776, %v1445
        %v1590 = vsel %vm1158, %v776, %v1446
        %v1591 = vsel %vm1159, %v776, %v1447
        %v1592 = vsel %vm1160, %v776, %v1448
        %v1593 = vsel %vm1161, %v776, %v1449
        %v1594 = vsel %vm1162, %v777, %v1450
        %v1595 = vsel %vm1163, %v777, %v1451
        %v1596 = vsel %vm1164, %v777, %v1452
        %v1597 = vsel %vm1165, %v777, %v1453
        %v1598 = vsel %vm1166, %v777, %v1454
        %v1599 = vsel %vm1167, %v777, %v1455
        %v1600 = vsel %vm1168, %v777, %v1456
        %v1601 = vsel %vm1169, %v777, %v1457
        %v1602 = vsel %vm1170, %v777, %v1458
        %v1603 = vsel %vm1171, %v777, %v1459
        %v1604 = vsel %vm1172, %v777, %v1460
        %v1605 = vsel %vm1173, %v777, %v1461
        %v1606 = vsel %vm1174, %v777, %v1462
        %v1607 = vsel %vm1175, %v777, %v1463
        %v1608 = vsel %vm1176, %v777, %v1464
        %v1609 = vsel %vm1177, %v777, %v1465
        %v1610 = vsel %vm1178, %v778, %v1466
        %v1611 = vsel %vm1179, %v778, %v1467
        %v1612 = vsel %vm1180, %v778, %v1468
        %v1613 = vsel %vm1181, %v778, %v1469
        %v1614 = vsel %vm1182, %v778, %v1470
        %v1615 = vsel %vm1183, %v778, %v1471
        %v1616 = vsel %vm1184, %v778, %v1472
        %v1617 = vsel %vm1185, %v778, %v1473
        %v1618 = vsel %vm1186, %v778, %v1474
        %v1619 = vsel %vm1187, %v778, %v1475
        %v1620 = vsel %vm1188, %v778, %v1476
        %v1621 = vsel %vm1189, %v778, %v1477
        %v1622 = vsel %vm1190, %v778, %v1478
        %v1623 = vsel %vm1191, %v778, %v1479
        %v1624 = vsel %vm1192, %v778, %v1480
        %v1625 = vsel %vm1193, %v778, %v1481
        %v1626 = vsel %vm1194, %v779, %v1482
        %v1627 = vsel %vm1195, %v779, %v1483
        %v1628 = vsel %vm1196, %v779, %v1484
        %v1629 = vsel %vm1197, %v779, %v1485
        %v1630 = vsel %vm1198, %v779, %v1486
        %v1631 = vsel %vm1199, %v779, %v1487
        %v1632 = vsel %vm1200, %v779, %v1488
        %v1633 = vsel %vm1201, %v779, %v1489
        %v1634 = vsel %vm1202, %v779, %v1490
        %v1635 = vsel %vm1203, %v779, %v1491
        %v1636 = vsel %vm1204, %v779, %v1492
        %v1637 = vsel %vm1205, %v779, %v1493
        %v1638 = vsel %vm1206, %v779, %v1494
        %v1639 = vsel %vm1207, %v779, %v1495
        %v1640 = vsel %vm1208, %v779, %v1496
        %v1641 = vsel %vm1209, %v779, %v1497
        %v1642 = vsel %vm1210, %v780, %v1498
        %v1643 = vsel %vm1211, %v780, %v1499
        %v1644 = vsel %vm1212, %v780, %v1500
        %v1645 = vsel %vm1213, %v780, %v1501
        %v1646 = vsel %vm1214, %v780, %v1502
        %v1647 = vsel %vm1215, %v780, %v1503
        %v1648 = vsel %vm1216, %v780, %v1504
        %v1649 = vsel %vm1217, %v780, %v1505
        %v1650 = vsel %vm1218, %v780, %v1506
        %v1651 = vsel %vm1219, %v780, %v1507
        %v1652 = vsel %vm1220, %v780, %v1508
        %v1653 = vsel %vm1221, %v780, %v1509
        %v1654 = vsel %vm1222, %v780, %v1510
        %v1655 = vsel %vm1223, %v780, %v1511
        %v1656 = vsel %vm1224, %v780, %v1512
        %v1657 = vsel %vm1225, %v780, %v1513
        %v1658 = vsel %vm1226, %v781, %v1514
        %v1659 = vsel %vm1227, %v781, %v1515
        %v1660 = vsel %vm1228, %v781, %v1516
        %v1661 = vsel %vm1229, %v781, %v1517
        %v1662 = vsel %vm1230, %v781, %v1518
        %v1663 = vsel %vm1231, %v781, %v1519
        %v1664 = vsel %vm1232, %v781, %v1520
        %v1665 = vsel %vm1233, %v781, %v1521
        %v1666 = vsel %vm1234, %v781, %v1522
        %v1667 = vsel %vm1235, %v781, %v1523
        %v1668 = vsel %vm1236, %v781, %v1524
        %v1669 = vsel %vm1237, %v781, %v1525
        %v1670 = vsel %vm1238, %v781, %v1526
        %v1671 = vsel %vm1239, %v781, %v1527
        %v1672 = vsel %vm1240, %v781, %v1528
        %v1673 = vsel %vm1241, %v781, %v1529
        %v1674 = vsel %vm1242, %v782, %v1530
        %v1675 = vsel %vm1243, %v782, %v1531
        %v1676 = vsel %vm1244, %v782, %v1532
        %v1677 = vsel %vm1245, %v782, %v1533
        %v1678 = vsel %vm1246, %v782, %v1534
        %v1679 = vsel %vm1247, %v782, %v1535
        %v1680 = vsel %vm1248, %v782, %v1536
        %v1681 = vsel %vm1249, %v782, %v1537
        %v1682 = vsel %vm1250, %v782, %v1538
        %v1683 = vsel %vm1251, %v782, %v1539
        %v1684 = vsel %vm1252, %v782, %v1540
        %v1685 = vsel %vm1253, %v782, %v1541
        %v1686 = vsel %vm1254, %v782, %v1542
        %v1687 = vsel %vm1255, %v782, %v1543
        %v1688 = vsel %vm1256, %v782, %v1544
        %v1689 = vsel %vm1257, %v782, %v1545
        %v1690 = vsel %vm970, %v747, %v1546
        %v1691 = vsel %vm971, %v747, %v1547
        %v1692 = vsel %vm972, %v747, %v1548
        %v1693 = vsel %vm973, %v747, %v1549
        %v1694 = vsel %vm974, %v747, %v1550
        %v1695 = vsel %vm975, %v747, %v1551
        %v1696 = vsel %vm976, %v747, %v1552
        %v1697 = vsel %vm977, %v747, %v1553
        %v1698 = vsel %vm978, %v747, %v1554
        %v1699 = vsel %vm979, %v747, %v1555
        %v1700 = vsel %vm980, %v747, %v1556
        %v1701 = vsel %vm981, %v747, %v1557
        %v1702 = vsel %vm982, %v747, %v1558
        %v1703 = vsel %vm983, %v747, %v1559
        %v1704 = vsel %vm984, %v747, %v1560
        %v1705 = vsel %vm985, %v747, %v1561
        %v1706 = vsel %vm986, %v748, %v1562
        %v1707 = vsel %vm987, %v748, %v1563
        %v1708 = vsel %vm988, %v748, %v1564
        %v1709 = vsel %vm989, %v748, %v1565
        %v1710 = vsel %vm990, %v748, %v1566
        %v1711 = vsel %vm991, %v748, %v1567
        %v1712 = vsel %vm992, %v748, %v1568
        %v1713 = vsel %vm993, %v748, %v1569
        %v1714 = vsel %vm994, %v748, %v1570
        %v1715 = vsel %vm995, %v748, %v1571
        %v1716 = vsel %vm996, %v748, %v1572
        %v1717 = vsel %vm997, %v748, %v1573
        %v1718 = vsel %vm998, %v748, %v1574
        %v1719 = vsel %vm999, %v748, %v1575
        %v1720 = vsel %vm1000, %v748, %v1576
        %v1721 = vsel %vm1001, %v748, %v1577
        %v1722 = vsel %vm1002, %v749, %v1578
        %v1723 = vsel %vm1003, %v749, %v1579
        %v1724 = vsel %vm1004, %v749, %v1580
        %v1725 = vsel %vm1005, %v749, %v1581
        %v1726 = vsel %vm1006, %v749, %v1582
        %v1727 = vsel %vm1007, %v749, %v1583
        %v1728 = vsel %vm1008, %v749, %v1584
        %v1729 = vsel %vm1009, %v749, %v1585
        %v1730 = vsel %vm1010, %v749, %v1586
        %v1731 = vsel %vm1011, %v749, %v1587
        %v1732 = vsel %vm1012, %v749, %v1588
        %v1733 = vsel %vm1013, %v749, %v1589
        %v1734 = vsel %vm1014, %v749, %v1590
        %v1735 = vsel %vm1015, %v749, %v1591
        %v1736 = vsel %vm1016, %v749, %v1592
        %v1737 = vsel %vm1017, %v749, %v1593
        %v1738 = vsel %vm1018, %v750, %v1594
        %v1739 = vsel %vm1019, %v750, %v1595
        %v1740 = vsel %vm1020, %v750, %v1596
        %v1741 = vsel %vm1021, %v750, %v1597
        %v1742 = vsel %vm1022, %v750, %v1598
        %v1743 = vsel %vm1023, %v750, %v1599
        %v1744 = vsel %vm1024, %v750, %v1600
        %v1745 = vsel %vm1025, %v750, %v1601
        %v1746 = vsel %vm1026, %v750, %v1602
        %v1747 = vsel %vm1027, %v750, %v1603
        %v1748 = vsel %vm1028, %v750, %v1604
        %v1749 = vsel %vm1029, %v750, %v1605
        %v1750 = vsel %vm1030, %v750, %v1606
        %v1751 = vsel %vm1031, %v750, %v1607
        %v1752 = vsel %vm1032, %v750, %v1608
        %v1753 = vsel %vm1033, %v750, %v1609
        %v1754 = vsel %vm1034, %v751, %v1610
        %v1755 = vsel %vm1035, %v751, %v1611
        %v1756 = vsel %vm1036, %v751, %v1612
        %v1757 = vsel %vm1037, %v751, %v1613
        %v1758 = vsel %vm1038, %v751, %v1614
        %v1759 = vsel %vm1039, %v751, %v1615
        %v1760 = vsel %vm1040, %v751, %v1616
        %v1761 = vsel %vm1041, %v751, %v1617
        %v1762 = vsel %vm1042, %v751, %v1618
        %v1763 = vsel %vm1043, %v751, %v1619
        %v1764 = vsel %vm1044, %v751, %v1620
        %v1765 = vsel %vm1045, %v751, %v1621
        %v1766 = vsel %vm1046, %v751, %v1622
        %v1767 = vsel %vm1047, %v751, %v1623
        %v1768 = vsel %vm1048, %v751, %v1624
        %v1769 = vsel %vm1049, %v751, %v1625
        %v1770 = vsel %vm1050, %v752, %v1626
        %v1771 = vsel %vm1051, %v752, %v1627
        %v1772 = vsel %vm1052, %v752, %v1628
        %v1773 = vsel %vm1053, %v752, %v1629
        %v1774 = vsel %vm1054, %v752, %v1630
        %v1775 = vsel %vm1055, %v752, %v1631
        %v1776 = vsel %vm1056, %v752, %v1632
        %v1777 = vsel %vm1057, %v752, %v1633
        %v1778 = vsel %vm1058, %v752, %v1634
        %v1779 = vsel %vm1059, %v752, %v1635
        %v1780 = vsel %vm1060, %v752, %v1636
        %v1781 = vsel %vm1061, %v752, %v1637
        %v1782 = vsel %vm1062, %v752, %v1638
        %v1783 = vsel %vm1063, %v752, %v1639
        %v1784 = vsel %vm1064, %v752, %v1640
        %v1785 = vsel %vm1065, %v752, %v1641
        %v1786 = vsel %vm1066, %v753, %v1642
        %v1787 = vsel %vm1067, %v753, %v1643
        %v1788 = vsel %vm1068, %v753, %v1644
        %v1789 = vsel %vm1069, %v753, %v1645
        %v1790 = vsel %vm1070, %v753, %v1646
        %v1791 = vsel %vm1071, %v753, %v1647
        %v1792 = vsel %vm1072, %v753, %v1648
        %v1793 = vsel %vm1073, %v753, %v1649
        %v1794 = vsel %vm1074, %v753, %v1650
        %v1795 = vsel %vm1075, %v753, %v1651
        %v1796 = vsel %vm1076, %v753, %v1652
        %v1797 = vsel %vm1077, %v753, %v1653
        %v1798 = vsel %vm1078, %v753, %v1654
        %v1799 = vsel %vm1079, %v753, %v1655
        %v1800 = vsel %vm1080, %v753, %v1656
        %v1801 = vsel %vm1081, %v753, %v1657
        %v1802 = vsel %vm1082, %v754, %v1658
        %v1803 = vsel %vm1083, %v754, %v1659
        %v1804 = vsel %vm1084, %v754, %v1660
        %v1805 = vsel %vm1085, %v754, %v1661
        %v1806 = vsel %vm1086, %v754, %v1662
        %v1807 = vsel %vm1087, %v754, %v1663
        %v1808 = vsel %vm1088, %v754, %v1664
        %v1809 = vsel %vm1089, %v754, %v1665
        %v1810 = vsel %vm1090, %v754, %v1666
        %v1811 = vsel %vm1091, %v754, %v1667
        %v1812 = vsel %vm1092, %v754, %v1668
        %v1813 = vsel %vm1093, %v754, %v1669
        %v1814 = vsel %vm1094, %v754, %v1670
        %v1815 = vsel %vm1095, %v754, %v1671
        %v1816 = vsel %vm1096, %v754, %v1672
        %v1817 = vsel %vm1097, %v754, %v1673
        %v1818 = vsel %vm1098, %v755, %v1674
        %v1819 = vsel %vm1099, %v755, %v1675
        %v1820 = vsel %vm1100, %v755, %v1676
        %v1821 = vsel %vm1101, %v755, %v1677
        %v1822 = vsel %vm1102, %v755, %v1678
        %v1823 = vsel %vm1103, %v755, %v1679
        %v1824 = vsel %vm1104, %v755, %v1680
        %v1825 = vsel %vm1105, %v755, %v1681
        %v1826 = vsel %vm1106, %v755, %v1682
        %v1827 = vsel %vm1107, %v755, %v1683
        %v1828 = vsel %vm1108, %v755, %v1684
        %v1829 = vsel %vm1109, %v755, %v1685
        %v1830 = vsel %vm1110, %v755, %v1686
        %v1831 = vsel %vm1111, %v755, %v1687
        %v1832 = vsel %vm1112, %v755, %v1688
        %v1833 = vsel %vm1113, %v755, %v1689
        %v1834 = vsel %vm826, %v720, %v1690
        %v1835 = vsel %vm827, %v720, %v1691
        %v1836 = vsel %vm828, %v720, %v1692
        %v1837 = vsel %vm829, %v720, %v1693
        %v1838 = vsel %vm830, %v720, %v1694
        %v1839 = vsel %vm831, %v720, %v1695
        %v1840 = vsel %vm832, %v720, %v1696
        %v1841 = vsel %vm833, %v720, %v1697
        %v1842 = vsel %vm834, %v720, %v1698
        %v1843 = vsel %vm835, %v720, %v1699
        %v1844 = vsel %vm836, %v720, %v1700
        %v1845 = vsel %vm837, %v720, %v1701
        %v1846 = vsel %vm838, %v720, %v1702
        %v1847 = vsel %vm839, %v720, %v1703
        %v1848 = vsel %vm840, %v720, %v1704
        %v1849 = vsel %vm841, %v720, %v1705
        %v1850 = vsel %vm842, %v721, %v1706
        %v1851 = vsel %vm843, %v721, %v1707
        %v1852 = vsel %vm844, %v721, %v1708
        %v1853 = vsel %vm845, %v721, %v1709
        %v1854 = vsel %vm846, %v721, %v1710
        %v1855 = vsel %vm847, %v721, %v1711
        %v1856 = vsel %vm848, %v721, %v1712
        %v1857 = vsel %vm849, %v721, %v1713
        %v1858 = vsel %vm850, %v721, %v1714
        %v1859 = vsel %vm851, %v721, %v1715
        %v1860 = vsel %vm852, %v721, %v1716
        %v1861 = vsel %vm853, %v721, %v1717
        %v1862 = vsel %vm854, %v721, %v1718
        %v1863 = vsel %vm855, %v721, %v1719
        %v1864 = vsel %vm856, %v721, %v1720
        %v1865 = vsel %vm857, %v721, %v1721
        %v1866 = vsel %vm858, %v722, %v1722
        %v1867 = vsel %vm859, %v722, %v1723
        %v1868 = vsel %vm860, %v722, %v1724
        %v1869 = vsel %vm861, %v722, %v1725
        %v1870 = vsel %vm862, %v722, %v1726
        %v1871 = vsel %vm863, %v722, %v1727
        %v1872 = vsel %vm864, %v722, %v1728
        %v1873 = vsel %vm865, %v722, %v1729
        %v1874 = vsel %vm866, %v722, %v1730
        %v1875 = vsel %vm867, %v722, %v1731
        %v1876 = vsel %vm868, %v722, %v1732
        %v1877 = vsel %vm869, %v722, %v1733
        %v1878 = vsel %vm870, %v722, %v1734
        %v1879 = vsel %vm871, %v722, %v1735
        %v1880 = vsel %vm872, %v722, %v1736
        %v1881 = vsel %vm873, %v722, %v1737
        %v1882 = vsel %vm874, %v723, %v1738
        %v1883 = vsel %vm875, %v723, %v1739
        %v1884 = vsel %vm876, %v723, %v1740
        %v1885 = vsel %vm877, %v723, %v1741
        %v1886 = vsel %vm878, %v723, %v1742
        %v1887 = vsel %vm879, %v723, %v1743
        %v1888 = vsel %vm880, %v723, %v1744
        %v1889 = vsel %vm881, %v723, %v1745
        %v1890 = vsel %vm882, %v723, %v1746
        %v1891 = vsel %vm883, %v723, %v1747
        %v1892 = vsel %vm884, %v723, %v1748
        %v1893 = vsel %vm885, %v723, %v1749
        %v1894 = vsel %vm886, %v723, %v1750
        %v1895 = vsel %vm887, %v723, %v1751
        %v1896 = vsel %vm888, %v723, %v1752
        %v1897 = vsel %vm889, %v723, %v1753
        %v1898 = vsel %vm890, %v724, %v1754
        %v1899 = vsel %vm891, %v724, %v1755
        %v1900 = vsel %vm892, %v724, %v1756
        %v1901 = vsel %vm893, %v724, %v1757
        %v1902 = vsel %vm894, %v724, %v1758
        %v1903 = vsel %vm895, %v724, %v1759
        %v1904 = vsel %vm896, %v724, %v1760
        %v1905 = vsel %vm897, %v724, %v1761
        %v1906 = vsel %vm898, %v724, %v1762
        %v1907 = vsel %vm899, %v724, %v1763
        %v1908 = vsel %vm900, %v724, %v1764
        %v1909 = vsel %vm901, %v724, %v1765
        %v1910 = vsel %vm902, %v724, %v1766
        %v1911 = vsel %vm903, %v724, %v1767
        %v1912 = vsel %vm904, %v724, %v1768
        %v1913 = vsel %vm905, %v724, %v1769
        %v1914 = vsel %vm906, %v725, %v1770
        %v1915 = vsel %vm907, %v725, %v1771
        %v1916 = vsel %vm908, %v725, %v1772
        %v1917 = vsel %vm909, %v725, %v1773
        %v1918 = vsel %vm910, %v725, %v1774
        %v1919 = vsel %vm911, %v725, %v1775
        %v1920 = vsel %vm912, %v725, %v1776
        %v1921 = vsel %vm913, %v725, %v1777
        %v1922 = vsel %vm914, %v725, %v1778
        %v1923 = vsel %vm915, %v725, %v1779
        %v1924 = vsel %vm916, %v725, %v1780
        %v1925 = vsel %vm917, %v725, %v1781
        %v1926 = vsel %vm918, %v725, %v1782
        %v1927 = vsel %vm919, %v725, %v1783
        %v1928 = vsel %vm920, %v725, %v1784
        %v1929 = vsel %vm921, %v725, %v1785
        %v1930 = vsel %vm922, %v726, %v1786
        %v1931 = vsel %vm923, %v726, %v1787
        %v1932 = vsel %vm924, %v726, %v1788
        %v1933 = vsel %vm925, %v726, %v1789
        %v1934 = vsel %vm926, %v726, %v1790
        %v1935 = vsel %vm927, %v726, %v1791
        %v1936 = vsel %vm928, %v726, %v1792
        %v1937 = vsel %vm929, %v726, %v1793
        %v1938 = vsel %vm930, %v726, %v1794
        %v1939 = vsel %vm931, %v726, %v1795
        %v1940 = vsel %vm932, %v726, %v1796
        %v1941 = vsel %vm933, %v726, %v1797
        %v1942 = vsel %vm934, %v726, %v1798
        %v1943 = vsel %vm935, %v726, %v1799
        %v1944 = vsel %vm936, %v726, %v1800
        %v1945 = vsel %vm937, %v726, %v1801
        %v1946 = vsel %vm938, %v727, %v1802
        %v1947 = vsel %vm939, %v727, %v1803
        %v1948 = vsel %vm940, %v727, %v1804
        %v1949 = vsel %vm941, %v727, %v1805
        %v1950 = vsel %vm942, %v727, %v1806
        %v1951 = vsel %vm943, %v727, %v1807
        %v1952 = vsel %vm944, %v727, %v1808
        %v1953 = vsel %vm945, %v727, %v1809
        %v1954 = vsel %vm946, %v727, %v1810
        %v1955 = vsel %vm947, %v727, %v1811
        %v1956 = vsel %vm948, %v727, %v1812
        %v1957 = vsel %vm949, %v727, %v1813
        %v1958 = vsel %vm950, %v727, %v1814
        %v1959 = vsel %vm951, %v727, %v1815
        %v1960 = vsel %vm952, %v727, %v1816
        %v1961 = vsel %vm953, %v727, %v1817
        %v1962 = vsel %vm954, %v728, %v1818
        %v1963 = vsel %vm955, %v728, %v1819
        %v1964 = vsel %vm956, %v728, %v1820
        %v1965 = vsel %vm957, %v728, %v1821
        %v1966 = vsel %vm958, %v728, %v1822
        %v1967 = vsel %vm959, %v728, %v1823
        %v1968 = vsel %vm960, %v728, %v1824
        %v1969 = vsel %vm961, %v728, %v1825
        %v1970 = vsel %vm962, %v728, %v1826
        %v1971 = vsel %vm963, %v728, %v1827
        %v1972 = vsel %vm964, %v728, %v1828
        %v1973 = vsel %vm965, %v728, %v1829
        %v1974 = vsel %vm966, %v728, %v1830
        %v1975 = vsel %vm967, %v728, %v1831
        %v1976 = vsel %vm968, %v728, %v1832
        %v1977 = vsel %vm969, %v728, %v1833
        %v1978 = vpack.c.bf16 %v1835, %v1834
        %v1979 = vpack.c.bf16 %v1837, %v1836
        %v1980 = vpack.c.bf16 %v1839, %v1838
        %v1981 = vpack.c.bf16 %v1841, %v1840
        %v1982 = vpack.c.bf16 %v1843, %v1842
        %v1983 = vpack.c.bf16 %v1845, %v1844
        %v1984 = vpack.c.bf16 %v1847, %v1846
        %v1985 = vpack.c.bf16 %v1849, %v1848
        %v1986 = vpack.c.bf16 %v1851, %v1850
        %v1987 = vpack.c.bf16 %v1853, %v1852
        %v1988 = vpack.c.bf16 %v1855, %v1854
        %v1989 = vpack.c.bf16 %v1857, %v1856
        %v1990 = vpack.c.bf16 %v1859, %v1858
        %v1991 = vpack.c.bf16 %v1861, %v1860
        %v1992 = vpack.c.bf16 %v1863, %v1862
        %v1993 = vpack.c.bf16 %v1865, %v1864
        %v1994 = vpack.c.bf16 %v1867, %v1866
        %v1995 = vpack.c.bf16 %v1869, %v1868
        %v1996 = vpack.c.bf16 %v1871, %v1870
        %v1997 = vpack.c.bf16 %v1873, %v1872
        %v1998 = vpack.c.bf16 %v1875, %v1874
        %v1999 = vpack.c.bf16 %v1877, %v1876
        %v2000 = vpack.c.bf16 %v1879, %v1878
        %v2001 = vpack.c.bf16 %v1881, %v1880
        %v2002 = vpack.c.bf16 %v1883, %v1882
        %v2003 = vpack.c.bf16 %v1885, %v1884
        %v2004 = vpack.c.bf16 %v1887, %v1886
        %v2005 = vpack.c.bf16 %v1889, %v1888
        %v2006 = vpack.c.bf16 %v1891, %v1890
        %v2007 = vpack.c.bf16 %v1893, %v1892
        %v2008 = vpack.c.bf16 %v1895, %v1894
        %v2009 = vpack.c.bf16 %v1897, %v1896
        %v2010 = vpack.c.bf16 %v1899, %v1898
        %v2011 = vpack.c.bf16 %v1901, %v1900
        %v2012 = vpack.c.bf16 %v1903, %v1902
        %v2013 = vpack.c.bf16 %v1905, %v1904
        %v2014 = vpack.c.bf16 %v1907, %v1906
        %v2015 = vpack.c.bf16 %v1909, %v1908
        %v2016 = vpack.c.bf16 %v1911, %v1910
        %v2017 = vpack.c.bf16 %v1913, %v1912
        %v2018 = vpack.c.bf16 %v1915, %v1914
        %v2019 = vpack.c.bf16 %v1917, %v1916
        %v2020 = vpack.c.bf16 %v1919, %v1918
        %v2021 = vpack.c.bf16 %v1921, %v1920
        %v2022 = vpack.c.bf16 %v1923, %v1922
        %v2023 = vpack.c.bf16 %v1925, %v1924
        %v2024 = vpack.c.bf16 %v1927, %v1926
        %v2025 = vpack.c.bf16 %v1929, %v1928
        %v2026 = vpack.c.bf16 %v1931, %v1930
        %v2027 = vpack.c.bf16 %v1933, %v1932
        %v2028 = vpack.c.bf16 %v1935, %v1934
        %v2029 = vpack.c.bf16 %v1937, %v1936
        %v2030 = vpack.c.bf16 %v1939, %v1938
        %v2031 = vpack.c.bf16 %v1941, %v1940
        %v2032 = vpack.c.bf16 %v1943, %v1942
        %v2033 = vpack.c.bf16 %v1945, %v1944
        %v2034 = vpack.c.bf16 %v1947, %v1946
        %v2035 = vpack.c.bf16 %v1949, %v1948
        %v2036 = vpack.c.bf16 %v1951, %v1950
        %v2037 = vpack.c.bf16 %v1953, %v1952
        %v2038 = vpack.c.bf16 %v1955, %v1954
        %v2039 = vpack.c.bf16 %v1957, %v1956
        %v2040 = vpack.c.bf16 %v1959, %v1958
        %v2041 = vpack.c.bf16 %v1961, %v1960
        %v2042 = vpack.c.bf16 %v1963, %v1962
        %v2043 = vpack.c.bf16 %v1965, %v1964
        %v2044 = vpack.c.bf16 %v1967, %v1966
        %v2045 = vpack.c.bf16 %v1969, %v1968
        %v2046 = vpack.c.bf16 %v1971, %v1970
        %v2047 = vpack.c.bf16 %v1973, %v1972
        %v2048 = vpack.c.bf16 %v1975, %v1974
        %v2049 = vpack.c.bf16 %v1977, %v1976
        %v2050 = vld [vmem:[%s351] sm:$0xff]
        %v2051 = vld [vmem:[%s351 + $0x8] sm:$0xff]
        %v2052 = vld [vmem:[%s351 + $0x10] sm:$0xff]
        %v2053 = vld [vmem:[%s351 + $0x18] sm:$0xff]
        %v2054 = vld [vmem:[%s351 + $0x20] sm:$0xf]
        %v2060 = vunpack.c.l.b16 %v2050
        %v2061 = vunpack.c.h.b16 %v2050
        %v2062 = vunpack.c.l.b16 %v2051
        %v2063 = vunpack.c.h.b16 %v2051
        %v2064 = vunpack.c.l.b16 %v2052
        %v2065 = vunpack.c.h.b16 %v2052
        %v2066 = vunpack.c.l.b16 %v2053
        %v2067 = vunpack.c.h.b16 %v2053
        %v2068 = vunpack.c.l.b16 %v2054
        %v2069 = vpack.c.b16 %v2060, %v2060
        %v2070 = vpack.c.b16 %v2061, %v2061
        %v2071 = vpack.c.b16 %v2062, %v2062
        %v2072 = vpack.c.b16 %v2063, %v2063
        %v2073 = vpack.c.b16 %v2064, %v2064
        %v2074 = vpack.c.b16 %v2065, %v2065
        %v2075 = vpack.c.b16 %v2066, %v2066
        %v2076 = vpack.c.b16 %v2067, %v2067
        %v2077 = vpack.c.b16 %v2068, %v2068
        %2087 = vmatpush.bf16.msra.mxu0 %v1985
        %2088 = vmatpush.bf16.msra.mxu0 %v1984
        %2089 = vmatpush.bf16.msra.mxu0 %v1983
        %2090 = vmatpush.bf16.msra.mxu0 %v1982
        %2091 = vmatpush.bf16.msra.mxu0 %v1981
        %2092 = vmatpush.bf16.msra.mxu0 %v1980
        %2093 = vmatpush.bf16.msra.mxu0 %v1979
        %2094 = vmatpush.bf16.msra.mxu0 %v1978
        %2095 = vmatmul.bf16.gmra.mxu0 %v2069
        %v2096 = vpop.f32.mrf.mxu0
        %v2097 = vadd.f32 0.0, %v2096
        %v2098 = vpop.f32.mrf.mxu0
        %2099 = vdwg.mxu0
        %2100 = vmatpush.bf16.msra.mxu0 %v1993
        %2101 = vmatpush.bf16.msra.mxu0 %v1992
        %2102 = vmatpush.bf16.msra.mxu0 %v1991
        %2103 = vmatpush.bf16.msra.mxu0 %v1990
        %2104 = vmatpush.bf16.msra.mxu0 %v1989
        %2105 = vmatpush.bf16.msra.mxu0 %v1988
        %2106 = vmatpush.bf16.msra.mxu0 %v1987
        %2107 = vmatpush.bf16.msra.mxu0 %v1986
        %2108 = vmatmul.bf16.gmra.mxu0 %v2070
        %v2109 = vpop.f32.mrf.mxu0
        %v2110 = vadd.f32 %v2097, %v2109
        %v2111 = vpop.f32.mrf.mxu0
        %2112 = vdwg.mxu0
        %2113 = vmatpush.bf16.msra.mxu0 %v2001
        %2114 = vmatpush.bf16.msra.mxu0 %v2000
        %2115 = vmatpush.bf16.msra.mxu0 %v1999
        %2116 = vmatpush.bf16.msra.mxu0 %v1998
        %2117 = vmatpush.bf16.msra.mxu0 %v1997
        %2118 = vmatpush.bf16.msra.mxu0 %v1996
        %2119 = vmatpush.bf16.msra.mxu0 %v1995
        %2120 = vmatpush.bf16.msra.mxu0 %v1994
        %2121 = vmatmul.bf16.gmra.mxu0 %v2071
        %v2122 = vpop.f32.mrf.mxu0
        %v2123 = vadd.f32 %v2110, %v2122
        %v2124 = vpop.f32.mrf.mxu0
        %2125 = vdwg.mxu0
        %2126 = vmatpush.bf16.msra.mxu0 %v2009
        %2127 = vmatpush.bf16.msra.mxu0 %v2008
        %2128 = vmatpush.bf16.msra.mxu0 %v2007
        %2129 = vmatpush.bf16.msra.mxu0 %v2006
        %2130 = vmatpush.bf16.msra.mxu0 %v2005
        %2131 = vmatpush.bf16.msra.mxu0 %v2004
        %2132 = vmatpush.bf16.msra.mxu0 %v2003
        %2133 = vmatpush.bf16.msra.mxu0 %v2002
        %2134 = vmatmul.bf16.gmra.mxu0 %v2072
        %v2135 = vpop.f32.mrf.mxu0
        %v2136 = vadd.f32 %v2123, %v2135
        %v2137 = vpop.f32.mrf.mxu0
        %2138 = vdwg.mxu0
        %2139 = vmatpush.bf16.msra.mxu0 %v2017
        %2140 = vmatpush.bf16.msra.mxu0 %v2016
        %2141 = vmatpush.bf16.msra.mxu0 %v2015
        %2142 = vmatpush.bf16.msra.mxu0 %v2014
        %2143 = vmatpush.bf16.msra.mxu0 %v2013
        %2144 = vmatpush.bf16.msra.mxu0 %v2012
        %2145 = vmatpush.bf16.msra.mxu0 %v2011
        %2146 = vmatpush.bf16.msra.mxu0 %v2010
        %2147 = vmatmul.bf16.gmra.mxu0 %v2073
        %v2148 = vpop.f32.mrf.mxu0
        %v2149 = vadd.f32 %v2136, %v2148
        %v2150 = vpop.f32.mrf.mxu0
        %2151 = vdwg.mxu0
        %2152 = vmatpush.bf16.msra.mxu0 %v2025
        %2153 = vmatpush.bf16.msra.mxu0 %v2024
        %2154 = vmatpush.bf16.msra.mxu0 %v2023
        %2155 = vmatpush.bf16.msra.mxu0 %v2022
        %2156 = vmatpush.bf16.msra.mxu0 %v2021
        %2157 = vmatpush.bf16.msra.mxu0 %v2020
        %2158 = vmatpush.bf16.msra.mxu0 %v2019
        %2159 = vmatpush.bf16.msra.mxu0 %v2018
        %2160 = vmatmul.bf16.gmra.mxu0 %v2074
        %v2161 = vpop.f32.mrf.mxu0
        %v2162 = vadd.f32 %v2149, %v2161
        %v2163 = vpop.f32.mrf.mxu0
        %2164 = vdwg.mxu0
        %2165 = vmatpush.bf16.msra.mxu0 %v2033
        %2166 = vmatpush.bf16.msra.mxu0 %v2032
        %2167 = vmatpush.bf16.msra.mxu0 %v2031
        %2168 = vmatpush.bf16.msra.mxu0 %v2030
        %2169 = vmatpush.bf16.msra.mxu0 %v2029
        %2170 = vmatpush.bf16.msra.mxu0 %v2028
        %2171 = vmatpush.bf16.msra.mxu0 %v2027
        %2172 = vmatpush.bf16.msra.mxu0 %v2026
        %2173 = vmatmul.bf16.gmra.mxu0 %v2075
        %v2174 = vpop.f32.mrf.mxu0
        %v2175 = vadd.f32 %v2162, %v2174
        %v2176 = vpop.f32.mrf.mxu0
        %2177 = vdwg.mxu0
        %2178 = vmatpush.bf16.msra.mxu0 %v2041
        %2179 = vmatpush.bf16.msra.mxu0 %v2040
        %2180 = vmatpush.bf16.msra.mxu0 %v2039
        %2181 = vmatpush.bf16.msra.mxu0 %v2038
        %2182 = vmatpush.bf16.msra.mxu0 %v2037
        %2183 = vmatpush.bf16.msra.mxu0 %v2036
        %2184 = vmatpush.bf16.msra.mxu0 %v2035
        %2185 = vmatpush.bf16.msra.mxu0 %v2034
        %2186 = vmatmul.bf16.gmra.mxu0 %v2076
        %v2187 = vpop.f32.mrf.mxu0
        %v2188 = vadd.f32 %v2175, %v2187
        %v2189 = vpop.f32.mrf.mxu0
        %2190 = vdwg.mxu0
        %2191 = vmatpush.bf16.msra.mxu0 %v2049
        %2192 = vmatpush.bf16.msra.mxu0 %v2048
        %2193 = vmatpush.bf16.msra.mxu0 %v2047
        %2194 = vmatpush.bf16.msra.mxu0 %v2046
        %2195 = vmatpush.bf16.msra.mxu0 %v2045
        %2196 = vmatpush.bf16.msra.mxu0 %v2044
        %2197 = vmatpush.bf16.msra.mxu0 %v2043
        %2198 = vmatpush.bf16.msra.mxu0 %v2042
        %2199 = vmatmul.bf16.gmra.mxu0 %v2077
        %v2200 = vpop.f32.mrf.mxu0
        %v2201 = vadd.f32 %v2188, %v2200
        %v2202 = vpop.f32.mrf.mxu0
        %2203 = vdwg.mxu0
        %v2204 = vadd.f32 %v825, %v2201
        %v2205 = vadd.s32 %v567, 128
        %v2206 = vadd.s32 %v568, 128
        %v2207 = vadd.s32 %v569, 128
        %v2208 = vadd.s32 %v570, 128
        %v2209 = vadd.s32 %v571, 128
        %v2210 = vadd.s32 %v572, 128
        %v2211 = vadd.s32 %v573, 128
        %v2212 = vadd.s32 %v574, 128
        %v2213 = vadd.s32 %v575, 128
        %v2214 = vadd.s32 %v576, 128
        %v2215 = vadd.s32 %v577, 128
        %v2216 = vadd.s32 %v578, 128
        %v2217 = vadd.s32 %v579, 128
        %v2218 = vadd.s32 %v580, 128
        %v2219 = vadd.s32 %v581, 128
        %v2220 = vadd.s32 %v582, 128
        %v2221 = vadd.s32 %v583, 128
        %v2222 = vadd.s32 %v584, 128
        %v2223 = vadd.s32 %v585, 128
        %v2224 = vadd.s32 %v586, 128
        %v2225 = vadd.s32 %v587, 128
        %v2226 = vadd.s32 %v588, 128
        %v2227 = vadd.s32 %v589, 128
        %v2228 = vadd.s32 %v590, 128
        %v2229 = vadd.s32 %v591, 128
        %v2230 = vadd.s32 %v592, 128
        %v2231 = vadd.s32 %v593, 128
        %v2232 = vadd.s32 %v594, 128
        %v2233 = vadd.s32 %v595, 128
        %v2234 = vadd.s32 %v596, 128
        %v2235 = vadd.s32 %v597, 128
        %v2236 = vadd.s32 %v598, 128
        %v2237 = vadd.s32 %v599, 128
        %v2238 = vadd.s32 %v600, 128
        %v2239 = vadd.s32 %v601, 128
        %v2240 = vadd.s32 %v602, 128
        %v2241 = vadd.s32 %v603, 128
        %v2242 = vadd.s32 %v604, 128
        %v2243 = vadd.s32 %v605, 128
        %v2244 = vadd.s32 %v606, 128
        %v2245 = vadd.s32 %v607, 128
        %v2246 = vadd.s32 %v608, 128
        %v2247 = vadd.s32 %v609, 128
        %v2248 = vadd.s32 %v610, 128
        %v2249 = vadd.s32 %v611, 128
        %v2250 = vadd.s32 %v612, 128
        %v2251 = vadd.s32 %v613, 128
        %v2252 = vadd.s32 %v614, 128
        %v2253 = vadd.s32 %v615, 128
        %v2254 = vadd.s32 %v616, 128
        %v2255 = vadd.s32 %v617, 128
        %v2256 = vadd.s32 %v618, 128
        %v2257 = vadd.s32 %v619, 128
        %v2258 = vadd.s32 %v620, 128
        %v2259 = vadd.s32 %v621, 128
        %v2260 = vadd.s32 %v622, 128
        %v2261 = vadd.s32 %v623, 128
        %v2262 = vadd.s32 %v624, 128
        %v2263 = vadd.s32 %v625, 128
        %v2264 = vadd.s32 %v626, 128
        %v2265 = vadd.s32 %v627, 128
        %v2266 = vadd.s32 %v628, 128
        %v2267 = vadd.s32 %v629, 128
        %v2268 = vadd.s32 %v630, 128
        %v2269 = vadd.s32 %v631, 128
        %v2270 = vadd.s32 %v632, 128
        %v2271 = vadd.s32 %v633, 128
        %v2272 = vadd.s32 %v634, 128
        %v2273 = vadd.s32 %v635, 128
        %v2274 = vadd.s32 %v636, 128
        %v2275 = vadd.s32 %v637, 128
        %v2276 = vadd.s32 %v638, 128
        %v2277 = vadd.s32 %v639, 128
        %v2278 = vadd.s32 %v640, 128
        %v2279 = vadd.s32 %v641, 128
        %v2280 = vadd.s32 %v642, 128
        %v2281 = vadd.s32 %v643, 128
        %v2282 = vadd.s32 %v644, 128
        %v2283 = vadd.s32 %v645, 128
        %v2284 = vadd.s32 %v646, 128
        %v2285 = vadd.s32 %v647, 128
        %v2286 = vadd.s32 %v648, 128
        %v2287 = vadd.s32 %v649, 128
        %v2288 = vadd.s32 %v650, 128
        %v2289 = vadd.s32 %v651, 128
        %v2290 = vadd.s32 %v652, 128
        %v2291 = vadd.s32 %v653, 128
        %v2292 = vadd.s32 %v654, 128
        %v2293 = vadd.s32 %v655, 128
        %v2294 = vadd.s32 %v656, 128
        %v2295 = vadd.s32 %v657, 128
        %v2296 = vadd.s32 %v658, 128
        %v2297 = vadd.s32 %v659, 128
        %v2298 = vadd.s32 %v660, 128
        %v2299 = vadd.s32 %v661, 128
        %v2300 = vadd.s32 %v662, 128
        %v2301 = vadd.s32 %v663, 128
        %v2302 = vadd.s32 %v664, 128
        %v2303 = vadd.s32 %v665, 128
        %v2304 = vadd.s32 %v666, 128
        %v2305 = vadd.s32 %v667, 128
        %v2306 = vadd.s32 %v668, 128
        %v2307 = vadd.s32 %v669, 128
        %v2308 = vadd.s32 %v670, 128
        %v2309 = vadd.s32 %v671, 128
        %v2310 = vadd.s32 %v672, 128
        %v2311 = vadd.s32 %v673, 128
        %v2312 = vadd.s32 %v674, 128
        %v2313 = vadd.s32 %v675, 128
        %v2314 = vadd.s32 %v676, 128
        %v2315 = vadd.s32 %v677, 128
        %v2316 = vadd.s32 %v678, 128
        %v2317 = vadd.s32 %v679, 128
        %v2318 = vadd.s32 %v680, 128
        %v2319 = vadd.s32 %v681, 128
        %v2320 = vadd.s32 %v682, 128
        %v2321 = vadd.s32 %v683, 128
        %v2322 = vadd.s32 %v684, 128
        %v2323 = vadd.s32 %v685, 128
        %v2324 = vadd.s32 %v686, 128
        %v2325 = vadd.s32 %v687, 128
        %v2326 = vadd.s32 %v688, 128
        %v2327 = vadd.s32 %v689, 128
        %v2328 = vadd.s32 %v690, 128
        %v2329 = vadd.s32 %v691, 128
        %v2330 = vadd.s32 %v692, 128
        %v2331 = vadd.s32 %v693, 128
        %v2332 = vadd.s32 %v694, 128
        %v2333 = vadd.s32 %v695, 128
        %v2334 = vadd.s32 %v696, 128
        %v2335 = vadd.s32 %v697, 128
        %v2336 = vadd.s32 %v698, 128
        %v2337 = vadd.s32 %v699, 128
        %v2338 = vadd.s32 %v700, 128
        %v2339 = vadd.s32 %v701, 128
        %v2340 = vadd.s32 %v702, 128
        %v2341 = vadd.s32 %v703, 128
        %v2342 = vadd.s32 %v704, 128
        %v2343 = vadd.s32 %v705, 128
        %v2344 = vadd.s32 %v706, 128
        %v2345 = vadd.s32 %v707, 128
        %v2346 = vadd.s32 %v708, 128
        %v2347 = vadd.s32 %v709, 128
        %v2348 = vadd.s32 %v710, 128
        %vm2349 = vcmp.eq.s32.totalorder %v2205, 0
        %vm2350 = vcmp.eq.s32.totalorder %v2206, 0
        %vm2351 = vcmp.eq.s32.totalorder %v2207, 0
        %vm2352 = vcmp.eq.s32.totalorder %v2208, 0
        %vm2353 = vcmp.eq.s32.totalorder %v2209, 0
        %vm2354 = vcmp.eq.s32.totalorder %v2210, 0
        %vm2355 = vcmp.eq.s32.totalorder %v2211, 0
        %vm2356 = vcmp.eq.s32.totalorder %v2212, 0
        %vm2357 = vcmp.eq.s32.totalorder %v2213, 0
        %vm2358 = vcmp.eq.s32.totalorder %v2214, 0
        %vm2359 = vcmp.eq.s32.totalorder %v2215, 0
        %vm2360 = vcmp.eq.s32.totalorder %v2216, 0
        %vm2361 = vcmp.eq.s32.totalorder %v2217, 0
        %vm2362 = vcmp.eq.s32.totalorder %v2218, 0
        %vm2363 = vcmp.eq.s32.totalorder %v2219, 0
        %vm2364 = vcmp.eq.s32.totalorder %v2220, 0
        %vm2365 = vcmp.eq.s32.totalorder %v2221, 0
        %vm2366 = vcmp.eq.s32.totalorder %v2222, 0
        %vm2367 = vcmp.eq.s32.totalorder %v2223, 0
        %vm2368 = vcmp.eq.s32.totalorder %v2224, 0
        %vm2369 = vcmp.eq.s32.totalorder %v2225, 0
        %vm2370 = vcmp.eq.s32.totalorder %v2226, 0
        %vm2371 = vcmp.eq.s32.totalorder %v2227, 0
        %vm2372 = vcmp.eq.s32.totalorder %v2228, 0
        %vm2373 = vcmp.eq.s32.totalorder %v2229, 0
        %vm2374 = vcmp.eq.s32.totalorder %v2230, 0
        %vm2375 = vcmp.eq.s32.totalorder %v2231, 0
        %vm2376 = vcmp.eq.s32.totalorder %v2232, 0
        %vm2377 = vcmp.eq.s32.totalorder %v2233, 0
        %vm2378 = vcmp.eq.s32.totalorder %v2234, 0
        %vm2379 = vcmp.eq.s32.totalorder %v2235, 0
        %vm2380 = vcmp.eq.s32.totalorder %v2236, 0
        %vm2381 = vcmp.eq.s32.totalorder %v2237, 0
        %vm2382 = vcmp.eq.s32.totalorder %v2238, 0
        %vm2383 = vcmp.eq.s32.totalorder %v2239, 0
        %vm2384 = vcmp.eq.s32.totalorder %v2240, 0
        %vm2385 = vcmp.eq.s32.totalorder %v2241, 0
        %vm2386 = vcmp.eq.s32.totalorder %v2242, 0
        %vm2387 = vcmp.eq.s32.totalorder %v2243, 0
        %vm2388 = vcmp.eq.s32.totalorder %v2244, 0
        %vm2389 = vcmp.eq.s32.totalorder %v2245, 0
        %vm2390 = vcmp.eq.s32.totalorder %v2246, 0
        %vm2391 = vcmp.eq.s32.totalorder %v2247, 0
        %vm2392 = vcmp.eq.s32.totalorder %v2248, 0
        %vm2393 = vcmp.eq.s32.totalorder %v2249, 0
        %vm2394 = vcmp.eq.s32.totalorder %v2250, 0
        %vm2395 = vcmp.eq.s32.totalorder %v2251, 0
        %vm2396 = vcmp.eq.s32.totalorder %v2252, 0
        %vm2397 = vcmp.eq.s32.totalorder %v2253, 0
        %vm2398 = vcmp.eq.s32.totalorder %v2254, 0
        %vm2399 = vcmp.eq.s32.totalorder %v2255, 0
        %vm2400 = vcmp.eq.s32.totalorder %v2256, 0
        %vm2401 = vcmp.eq.s32.totalorder %v2257, 0
        %vm2402 = vcmp.eq.s32.totalorder %v2258, 0
        %vm2403 = vcmp.eq.s32.totalorder %v2259, 0
        %vm2404 = vcmp.eq.s32.totalorder %v2260, 0
        %vm2405 = vcmp.eq.s32.totalorder %v2261, 0
        %vm2406 = vcmp.eq.s32.totalorder %v2262, 0
        %vm2407 = vcmp.eq.s32.totalorder %v2263, 0
        %vm2408 = vcmp.eq.s32.totalorder %v2264, 0
        %vm2409 = vcmp.eq.s32.totalorder %v2265, 0
        %vm2410 = vcmp.eq.s32.totalorder %v2266, 0
        %vm2411 = vcmp.eq.s32.totalorder %v2267, 0
        %vm2412 = vcmp.eq.s32.totalorder %v2268, 0
        %vm2413 = vcmp.eq.s32.totalorder %v2269, 0
        %vm2414 = vcmp.eq.s32.totalorder %v2270, 0
        %vm2415 = vcmp.eq.s32.totalorder %v2271, 0
        %vm2416 = vcmp.eq.s32.totalorder %v2272, 0
        %vm2417 = vcmp.eq.s32.totalorder %v2273, 0
        %vm2418 = vcmp.eq.s32.totalorder %v2274, 0
        %vm2419 = vcmp.eq.s32.totalorder %v2275, 0
        %vm2420 = vcmp.eq.s32.totalorder %v2276, 0
        %vm2421 = vcmp.eq.s32.totalorder %v2277, 0
        %vm2422 = vcmp.eq.s32.totalorder %v2278, 0
        %vm2423 = vcmp.eq.s32.totalorder %v2279, 0
        %vm2424 = vcmp.eq.s32.totalorder %v2280, 0
        %vm2425 = vcmp.eq.s32.totalorder %v2281, 0
        %vm2426 = vcmp.eq.s32.totalorder %v2282, 0
        %vm2427 = vcmp.eq.s32.totalorder %v2283, 0
        %vm2428 = vcmp.eq.s32.totalorder %v2284, 0
        %vm2429 = vcmp.eq.s32.totalorder %v2285, 0
        %vm2430 = vcmp.eq.s32.totalorder %v2286, 0
        %vm2431 = vcmp.eq.s32.totalorder %v2287, 0
        %vm2432 = vcmp.eq.s32.totalorder %v2288, 0
        %vm2433 = vcmp.eq.s32.totalorder %v2289, 0
        %vm2434 = vcmp.eq.s32.totalorder %v2290, 0
        %vm2435 = vcmp.eq.s32.totalorder %v2291, 0
        %vm2436 = vcmp.eq.s32.totalorder %v2292, 0
        %vm2437 = vcmp.eq.s32.totalorder %v2293, 0
        %vm2438 = vcmp.eq.s32.totalorder %v2294, 0
        %vm2439 = vcmp.eq.s32.totalorder %v2295, 0
        %vm2440 = vcmp.eq.s32.totalorder %v2296, 0
        %vm2441 = vcmp.eq.s32.totalorder %v2297, 0
        %vm2442 = vcmp.eq.s32.totalorder %v2298, 0
        %vm2443 = vcmp.eq.s32.totalorder %v2299, 0
        %vm2444 = vcmp.eq.s32.totalorder %v2300, 0
        %vm2445 = vcmp.eq.s32.totalorder %v2301, 0
        %vm2446 = vcmp.eq.s32.totalorder %v2302, 0
        %vm2447 = vcmp.eq.s32.totalorder %v2303, 0
        %vm2448 = vcmp.eq.s32.totalorder %v2304, 0
        %vm2449 = vcmp.eq.s32.totalorder %v2305, 0
        %vm2450 = vcmp.eq.s32.totalorder %v2306, 0
        %vm2451 = vcmp.eq.s32.totalorder %v2307, 0
        %vm2452 = vcmp.eq.s32.totalorder %v2308, 0
        %vm2453 = vcmp.eq.s32.totalorder %v2309, 0
        %vm2454 = vcmp.eq.s32.totalorder %v2310, 0
        %vm2455 = vcmp.eq.s32.totalorder %v2311, 0
        %vm2456 = vcmp.eq.s32.totalorder %v2312, 0
        %vm2457 = vcmp.eq.s32.totalorder %v2313, 0
        %vm2458 = vcmp.eq.s32.totalorder %v2314, 0
        %vm2459 = vcmp.eq.s32.totalorder %v2315, 0
        %vm2460 = vcmp.eq.s32.totalorder %v2316, 0
        %vm2461 = vcmp.eq.s32.totalorder %v2317, 0
        %vm2462 = vcmp.eq.s32.totalorder %v2318, 0
        %vm2463 = vcmp.eq.s32.totalorder %v2319, 0
        %vm2464 = vcmp.eq.s32.totalorder %v2320, 0
        %vm2465 = vcmp.eq.s32.totalorder %v2321, 0
        %vm2466 = vcmp.eq.s32.totalorder %v2322, 0
        %vm2467 = vcmp.eq.s32.totalorder %v2323, 0
        %vm2468 = vcmp.eq.s32.totalorder %v2324, 0
        %vm2469 = vcmp.eq.s32.totalorder %v2325, 0
        %vm2470 = vcmp.eq.s32.totalorder %v2326, 0
        %vm2471 = vcmp.eq.s32.totalorder %v2327, 0
        %vm2472 = vcmp.eq.s32.totalorder %v2328, 0
        %vm2473 = vcmp.eq.s32.totalorder %v2329, 0
        %vm2474 = vcmp.eq.s32.totalorder %v2330, 0
        %vm2475 = vcmp.eq.s32.totalorder %v2331, 0
        %vm2476 = vcmp.eq.s32.totalorder %v2332, 0
        %vm2477 = vcmp.eq.s32.totalorder %v2333, 0
        %vm2478 = vcmp.eq.s32.totalorder %v2334, 0
        %vm2479 = vcmp.eq.s32.totalorder %v2335, 0
        %vm2480 = vcmp.eq.s32.totalorder %v2336, 0
        %vm2481 = vcmp.eq.s32.totalorder %v2337, 0
        %vm2482 = vcmp.eq.s32.totalorder %v2338, 0
        %vm2483 = vcmp.eq.s32.totalorder %v2339, 0
        %vm2484 = vcmp.eq.s32.totalorder %v2340, 0
        %vm2485 = vcmp.eq.s32.totalorder %v2341, 0
        %vm2486 = vcmp.eq.s32.totalorder %v2342, 0
        %vm2487 = vcmp.eq.s32.totalorder %v2343, 0
        %vm2488 = vcmp.eq.s32.totalorder %v2344, 0
        %vm2489 = vcmp.eq.s32.totalorder %v2345, 0
        %vm2490 = vcmp.eq.s32.totalorder %v2346, 0
        %vm2491 = vcmp.eq.s32.totalorder %v2347, 0
        %vm2492 = vcmp.eq.s32.totalorder %v2348, 0
        %vm2493 = vcmp.eq.s32.totalorder %v2205, 1
        %vm2494 = vcmp.eq.s32.totalorder %v2206, 1
        %vm2495 = vcmp.eq.s32.totalorder %v2207, 1
        %vm2496 = vcmp.eq.s32.totalorder %v2208, 1
        %vm2497 = vcmp.eq.s32.totalorder %v2209, 1
        %vm2498 = vcmp.eq.s32.totalorder %v2210, 1
        %vm2499 = vcmp.eq.s32.totalorder %v2211, 1
        %vm2500 = vcmp.eq.s32.totalorder %v2212, 1
        %vm2501 = vcmp.eq.s32.totalorder %v2213, 1
        %vm2502 = vcmp.eq.s32.totalorder %v2214, 1
        %vm2503 = vcmp.eq.s32.totalorder %v2215, 1
        %vm2504 = vcmp.eq.s32.totalorder %v2216, 1
        %vm2505 = vcmp.eq.s32.totalorder %v2217, 1
        %vm2506 = vcmp.eq.s32.totalorder %v2218, 1
        %vm2507 = vcmp.eq.s32.totalorder %v2219, 1
        %vm2508 = vcmp.eq.s32.totalorder %v2220, 1
        %vm2509 = vcmp.eq.s32.totalorder %v2221, 1
        %vm2510 = vcmp.eq.s32.totalorder %v2222, 1
        %vm2511 = vcmp.eq.s32.totalorder %v2223, 1
        %vm2512 = vcmp.eq.s32.totalorder %v2224, 1
        %vm2513 = vcmp.eq.s32.totalorder %v2225, 1
        %vm2514 = vcmp.eq.s32.totalorder %v2226, 1
        %vm2515 = vcmp.eq.s32.totalorder %v2227, 1
        %vm2516 = vcmp.eq.s32.totalorder %v2228, 1
        %vm2517 = vcmp.eq.s32.totalorder %v2229, 1
        %vm2518 = vcmp.eq.s32.totalorder %v2230, 1
        %vm2519 = vcmp.eq.s32.totalorder %v2231, 1
        %vm2520 = vcmp.eq.s32.totalorder %v2232, 1
        %vm2521 = vcmp.eq.s32.totalorder %v2233, 1
        %vm2522 = vcmp.eq.s32.totalorder %v2234, 1
        %vm2523 = vcmp.eq.s32.totalorder %v2235, 1
        %vm2524 = vcmp.eq.s32.totalorder %v2236, 1
        %vm2525 = vcmp.eq.s32.totalorder %v2237, 1
        %vm2526 = vcmp.eq.s32.totalorder %v2238, 1
        %vm2527 = vcmp.eq.s32.totalorder %v2239, 1
        %vm2528 = vcmp.eq.s32.totalorder %v2240, 1
        %vm2529 = vcmp.eq.s32.totalorder %v2241, 1
        %vm2530 = vcmp.eq.s32.totalorder %v2242, 1
        %vm2531 = vcmp.eq.s32.totalorder %v2243, 1
        %vm2532 = vcmp.eq.s32.totalorder %v2244, 1
        %vm2533 = vcmp.eq.s32.totalorder %v2245, 1
        %vm2534 = vcmp.eq.s32.totalorder %v2246, 1
        %vm2535 = vcmp.eq.s32.totalorder %v2247, 1
        %vm2536 = vcmp.eq.s32.totalorder %v2248, 1
        %vm2537 = vcmp.eq.s32.totalorder %v2249, 1
        %vm2538 = vcmp.eq.s32.totalorder %v2250, 1
        %vm2539 = vcmp.eq.s32.totalorder %v2251, 1
        %vm2540 = vcmp.eq.s32.totalorder %v2252, 1
        %vm2541 = vcmp.eq.s32.totalorder %v2253, 1
        %vm2542 = vcmp.eq.s32.totalorder %v2254, 1
        %vm2543 = vcmp.eq.s32.totalorder %v2255, 1
        %vm2544 = vcmp.eq.s32.totalorder %v2256, 1
        %vm2545 = vcmp.eq.s32.totalorder %v2257, 1
        %vm2546 = vcmp.eq.s32.totalorder %v2258, 1
        %vm2547 = vcmp.eq.s32.totalorder %v2259, 1
        %vm2548 = vcmp.eq.s32.totalorder %v2260, 1
        %vm2549 = vcmp.eq.s32.totalorder %v2261, 1
        %vm2550 = vcmp.eq.s32.totalorder %v2262, 1
        %vm2551 = vcmp.eq.s32.totalorder %v2263, 1
        %vm2552 = vcmp.eq.s32.totalorder %v2264, 1
        %vm2553 = vcmp.eq.s32.totalorder %v2265, 1
        %vm2554 = vcmp.eq.s32.totalorder %v2266, 1
        %vm2555 = vcmp.eq.s32.totalorder %v2267, 1
        %vm2556 = vcmp.eq.s32.totalorder %v2268, 1
        %vm2557 = vcmp.eq.s32.totalorder %v2269, 1
        %vm2558 = vcmp.eq.s32.totalorder %v2270, 1
        %vm2559 = vcmp.eq.s32.totalorder %v2271, 1
        %vm2560 = vcmp.eq.s32.totalorder %v2272, 1
        %vm2561 = vcmp.eq.s32.totalorder %v2273, 1
        %vm2562 = vcmp.eq.s32.totalorder %v2274, 1
        %vm2563 = vcmp.eq.s32.totalorder %v2275, 1
        %vm2564 = vcmp.eq.s32.totalorder %v2276, 1
        %vm2565 = vcmp.eq.s32.totalorder %v2277, 1
        %vm2566 = vcmp.eq.s32.totalorder %v2278, 1
        %vm2567 = vcmp.eq.s32.totalorder %v2279, 1
        %vm2568 = vcmp.eq.s32.totalorder %v2280, 1
        %vm2569 = vcmp.eq.s32.totalorder %v2281, 1
        %vm2570 = vcmp.eq.s32.totalorder %v2282, 1
        %vm2571 = vcmp.eq.s32.totalorder %v2283, 1
        %vm2572 = vcmp.eq.s32.totalorder %v2284, 1
        %vm2573 = vcmp.eq.s32.totalorder %v2285, 1
        %vm2574 = vcmp.eq.s32.totalorder %v2286, 1
        %vm2575 = vcmp.eq.s32.totalorder %v2287, 1
        %vm2576 = vcmp.eq.s32.totalorder %v2288, 1
        %vm2577 = vcmp.eq.s32.totalorder %v2289, 1
        %vm2578 = vcmp.eq.s32.totalorder %v2290, 1
        %vm2579 = vcmp.eq.s32.totalorder %v2291, 1
        %vm2580 = vcmp.eq.s32.totalorder %v2292, 1
        %vm2581 = vcmp.eq.s32.totalorder %v2293, 1
        %vm2582 = vcmp.eq.s32.totalorder %v2294, 1
        %vm2583 = vcmp.eq.s32.totalorder %v2295, 1
        %vm2584 = vcmp.eq.s32.totalorder %v2296, 1
        %vm2585 = vcmp.eq.s32.totalorder %v2297, 1
        %vm2586 = vcmp.eq.s32.totalorder %v2298, 1
        %vm2587 = vcmp.eq.s32.totalorder %v2299, 1
        %vm2588 = vcmp.eq.s32.totalorder %v2300, 1
        %vm2589 = vcmp.eq.s32.totalorder %v2301, 1
        %vm2590 = vcmp.eq.s32.totalorder %v2302, 1
        %vm2591 = vcmp.eq.s32.totalorder %v2303, 1
        %vm2592 = vcmp.eq.s32.totalorder %v2304, 1
        %vm2593 = vcmp.eq.s32.totalorder %v2305, 1
        %vm2594 = vcmp.eq.s32.totalorder %v2306, 1
        %vm2595 = vcmp.eq.s32.totalorder %v2307, 1
        %vm2596 = vcmp.eq.s32.totalorder %v2308, 1
        %vm2597 = vcmp.eq.s32.totalorder %v2309, 1
        %vm2598 = vcmp.eq.s32.totalorder %v2310, 1
        %vm2599 = vcmp.eq.s32.totalorder %v2311, 1
        %vm2600 = vcmp.eq.s32.totalorder %v2312, 1
        %vm2601 = vcmp.eq.s32.totalorder %v2313, 1
        %vm2602 = vcmp.eq.s32.totalorder %v2314, 1
        %vm2603 = vcmp.eq.s32.totalorder %v2315, 1
        %vm2604 = vcmp.eq.s32.totalorder %v2316, 1
        %vm2605 = vcmp.eq.s32.totalorder %v2317, 1
        %vm2606 = vcmp.eq.s32.totalorder %v2318, 1
        %vm2607 = vcmp.eq.s32.totalorder %v2319, 1
        %vm2608 = vcmp.eq.s32.totalorder %v2320, 1
        %vm2609 = vcmp.eq.s32.totalorder %v2321, 1
        %vm2610 = vcmp.eq.s32.totalorder %v2322, 1
        %vm2611 = vcmp.eq.s32.totalorder %v2323, 1
        %vm2612 = vcmp.eq.s32.totalorder %v2324, 1
        %vm2613 = vcmp.eq.s32.totalorder %v2325, 1
        %vm2614 = vcmp.eq.s32.totalorder %v2326, 1
        %vm2615 = vcmp.eq.s32.totalorder %v2327, 1
        %vm2616 = vcmp.eq.s32.totalorder %v2328, 1
        %vm2617 = vcmp.eq.s32.totalorder %v2329, 1
        %vm2618 = vcmp.eq.s32.totalorder %v2330, 1
        %vm2619 = vcmp.eq.s32.totalorder %v2331, 1
        %vm2620 = vcmp.eq.s32.totalorder %v2332, 1
        %vm2621 = vcmp.eq.s32.totalorder %v2333, 1
        %vm2622 = vcmp.eq.s32.totalorder %v2334, 1
        %vm2623 = vcmp.eq.s32.totalorder %v2335, 1
        %vm2624 = vcmp.eq.s32.totalorder %v2336, 1
        %vm2625 = vcmp.eq.s32.totalorder %v2337, 1
        %vm2626 = vcmp.eq.s32.totalorder %v2338, 1
        %vm2627 = vcmp.eq.s32.totalorder %v2339, 1
        %vm2628 = vcmp.eq.s32.totalorder %v2340, 1
        %vm2629 = vcmp.eq.s32.totalorder %v2341, 1
        %vm2630 = vcmp.eq.s32.totalorder %v2342, 1
        %vm2631 = vcmp.eq.s32.totalorder %v2343, 1
        %vm2632 = vcmp.eq.s32.totalorder %v2344, 1
        %vm2633 = vcmp.eq.s32.totalorder %v2345, 1
        %vm2634 = vcmp.eq.s32.totalorder %v2346, 1
        %vm2635 = vcmp.eq.s32.totalorder %v2347, 1
        %vm2636 = vcmp.eq.s32.totalorder %v2348, 1
        %vm2637 = vcmp.eq.s32.totalorder %v2205, 16
        %vm2638 = vcmp.eq.s32.totalorder %v2206, 16
        %vm2639 = vcmp.eq.s32.totalorder %v2207, 16
        %vm2640 = vcmp.eq.s32.totalorder %v2208, 16
        %vm2641 = vcmp.eq.s32.totalorder %v2209, 16
        %vm2642 = vcmp.eq.s32.totalorder %v2210, 16
        %vm2643 = vcmp.eq.s32.totalorder %v2211, 16
        %vm2644 = vcmp.eq.s32.totalorder %v2212, 16
        %vm2645 = vcmp.eq.s32.totalorder %v2213, 16
        %vm2646 = vcmp.eq.s32.totalorder %v2214, 16
        %vm2647 = vcmp.eq.s32.totalorder %v2215, 16
        %vm2648 = vcmp.eq.s32.totalorder %v2216, 16
        %vm2649 = vcmp.eq.s32.totalorder %v2217, 16
        %vm2650 = vcmp.eq.s32.totalorder %v2218, 16
        %vm2651 = vcmp.eq.s32.totalorder %v2219, 16
        %vm2652 = vcmp.eq.s32.totalorder %v2220, 16
        %vm2653 = vcmp.eq.s32.totalorder %v2221, 16
        %vm2654 = vcmp.eq.s32.totalorder %v2222, 16
        %vm2655 = vcmp.eq.s32.totalorder %v2223, 16
        %vm2656 = vcmp.eq.s32.totalorder %v2224, 16
        %vm2657 = vcmp.eq.s32.totalorder %v2225, 16
        %vm2658 = vcmp.eq.s32.totalorder %v2226, 16
        %vm2659 = vcmp.eq.s32.totalorder %v2227, 16
        %vm2660 = vcmp.eq.s32.totalorder %v2228, 16
        %vm2661 = vcmp.eq.s32.totalorder %v2229, 16
        %vm2662 = vcmp.eq.s32.totalorder %v2230, 16
        %vm2663 = vcmp.eq.s32.totalorder %v2231, 16
        %vm2664 = vcmp.eq.s32.totalorder %v2232, 16
        %vm2665 = vcmp.eq.s32.totalorder %v2233, 16
        %vm2666 = vcmp.eq.s32.totalorder %v2234, 16
        %vm2667 = vcmp.eq.s32.totalorder %v2235, 16
        %vm2668 = vcmp.eq.s32.totalorder %v2236, 16
        %vm2669 = vcmp.eq.s32.totalorder %v2237, 16
        %vm2670 = vcmp.eq.s32.totalorder %v2238, 16
        %vm2671 = vcmp.eq.s32.totalorder %v2239, 16
        %vm2672 = vcmp.eq.s32.totalorder %v2240, 16
        %vm2673 = vcmp.eq.s32.totalorder %v2241, 16
        %vm2674 = vcmp.eq.s32.totalorder %v2242, 16
        %vm2675 = vcmp.eq.s32.totalorder %v2243, 16
        %vm2676 = vcmp.eq.s32.totalorder %v2244, 16
        %vm2677 = vcmp.eq.s32.totalorder %v2245, 16
        %vm2678 = vcmp.eq.s32.totalorder %v2246, 16
        %vm2679 = vcmp.eq.s32.totalorder %v2247, 16
        %vm2680 = vcmp.eq.s32.totalorder %v2248, 16
        %vm2681 = vcmp.eq.s32.totalorder %v2249, 16
        %vm2682 = vcmp.eq.s32.totalorder %v2250, 16
        %vm2683 = vcmp.eq.s32.totalorder %v2251, 16
        %vm2684 = vcmp.eq.s32.totalorder %v2252, 16
        %vm2685 = vcmp.eq.s32.totalorder %v2253, 16
        %vm2686 = vcmp.eq.s32.totalorder %v2254, 16
        %vm2687 = vcmp.eq.s32.totalorder %v2255, 16
        %vm2688 = vcmp.eq.s32.totalorder %v2256, 16
        %vm2689 = vcmp.eq.s32.totalorder %v2257, 16
        %vm2690 = vcmp.eq.s32.totalorder %v2258, 16
        %vm2691 = vcmp.eq.s32.totalorder %v2259, 16
        %vm2692 = vcmp.eq.s32.totalorder %v2260, 16
        %vm2693 = vcmp.eq.s32.totalorder %v2261, 16
        %vm2694 = vcmp.eq.s32.totalorder %v2262, 16
        %vm2695 = vcmp.eq.s32.totalorder %v2263, 16
        %vm2696 = vcmp.eq.s32.totalorder %v2264, 16
        %vm2697 = vcmp.eq.s32.totalorder %v2265, 16
        %vm2698 = vcmp.eq.s32.totalorder %v2266, 16
        %vm2699 = vcmp.eq.s32.totalorder %v2267, 16
        %vm2700 = vcmp.eq.s32.totalorder %v2268, 16
        %vm2701 = vcmp.eq.s32.totalorder %v2269, 16
        %vm2702 = vcmp.eq.s32.totalorder %v2270, 16
        %vm2703 = vcmp.eq.s32.totalorder %v2271, 16
        %vm2704 = vcmp.eq.s32.totalorder %v2272, 16
        %vm2705 = vcmp.eq.s32.totalorder %v2273, 16
        %vm2706 = vcmp.eq.s32.totalorder %v2274, 16
        %vm2707 = vcmp.eq.s32.totalorder %v2275, 16
        %vm2708 = vcmp.eq.s32.totalorder %v2276, 16
        %vm2709 = vcmp.eq.s32.totalorder %v2277, 16
        %vm2710 = vcmp.eq.s32.totalorder %v2278, 16
        %vm2711 = vcmp.eq.s32.totalorder %v2279, 16
        %vm2712 = vcmp.eq.s32.totalorder %v2280, 16
        %vm2713 = vcmp.eq.s32.totalorder %v2281, 16
        %vm2714 = vcmp.eq.s32.totalorder %v2282, 16
        %vm2715 = vcmp.eq.s32.totalorder %v2283, 16
        %vm2716 = vcmp.eq.s32.totalorder %v2284, 16
        %vm2717 = vcmp.eq.s32.totalorder %v2285, 16
        %vm2718 = vcmp.eq.s32.totalorder %v2286, 16
        %vm2719 = vcmp.eq.s32.totalorder %v2287, 16
        %vm2720 = vcmp.eq.s32.totalorder %v2288, 16
        %vm2721 = vcmp.eq.s32.totalorder %v2289, 16
        %vm2722 = vcmp.eq.s32.totalorder %v2290, 16
        %vm2723 = vcmp.eq.s32.totalorder %v2291, 16
        %vm2724 = vcmp.eq.s32.totalorder %v2292, 16
        %vm2725 = vcmp.eq.s32.totalorder %v2293, 16
        %vm2726 = vcmp.eq.s32.totalorder %v2294, 16
        %vm2727 = vcmp.eq.s32.totalorder %v2295, 16
        %vm2728 = vcmp.eq.s32.totalorder %v2296, 16
        %vm2729 = vcmp.eq.s32.totalorder %v2297, 16
        %vm2730 = vcmp.eq.s32.totalorder %v2298, 16
        %vm2731 = vcmp.eq.s32.totalorder %v2299, 16
        %vm2732 = vcmp.eq.s32.totalorder %v2300, 16
        %vm2733 = vcmp.eq.s32.totalorder %v2301, 16
        %vm2734 = vcmp.eq.s32.totalorder %v2302, 16
        %vm2735 = vcmp.eq.s32.totalorder %v2303, 16
        %vm2736 = vcmp.eq.s32.totalorder %v2304, 16
        %vm2737 = vcmp.eq.s32.totalorder %v2305, 16
        %vm2738 = vcmp.eq.s32.totalorder %v2306, 16
        %vm2739 = vcmp.eq.s32.totalorder %v2307, 16
        %vm2740 = vcmp.eq.s32.totalorder %v2308, 16
        %vm2741 = vcmp.eq.s32.totalorder %v2309, 16
        %vm2742 = vcmp.eq.s32.totalorder %v2310, 16
        %vm2743 = vcmp.eq.s32.totalorder %v2311, 16
        %vm2744 = vcmp.eq.s32.totalorder %v2312, 16
        %vm2745 = vcmp.eq.s32.totalorder %v2313, 16
        %vm2746 = vcmp.eq.s32.totalorder %v2314, 16
        %vm2747 = vcmp.eq.s32.totalorder %v2315, 16
        %vm2748 = vcmp.eq.s32.totalorder %v2316, 16
        %vm2749 = vcmp.eq.s32.totalorder %v2317, 16
        %vm2750 = vcmp.eq.s32.totalorder %v2318, 16
        %vm2751 = vcmp.eq.s32.totalorder %v2319, 16
        %vm2752 = vcmp.eq.s32.totalorder %v2320, 16
        %vm2753 = vcmp.eq.s32.totalorder %v2321, 16
        %vm2754 = vcmp.eq.s32.totalorder %v2322, 16
        %vm2755 = vcmp.eq.s32.totalorder %v2323, 16
        %vm2756 = vcmp.eq.s32.totalorder %v2324, 16
        %vm2757 = vcmp.eq.s32.totalorder %v2325, 16
        %vm2758 = vcmp.eq.s32.totalorder %v2326, 16
        %vm2759 = vcmp.eq.s32.totalorder %v2327, 16
        %vm2760 = vcmp.eq.s32.totalorder %v2328, 16
        %vm2761 = vcmp.eq.s32.totalorder %v2329, 16
        %vm2762 = vcmp.eq.s32.totalorder %v2330, 16
        %vm2763 = vcmp.eq.s32.totalorder %v2331, 16
        %vm2764 = vcmp.eq.s32.totalorder %v2332, 16
        %vm2765 = vcmp.eq.s32.totalorder %v2333, 16
        %vm2766 = vcmp.eq.s32.totalorder %v2334, 16
        %vm2767 = vcmp.eq.s32.totalorder %v2335, 16
        %vm2768 = vcmp.eq.s32.totalorder %v2336, 16
        %vm2769 = vcmp.eq.s32.totalorder %v2337, 16
        %vm2770 = vcmp.eq.s32.totalorder %v2338, 16
        %vm2771 = vcmp.eq.s32.totalorder %v2339, 16
        %vm2772 = vcmp.eq.s32.totalorder %v2340, 16
        %vm2773 = vcmp.eq.s32.totalorder %v2341, 16
        %vm2774 = vcmp.eq.s32.totalorder %v2342, 16
        %vm2775 = vcmp.eq.s32.totalorder %v2343, 16
        %vm2776 = vcmp.eq.s32.totalorder %v2344, 16
        %vm2777 = vcmp.eq.s32.totalorder %v2345, 16
        %vm2778 = vcmp.eq.s32.totalorder %v2346, 16
        %vm2779 = vcmp.eq.s32.totalorder %v2347, 16
        %vm2780 = vcmp.eq.s32.totalorder %v2348, 16
        %vm2781 = vcmp.eq.s32.totalorder %v2205, 17
        %vm2782 = vcmp.eq.s32.totalorder %v2206, 17
        %vm2783 = vcmp.eq.s32.totalorder %v2207, 17
        %vm2784 = vcmp.eq.s32.totalorder %v2208, 17
        %vm2785 = vcmp.eq.s32.totalorder %v2209, 17
        %vm2786 = vcmp.eq.s32.totalorder %v2210, 17
        %vm2787 = vcmp.eq.s32.totalorder %v2211, 17
        %vm2788 = vcmp.eq.s32.totalorder %v2212, 17
        %vm2789 = vcmp.eq.s32.totalorder %v2213, 17
        %vm2790 = vcmp.eq.s32.totalorder %v2214, 17
        %vm2791 = vcmp.eq.s32.totalorder %v2215, 17
        %vm2792 = vcmp.eq.s32.totalorder %v2216, 17
        %vm2793 = vcmp.eq.s32.totalorder %v2217, 17
        %vm2794 = vcmp.eq.s32.totalorder %v2218, 17
        %vm2795 = vcmp.eq.s32.totalorder %v2219, 17
        %vm2796 = vcmp.eq.s32.totalorder %v2220, 17
        %vm2797 = vcmp.eq.s32.totalorder %v2221, 17
        %vm2798 = vcmp.eq.s32.totalorder %v2222, 17
        %vm2799 = vcmp.eq.s32.totalorder %v2223, 17
        %vm2800 = vcmp.eq.s32.totalorder %v2224, 17
        %vm2801 = vcmp.eq.s32.totalorder %v2225, 17
        %vm2802 = vcmp.eq.s32.totalorder %v2226, 17
        %vm2803 = vcmp.eq.s32.totalorder %v2227, 17
        %vm2804 = vcmp.eq.s32.totalorder %v2228, 17
        %vm2805 = vcmp.eq.s32.totalorder %v2229, 17
        %vm2806 = vcmp.eq.s32.totalorder %v2230, 17
        %vm2807 = vcmp.eq.s32.totalorder %v2231, 17
        %vm2808 = vcmp.eq.s32.totalorder %v2232, 17
        %vm2809 = vcmp.eq.s32.totalorder %v2233, 17
        %vm2810 = vcmp.eq.s32.totalorder %v2234, 17
        %vm2811 = vcmp.eq.s32.totalorder %v2235, 17
        %vm2812 = vcmp.eq.s32.totalorder %v2236, 17
        %vm2813 = vcmp.eq.s32.totalorder %v2237, 17
        %vm2814 = vcmp.eq.s32.totalorder %v2238, 17
        %vm2815 = vcmp.eq.s32.totalorder %v2239, 17
        %vm2816 = vcmp.eq.s32.totalorder %v2240, 17
        %vm2817 = vcmp.eq.s32.totalorder %v2241, 17
        %vm2818 = vcmp.eq.s32.totalorder %v2242, 17
        %vm2819 = vcmp.eq.s32.totalorder %v2243, 17
        %vm2820 = vcmp.eq.s32.totalorder %v2244, 17
        %vm2821 = vcmp.eq.s32.totalorder %v2245, 17
        %vm2822 = vcmp.eq.s32.totalorder %v2246, 17
        %vm2823 = vcmp.eq.s32.totalorder %v2247, 17
        %vm2824 = vcmp.eq.s32.totalorder %v2248, 17
        %vm2825 = vcmp.eq.s32.totalorder %v2249, 17
        %vm2826 = vcmp.eq.s32.totalorder %v2250, 17
        %vm2827 = vcmp.eq.s32.totalorder %v2251, 17
        %vm2828 = vcmp.eq.s32.totalorder %v2252, 17
        %vm2829 = vcmp.eq.s32.totalorder %v2253, 17
        %vm2830 = vcmp.eq.s32.totalorder %v2254, 17
        %vm2831 = vcmp.eq.s32.totalorder %v2255, 17
        %vm2832 = vcmp.eq.s32.totalorder %v2256, 17
        %vm2833 = vcmp.eq.s32.totalorder %v2257, 17
        %vm2834 = vcmp.eq.s32.totalorder %v2258, 17
        %vm2835 = vcmp.eq.s32.totalorder %v2259, 17
        %vm2836 = vcmp.eq.s32.totalorder %v2260, 17
        %vm2837 = vcmp.eq.s32.totalorder %v2261, 17
        %vm2838 = vcmp.eq.s32.totalorder %v2262, 17
        %vm2839 = vcmp.eq.s32.totalorder %v2263, 17
        %vm2840 = vcmp.eq.s32.totalorder %v2264, 17
        %vm2841 = vcmp.eq.s32.totalorder %v2265, 17
        %vm2842 = vcmp.eq.s32.totalorder %v2266, 17
        %vm2843 = vcmp.eq.s32.totalorder %v2267, 17
        %vm2844 = vcmp.eq.s32.totalorder %v2268, 17
        %vm2845 = vcmp.eq.s32.totalorder %v2269, 17
        %vm2846 = vcmp.eq.s32.totalorder %v2270, 17
        %vm2847 = vcmp.eq.s32.totalorder %v2271, 17
        %vm2848 = vcmp.eq.s32.totalorder %v2272, 17
        %vm2849 = vcmp.eq.s32.totalorder %v2273, 17
        %vm2850 = vcmp.eq.s32.totalorder %v2274, 17
        %vm2851 = vcmp.eq.s32.totalorder %v2275, 17
        %vm2852 = vcmp.eq.s32.totalorder %v2276, 17
        %vm2853 = vcmp.eq.s32.totalorder %v2277, 17
        %vm2854 = vcmp.eq.s32.totalorder %v2278, 17
        %vm2855 = vcmp.eq.s32.totalorder %v2279, 17
        %vm2856 = vcmp.eq.s32.totalorder %v2280, 17
        %vm2857 = vcmp.eq.s32.totalorder %v2281, 17
        %vm2858 = vcmp.eq.s32.totalorder %v2282, 17
        %vm2859 = vcmp.eq.s32.totalorder %v2283, 17
        %vm2860 = vcmp.eq.s32.totalorder %v2284, 17
        %vm2861 = vcmp.eq.s32.totalorder %v2285, 17
        %vm2862 = vcmp.eq.s32.totalorder %v2286, 17
        %vm2863 = vcmp.eq.s32.totalorder %v2287, 17
        %vm2864 = vcmp.eq.s32.totalorder %v2288, 17
        %vm2865 = vcmp.eq.s32.totalorder %v2289, 17
        %vm2866 = vcmp.eq.s32.totalorder %v2290, 17
        %vm2867 = vcmp.eq.s32.totalorder %v2291, 17
        %vm2868 = vcmp.eq.s32.totalorder %v2292, 17
        %vm2869 = vcmp.eq.s32.totalorder %v2293, 17
        %vm2870 = vcmp.eq.s32.totalorder %v2294, 17
        %vm2871 = vcmp.eq.s32.totalorder %v2295, 17
        %vm2872 = vcmp.eq.s32.totalorder %v2296, 17
        %vm2873 = vcmp.eq.s32.totalorder %v2297, 17
        %vm2874 = vcmp.eq.s32.totalorder %v2298, 17
        %vm2875 = vcmp.eq.s32.totalorder %v2299, 17
        %vm2876 = vcmp.eq.s32.totalorder %v2300, 17
        %vm2877 = vcmp.eq.s32.totalorder %v2301, 17
        %vm2878 = vcmp.eq.s32.totalorder %v2302, 17
        %vm2879 = vcmp.eq.s32.totalorder %v2303, 17
        %vm2880 = vcmp.eq.s32.totalorder %v2304, 17
        %vm2881 = vcmp.eq.s32.totalorder %v2305, 17
        %vm2882 = vcmp.eq.s32.totalorder %v2306, 17
        %vm2883 = vcmp.eq.s32.totalorder %v2307, 17
        %vm2884 = vcmp.eq.s32.totalorder %v2308, 17
        %vm2885 = vcmp.eq.s32.totalorder %v2309, 17
        %vm2886 = vcmp.eq.s32.totalorder %v2310, 17
        %vm2887 = vcmp.eq.s32.totalorder %v2311, 17
        %vm2888 = vcmp.eq.s32.totalorder %v2312, 17
        %vm2889 = vcmp.eq.s32.totalorder %v2313, 17
        %vm2890 = vcmp.eq.s32.totalorder %v2314, 17
        %vm2891 = vcmp.eq.s32.totalorder %v2315, 17
        %vm2892 = vcmp.eq.s32.totalorder %v2316, 17
        %vm2893 = vcmp.eq.s32.totalorder %v2317, 17
        %vm2894 = vcmp.eq.s32.totalorder %v2318, 17
        %vm2895 = vcmp.eq.s32.totalorder %v2319, 17
        %vm2896 = vcmp.eq.s32.totalorder %v2320, 17
        %vm2897 = vcmp.eq.s32.totalorder %v2321, 17
        %vm2898 = vcmp.eq.s32.totalorder %v2322, 17
        %vm2899 = vcmp.eq.s32.totalorder %v2323, 17
        %vm2900 = vcmp.eq.s32.totalorder %v2324, 17
        %vm2901 = vcmp.eq.s32.totalorder %v2325, 17
        %vm2902 = vcmp.eq.s32.totalorder %v2326, 17
        %vm2903 = vcmp.eq.s32.totalorder %v2327, 17
        %vm2904 = vcmp.eq.s32.totalorder %v2328, 17
        %vm2905 = vcmp.eq.s32.totalorder %v2329, 17
        %vm2906 = vcmp.eq.s32.totalorder %v2330, 17
        %vm2907 = vcmp.eq.s32.totalorder %v2331, 17
        %vm2908 = vcmp.eq.s32.totalorder %v2332, 17
        %vm2909 = vcmp.eq.s32.totalorder %v2333, 17
        %vm2910 = vcmp.eq.s32.totalorder %v2334, 17
        %vm2911 = vcmp.eq.s32.totalorder %v2335, 17
        %vm2912 = vcmp.eq.s32.totalorder %v2336, 17
        %vm2913 = vcmp.eq.s32.totalorder %v2337, 17
        %vm2914 = vcmp.eq.s32.totalorder %v2338, 17
        %vm2915 = vcmp.eq.s32.totalorder %v2339, 17
        %vm2916 = vcmp.eq.s32.totalorder %v2340, 17
        %vm2917 = vcmp.eq.s32.totalorder %v2341, 17
        %vm2918 = vcmp.eq.s32.totalorder %v2342, 17
        %vm2919 = vcmp.eq.s32.totalorder %v2343, 17
        %vm2920 = vcmp.eq.s32.totalorder %v2344, 17
        %vm2921 = vcmp.eq.s32.totalorder %v2345, 17
        %vm2922 = vcmp.eq.s32.totalorder %v2346, 17
        %vm2923 = vcmp.eq.s32.totalorder %v2347, 17
        %vm2924 = vcmp.eq.s32.totalorder %v2348, 17
        %v2925 = vsel %vm2781, %v801, 0.0
        %v2926 = vsel %vm2782, %v801, 0.0
        %v2927 = vsel %vm2783, %v801, 0.0
        %v2928 = vsel %vm2784, %v801, 0.0
        %v2929 = vsel %vm2785, %v801, 0.0
        %v2930 = vsel %vm2786, %v801, 0.0
        %v2931 = vsel %vm2787, %v801, 0.0
        %v2932 = vsel %vm2788, %v801, 0.0
        %v2933 = vsel %vm2789, %v801, 0.0
        %v2934 = vsel %vm2790, %v801, 0.0
        %v2935 = vsel %vm2791, %v801, 0.0
        %v2936 = vsel %vm2792, %v801, 0.0
        %v2937 = vsel %vm2793, %v801, 0.0
        %v2938 = vsel %vm2794, %v801, 0.0
        %v2939 = vsel %vm2795, %v801, 0.0
        %v2940 = vsel %vm2796, %v801, 0.0
        %v2941 = vsel %vm2797, %v802, 0.0
        %v2942 = vsel %vm2798, %v802, 0.0
        %v2943 = vsel %vm2799, %v802, 0.0
        %v2944 = vsel %vm2800, %v802, 0.0
        %v2945 = vsel %vm2801, %v802, 0.0
        %v2946 = vsel %vm2802, %v802, 0.0
        %v2947 = vsel %vm2803, %v802, 0.0
        %v2948 = vsel %vm2804, %v802, 0.0
        %v2949 = vsel %vm2805, %v802, 0.0
        %v2950 = vsel %vm2806, %v802, 0.0
        %v2951 = vsel %vm2807, %v802, 0.0
        %v2952 = vsel %vm2808, %v802, 0.0
        %v2953 = vsel %vm2809, %v802, 0.0
        %v2954 = vsel %vm2810, %v802, 0.0
        %v2955 = vsel %vm2811, %v802, 0.0
        %v2956 = vsel %vm2812, %v802, 0.0
        %v2957 = vsel %vm2813, %v803, 0.0
        %v2958 = vsel %vm2814, %v803, 0.0
        %v2959 = vsel %vm2815, %v803, 0.0
        %v2960 = vsel %vm2816, %v803, 0.0
        %v2961 = vsel %vm2817, %v803, 0.0
        %v2962 = vsel %vm2818, %v803, 0.0
        %v2963 = vsel %vm2819, %v803, 0.0
        %v2964 = vsel %vm2820, %v803, 0.0
        %v2965 = vsel %vm2821, %v803, 0.0
        %v2966 = vsel %vm2822, %v803, 0.0
        %v2967 = vsel %vm2823, %v803, 0.0
        %v2968 = vsel %vm2824, %v803, 0.0
        %v2969 = vsel %vm2825, %v803, 0.0
        %v2970 = vsel %vm2826, %v803, 0.0
        %v2971 = vsel %vm2827, %v803, 0.0
        %v2972 = vsel %vm2828, %v803, 0.0
        %v2973 = vsel %vm2829, %v804, 0.0
        %v2974 = vsel %vm2830, %v804, 0.0
        %v2975 = vsel %vm2831, %v804, 0.0
        %v2976 = vsel %vm2832, %v804, 0.0
        %v2977 = vsel %vm2833, %v804, 0.0
        %v2978 = vsel %vm2834, %v804, 0.0
        %v2979 = vsel %vm2835, %v804, 0.0
        %v2980 = vsel %vm2836, %v804, 0.0
        %v2981 = vsel %vm2837, %v804, 0.0
        %v2982 = vsel %vm2838, %v804, 0.0
        %v2983 = vsel %vm2839, %v804, 0.0
        %v2984 = vsel %vm2840, %v804, 0.0
        %v2985 = vsel %vm2841, %v804, 0.0
        %v2986 = vsel %vm2842, %v804, 0.0
        %v2987 = vsel %vm2843, %v804, 0.0
        %v2988 = vsel %vm2844, %v804, 0.0
        %v2989 = vsel %vm2845, %v805, 0.0
        %v2990 = vsel %vm2846, %v805, 0.0
        %v2991 = vsel %vm2847, %v805, 0.0
        %v2992 = vsel %vm2848, %v805, 0.0
        %v2993 = vsel %vm2849, %v805, 0.0
        %v2994 = vsel %vm2850, %v805, 0.0
        %v2995 = vsel %vm2851, %v805, 0.0
        %v2996 = vsel %vm2852, %v805, 0.0
        %v2997 = vsel %vm2853, %v805, 0.0
        %v2998 = vsel %vm2854, %v805, 0.0
        %v2999 = vsel %vm2855, %v805, 0.0
        %v3000 = vsel %vm2856, %v805, 0.0
        %v3001 = vsel %vm2857, %v805, 0.0
        %v3002 = vsel %vm2858, %v805, 0.0
        %v3003 = vsel %vm2859, %v805, 0.0
        %v3004 = vsel %vm2860, %v805, 0.0
        %v3005 = vsel %vm2861, %v806, 0.0
        %v3006 = vsel %vm2862, %v806, 0.0
        %v3007 = vsel %vm2863, %v806, 0.0
        %v3008 = vsel %vm2864, %v806, 0.0
        %v3009 = vsel %vm2865, %v806, 0.0
        %v3010 = vsel %vm2866, %v806, 0.0
        %v3011 = vsel %vm2867, %v806, 0.0
        %v3012 = vsel %vm2868, %v806, 0.0
        %v3013 = vsel %vm2869, %v806, 0.0
        %v3014 = vsel %vm2870, %v806, 0.0
        %v3015 = vsel %vm2871, %v806, 0.0
        %v3016 = vsel %vm2872, %v806, 0.0
        %v3017 = vsel %vm2873, %v806, 0.0
        %v3018 = vsel %vm2874, %v806, 0.0
        %v3019 = vsel %vm2875, %v806, 0.0
        %v3020 = vsel %vm2876, %v806, 0.0
        %v3021 = vsel %vm2877, %v807, 0.0
        %v3022 = vsel %vm2878, %v807, 0.0
        %v3023 = vsel %vm2879, %v807, 0.0
        %v3024 = vsel %vm2880, %v807, 0.0
        %v3025 = vsel %vm2881, %v807, 0.0
        %v3026 = vsel %vm2882, %v807, 0.0
        %v3027 = vsel %vm2883, %v807, 0.0
        %v3028 = vsel %vm2884, %v807, 0.0
        %v3029 = vsel %vm2885, %v807, 0.0
        %v3030 = vsel %vm2886, %v807, 0.0
        %v3031 = vsel %vm2887, %v807, 0.0
        %v3032 = vsel %vm2888, %v807, 0.0
        %v3033 = vsel %vm2889, %v807, 0.0
        %v3034 = vsel %vm2890, %v807, 0.0
        %v3035 = vsel %vm2891, %v807, 0.0
        %v3036 = vsel %vm2892, %v807, 0.0
        %v3037 = vsel %vm2893, %v808, 0.0
        %v3038 = vsel %vm2894, %v808, 0.0
        %v3039 = vsel %vm2895, %v808, 0.0
        %v3040 = vsel %vm2896, %v808, 0.0
        %v3041 = vsel %vm2897, %v808, 0.0
        %v3042 = vsel %vm2898, %v808, 0.0
        %v3043 = vsel %vm2899, %v808, 0.0
        %v3044 = vsel %vm2900, %v808, 0.0
        %v3045 = vsel %vm2901, %v808, 0.0
        %v3046 = vsel %vm2902, %v808, 0.0
        %v3047 = vsel %vm2903, %v808, 0.0
        %v3048 = vsel %vm2904, %v808, 0.0
        %v3049 = vsel %vm2905, %v808, 0.0
        %v3050 = vsel %vm2906, %v808, 0.0
        %v3051 = vsel %vm2907, %v808, 0.0
        %v3052 = vsel %vm2908, %v808, 0.0
        %v3053 = vsel %vm2909, %v809, 0.0
        %v3054 = vsel %vm2910, %v809, 0.0
        %v3055 = vsel %vm2911, %v809, 0.0
        %v3056 = vsel %vm2912, %v809, 0.0
        %v3057 = vsel %vm2913, %v809, 0.0
        %v3058 = vsel %vm2914, %v809, 0.0
        %v3059 = vsel %vm2915, %v809, 0.0
        %v3060 = vsel %vm2916, %v809, 0.0
        %v3061 = vsel %vm2917, %v809, 0.0
        %v3062 = vsel %vm2918, %v809, 0.0
        %v3063 = vsel %vm2919, %v809, 0.0
        %v3064 = vsel %vm2920, %v809, 0.0
        %v3065 = vsel %vm2921, %v809, 0.0
        %v3066 = vsel %vm2922, %v809, 0.0
        %v3067 = vsel %vm2923, %v809, 0.0
        %v3068 = vsel %vm2924, %v809, 0.0
        %v3069 = vsel %vm2637, %v774, %v2925
        %v3070 = vsel %vm2638, %v774, %v2926
        %v3071 = vsel %vm2639, %v774, %v2927
        %v3072 = vsel %vm2640, %v774, %v2928
        %v3073 = vsel %vm2641, %v774, %v2929
        %v3074 = vsel %vm2642, %v774, %v2930
        %v3075 = vsel %vm2643, %v774, %v2931
        %v3076 = vsel %vm2644, %v774, %v2932
        %v3077 = vsel %vm2645, %v774, %v2933
        %v3078 = vsel %vm2646, %v774, %v2934
        %v3079 = vsel %vm2647, %v774, %v2935
        %v3080 = vsel %vm2648, %v774, %v2936
        %v3081 = vsel %vm2649, %v774, %v2937
        %v3082 = vsel %vm2650, %v774, %v2938
        %v3083 = vsel %vm2651, %v774, %v2939
        %v3084 = vsel %vm2652, %v774, %v2940
        %v3085 = vsel %vm2653, %v775, %v2941
        %v3086 = vsel %vm2654, %v775, %v2942
        %v3087 = vsel %vm2655, %v775, %v2943
        %v3088 = vsel %vm2656, %v775, %v2944
        %v3089 = vsel %vm2657, %v775, %v2945
        %v3090 = vsel %vm2658, %v775, %v2946
        %v3091 = vsel %vm2659, %v775, %v2947
        %v3092 = vsel %vm2660, %v775, %v2948
        %v3093 = vsel %vm2661, %v775, %v2949
        %v3094 = vsel %vm2662, %v775, %v2950
        %v3095 = vsel %vm2663, %v775, %v2951
        %v3096 = vsel %vm2664, %v775, %v2952
        %v3097 = vsel %vm2665, %v775, %v2953
        %v3098 = vsel %vm2666, %v775, %v2954
        %v3099 = vsel %vm2667, %v775, %v2955
        %v3100 = vsel %vm2668, %v775, %v2956
        %v3101 = vsel %vm2669, %v776, %v2957
        %v3102 = vsel %vm2670, %v776, %v2958
        %v3103 = vsel %vm2671, %v776, %v2959
        %v3104 = vsel %vm2672, %v776, %v2960
        %v3105 = vsel %vm2673, %v776, %v2961
        %v3106 = vsel %vm2674, %v776, %v2962
        %v3107 = vsel %vm2675, %v776, %v2963
        %v3108 = vsel %vm2676, %v776, %v2964
        %v3109 = vsel %vm2677, %v776, %v2965
        %v3110 = vsel %vm2678, %v776, %v2966
        %v3111 = vsel %vm2679, %v776, %v2967
        %v3112 = vsel %vm2680, %v776, %v2968
        %v3113 = vsel %vm2681, %v776, %v2969
        %v3114 = vsel %vm2682, %v776, %v2970
        %v3115 = vsel %vm2683, %v776, %v2971
        %v3116 = vsel %vm2684, %v776, %v2972
        %v3117 = vsel %vm2685, %v777, %v2973
        %v3118 = vsel %vm2686, %v777, %v2974
        %v3119 = vsel %vm2687, %v777, %v2975
        %v3120 = vsel %vm2688, %v777, %v2976
        %v3121 = vsel %vm2689, %v777, %v2977
        %v3122 = vsel %vm2690, %v777, %v2978
        %v3123 = vsel %vm2691, %v777, %v2979
        %v3124 = vsel %vm2692, %v777, %v2980
        %v3125 = vsel %vm2693, %v777, %v2981
        %v3126 = vsel %vm2694, %v777, %v2982
        %v3127 = vsel %vm2695, %v777, %v2983
        %v3128 = vsel %vm2696, %v777, %v2984
        %v3129 = vsel %vm2697, %v777, %v2985
        %v3130 = vsel %vm2698, %v777, %v2986
        %v3131 = vsel %vm2699, %v777, %v2987
        %v3132 = vsel %vm2700, %v777, %v2988
        %v3133 = vsel %vm2701, %v778, %v2989
        %v3134 = vsel %vm2702, %v778, %v2990
        %v3135 = vsel %vm2703, %v778, %v2991
        %v3136 = vsel %vm2704, %v778, %v2992
        %v3137 = vsel %vm2705, %v778, %v2993
        %v3138 = vsel %vm2706, %v778, %v2994
        %v3139 = vsel %vm2707, %v778, %v2995
        %v3140 = vsel %vm2708, %v778, %v2996
        %v3141 = vsel %vm2709, %v778, %v2997
        %v3142 = vsel %vm2710, %v778, %v2998
        %v3143 = vsel %vm2711, %v778, %v2999
        %v3144 = vsel %vm2712, %v778, %v3000
        %v3145 = vsel %vm2713, %v778, %v3001
        %v3146 = vsel %vm2714, %v778, %v3002
        %v3147 = vsel %vm2715, %v778, %v3003
        %v3148 = vsel %vm2716, %v778, %v3004
        %v3149 = vsel %vm2717, %v779, %v3005
        %v3150 = vsel %vm2718, %v779, %v3006
        %v3151 = vsel %vm2719, %v779, %v3007
        %v3152 = vsel %vm2720, %v779, %v3008
        %v3153 = vsel %vm2721, %v779, %v3009
        %v3154 = vsel %vm2722, %v779, %v3010
        %v3155 = vsel %vm2723, %v779, %v3011
        %v3156 = vsel %vm2724, %v779, %v3012
        %v3157 = vsel %vm2725, %v779, %v3013
        %v3158 = vsel %vm2726, %v779, %v3014
        %v3159 = vsel %vm2727, %v779, %v3015
        %v3160 = vsel %vm2728, %v779, %v3016
        %v3161 = vsel %vm2729, %v779, %v3017
        %v3162 = vsel %vm2730, %v779, %v3018
        %v3163 = vsel %vm2731, %v779, %v3019
        %v3164 = vsel %vm2732, %v779, %v3020
        %v3165 = vsel %vm2733, %v780, %v3021
        %v3166 = vsel %vm2734, %v780, %v3022
        %v3167 = vsel %vm2735, %v780, %v3023
        %v3168 = vsel %vm2736, %v780, %v3024
        %v3169 = vsel %vm2737, %v780, %v3025
        %v3170 = vsel %vm2738, %v780, %v3026
        %v3171 = vsel %vm2739, %v780, %v3027
        %v3172 = vsel %vm2740, %v780, %v3028
        %v3173 = vsel %vm2741, %v780, %v3029
        %v3174 = vsel %vm2742, %v780, %v3030
        %v3175 = vsel %vm2743, %v780, %v3031
        %v3176 = vsel %vm2744, %v780, %v3032
        %v3177 = vsel %vm2745, %v780, %v3033
        %v3178 = vsel %vm2746, %v780, %v3034
        %v3179 = vsel %vm2747, %v780, %v3035
        %v3180 = vsel %vm2748, %v780, %v3036
        %v3181 = vsel %vm2749, %v781, %v3037
        %v3182 = vsel %vm2750, %v781, %v3038
        %v3183 = vsel %vm2751, %v781, %v3039
        %v3184 = vsel %vm2752, %v781, %v3040
        %v3185 = vsel %vm2753, %v781, %v3041
        %v3186 = vsel %vm2754, %v781, %v3042
        %v3187 = vsel %vm2755, %v781, %v3043
        %v3188 = vsel %vm2756, %v781, %v3044
        %v3189 = vsel %vm2757, %v781, %v3045
        %v3190 = vsel %vm2758, %v781, %v3046
        %v3191 = vsel %vm2759, %v781, %v3047
        %v3192 = vsel %vm2760, %v781, %v3048
        %v3193 = vsel %vm2761, %v781, %v3049
        %v3194 = vsel %vm2762, %v781, %v3050
        %v3195 = vsel %vm2763, %v781, %v3051
        %v3196 = vsel %vm2764, %v781, %v3052
        %v3197 = vsel %vm2765, %v782, %v3053
        %v3198 = vsel %vm2766, %v782, %v3054
        %v3199 = vsel %vm2767, %v782, %v3055
        %v3200 = vsel %vm2768, %v782, %v3056
        %v3201 = vsel %vm2769, %v782, %v3057
        %v3202 = vsel %vm2770, %v782, %v3058
        %v3203 = vsel %vm2771, %v782, %v3059
        %v3204 = vsel %vm2772, %v782, %v3060
        %v3205 = vsel %vm2773, %v782, %v3061
        %v3206 = vsel %vm2774, %v782, %v3062
        %v3207 = vsel %vm2775, %v782, %v3063
        %v3208 = vsel %vm2776, %v782, %v3064
        %v3209 = vsel %vm2777, %v782, %v3065
        %v3210 = vsel %vm2778, %v782, %v3066
        %v3211 = vsel %vm2779, %v782, %v3067
        %v3212 = vsel %vm2780, %v782, %v3068
        %v3213 = vsel %vm2493, %v747, %v3069
        %v3214 = vsel %vm2494, %v747, %v3070
        %v3215 = vsel %vm2495, %v747, %v3071
        %v3216 = vsel %vm2496, %v747, %v3072
        %v3217 = vsel %vm2497, %v747, %v3073
        %v3218 = vsel %vm2498, %v747, %v3074
        %v3219 = vsel %vm2499, %v747, %v3075
        %v3220 = vsel %vm2500, %v747, %v3076
        %v3221 = vsel %vm2501, %v747, %v3077
        %v3222 = vsel %vm2502, %v747, %v3078
        %v3223 = vsel %vm2503, %v747, %v3079
        %v3224 = vsel %vm2504, %v747, %v3080
        %v3225 = vsel %vm2505, %v747, %v3081
        %v3226 = vsel %vm2506, %v747, %v3082
        %v3227 = vsel %vm2507, %v747, %v3083
        %v3228 = vsel %vm2508, %v747, %v3084
        %v3229 = vsel %vm2509, %v748, %v3085
        %v3230 = vsel %vm2510, %v748, %v3086
        %v3231 = vsel %vm2511, %v748, %v3087
        %v3232 = vsel %vm2512, %v748, %v3088
        %v3233 = vsel %vm2513, %v748, %v3089
        %v3234 = vsel %vm2514, %v748, %v3090
        %v3235 = vsel %vm2515, %v748, %v3091
        %v3236 = vsel %vm2516, %v748, %v3092
        %v3237 = vsel %vm2517, %v748, %v3093
        %v3238 = vsel %vm2518, %v748, %v3094
        %v3239 = vsel %vm2519, %v748, %v3095
        %v3240 = vsel %vm2520, %v748, %v3096
        %v3241 = vsel %vm2521, %v748, %v3097
        %v3242 = vsel %vm2522, %v748, %v3098
        %v3243 = vsel %vm2523, %v748, %v3099
        %v3244 = vsel %vm2524, %v748, %v3100
        %v3245 = vsel %vm2525, %v749, %v3101
        %v3246 = vsel %vm2526, %v749, %v3102
        %v3247 = vsel %vm2527, %v749, %v3103
        %v3248 = vsel %vm2528, %v749, %v3104
        %v3249 = vsel %vm2529, %v749, %v3105
        %v3250 = vsel %vm2530, %v749, %v3106
        %v3251 = vsel %vm2531, %v749, %v3107
        %v3252 = vsel %vm2532, %v749, %v3108
        %v3253 = vsel %vm2533, %v749, %v3109
        %v3254 = vsel %vm2534, %v749, %v3110
        %v3255 = vsel %vm2535, %v749, %v3111
        %v3256 = vsel %vm2536, %v749, %v3112
        %v3257 = vsel %vm2537, %v749, %v3113
        %v3258 = vsel %vm2538, %v749, %v3114
        %v3259 = vsel %vm2539, %v749, %v3115
        %v3260 = vsel %vm2540, %v749, %v3116
        %v3261 = vsel %vm2541, %v750, %v3117
        %v3262 = vsel %vm2542, %v750, %v3118
        %v3263 = vsel %vm2543, %v750, %v3119
        %v3264 = vsel %vm2544, %v750, %v3120
        %v3265 = vsel %vm2545, %v750, %v3121
        %v3266 = vsel %vm2546, %v750, %v3122
        %v3267 = vsel %vm2547, %v750, %v3123
        %v3268 = vsel %vm2548, %v750, %v3124
        %v3269 = vsel %vm2549, %v750, %v3125
        %v3270 = vsel %vm2550, %v750, %v3126
        %v3271 = vsel %vm2551, %v750, %v3127
        %v3272 = vsel %vm2552, %v750, %v3128
        %v3273 = vsel %vm2553, %v750, %v3129
        %v3274 = vsel %vm2554, %v750, %v3130
        %v3275 = vsel %vm2555, %v750, %v3131
        %v3276 = vsel %vm2556, %v750, %v3132
        %v3277 = vsel %vm2557, %v751, %v3133
        %v3278 = vsel %vm2558, %v751, %v3134
        %v3279 = vsel %vm2559, %v751, %v3135
        %v3280 = vsel %vm2560, %v751, %v3136
        %v3281 = vsel %vm2561, %v751, %v3137
        %v3282 = vsel %vm2562, %v751, %v3138
        %v3283 = vsel %vm2563, %v751, %v3139
        %v3284 = vsel %vm2564, %v751, %v3140
        %v3285 = vsel %vm2565, %v751, %v3141
        %v3286 = vsel %vm2566, %v751, %v3142
        %v3287 = vsel %vm2567, %v751, %v3143
        %v3288 = vsel %vm2568, %v751, %v3144
        %v3289 = vsel %vm2569, %v751, %v3145
        %v3290 = vsel %vm2570, %v751, %v3146
        %v3291 = vsel %vm2571, %v751, %v3147
        %v3292 = vsel %vm2572, %v751, %v3148
        %v3293 = vsel %vm2573, %v752, %v3149
        %v3294 = vsel %vm2574, %v752, %v3150
        %v3295 = vsel %vm2575, %v752, %v3151
        %v3296 = vsel %vm2576, %v752, %v3152
        %v3297 = vsel %vm2577, %v752, %v3153
        %v3298 = vsel %vm2578, %v752, %v3154
        %v3299 = vsel %vm2579, %v752, %v3155
        %v3300 = vsel %vm2580, %v752, %v3156
        %v3301 = vsel %vm2581, %v752, %v3157
        %v3302 = vsel %vm2582, %v752, %v3158
        %v3303 = vsel %vm2583, %v752, %v3159
        %v3304 = vsel %vm2584, %v752, %v3160
        %v3305 = vsel %vm2585, %v752, %v3161
        %v3306 = vsel %vm2586, %v752, %v3162
        %v3307 = vsel %vm2587, %v752, %v3163
        %v3308 = vsel %vm2588, %v752, %v3164
        %v3309 = vsel %vm2589, %v753, %v3165
        %v3310 = vsel %vm2590, %v753, %v3166
        %v3311 = vsel %vm2591, %v753, %v3167
        %v3312 = vsel %vm2592, %v753, %v3168
        %v3313 = vsel %vm2593, %v753, %v3169
        %v3314 = vsel %vm2594, %v753, %v3170
        %v3315 = vsel %vm2595, %v753, %v3171
        %v3316 = vsel %vm2596, %v753, %v3172
        %v3317 = vsel %vm2597, %v753, %v3173
        %v3318 = vsel %vm2598, %v753, %v3174
        %v3319 = vsel %vm2599, %v753, %v3175
        %v3320 = vsel %vm2600, %v753, %v3176
        %v3321 = vsel %vm2601, %v753, %v3177
        %v3322 = vsel %vm2602, %v753, %v3178
        %v3323 = vsel %vm2603, %v753, %v3179
        %v3324 = vsel %vm2604, %v753, %v3180
        %v3325 = vsel %vm2605, %v754, %v3181
        %v3326 = vsel %vm2606, %v754, %v3182
        %v3327 = vsel %vm2607, %v754, %v3183
        %v3328 = vsel %vm2608, %v754, %v3184
        %v3329 = vsel %vm2609, %v754, %v3185
        %v3330 = vsel %vm2610, %v754, %v3186
        %v3331 = vsel %vm2611, %v754, %v3187
        %v3332 = vsel %vm2612, %v754, %v3188
        %v3333 = vsel %vm2613, %v754, %v3189
        %v3334 = vsel %vm2614, %v754, %v3190
        %v3335 = vsel %vm2615, %v754, %v3191
        %v3336 = vsel %vm2616, %v754, %v3192
        %v3337 = vsel %vm2617, %v754, %v3193
        %v3338 = vsel %vm2618, %v754, %v3194
        %v3339 = vsel %vm2619, %v754, %v3195
        %v3340 = vsel %vm2620, %v754, %v3196
        %v3341 = vsel %vm2621, %v755, %v3197
        %v3342 = vsel %vm2622, %v755, %v3198
        %v3343 = vsel %vm2623, %v755, %v3199
        %v3344 = vsel %vm2624, %v755, %v3200
        %v3345 = vsel %vm2625, %v755, %v3201
        %v3346 = vsel %vm2626, %v755, %v3202
        %v3347 = vsel %vm2627, %v755, %v3203
        %v3348 = vsel %vm2628, %v755, %v3204
        %v3349 = vsel %vm2629, %v755, %v3205
        %v3350 = vsel %vm2630, %v755, %v3206
        %v3351 = vsel %vm2631, %v755, %v3207
        %v3352 = vsel %vm2632, %v755, %v3208
        %v3353 = vsel %vm2633, %v755, %v3209
        %v3354 = vsel %vm2634, %v755, %v3210
        %v3355 = vsel %vm2635, %v755, %v3211
        %v3356 = vsel %vm2636, %v755, %v3212
        %v3357 = vsel %vm2349, %v720, %v3213
        %v3358 = vsel %vm2350, %v720, %v3214
        %v3359 = vsel %vm2351, %v720, %v3215
        %v3360 = vsel %vm2352, %v720, %v3216
        %v3361 = vsel %vm2353, %v720, %v3217
        %v3362 = vsel %vm2354, %v720, %v3218
        %v3363 = vsel %vm2355, %v720, %v3219
        %v3364 = vsel %vm2356, %v720, %v3220
        %v3365 = vsel %vm2357, %v720, %v3221
        %v3366 = vsel %vm2358, %v720, %v3222
        %v3367 = vsel %vm2359, %v720, %v3223
        %v3368 = vsel %vm2360, %v720, %v3224
        %v3369 = vsel %vm2361, %v720, %v3225
        %v3370 = vsel %vm2362, %v720, %v3226
        %v3371 = vsel %vm2363, %v720, %v3227
        %v3372 = vsel %vm2364, %v720, %v3228
        %v3373 = vsel %vm2365, %v721, %v3229
        %v3374 = vsel %vm2366, %v721, %v3230
        %v3375 = vsel %vm2367, %v721, %v3231
        %v3376 = vsel %vm2368, %v721, %v3232
        %v3377 = vsel %vm2369, %v721, %v3233
        %v3378 = vsel %vm2370, %v721, %v3234
        %v3379 = vsel %vm2371, %v721, %v3235
        %v3380 = vsel %vm2372, %v721, %v3236
        %v3381 = vsel %vm2373, %v721, %v3237
        %v3382 = vsel %vm2374, %v721, %v3238
        %v3383 = vsel %vm2375, %v721, %v3239
        %v3384 = vsel %vm2376, %v721, %v3240
        %v3385 = vsel %vm2377, %v721, %v3241
        %v3386 = vsel %vm2378, %v721, %v3242
        %v3387 = vsel %vm2379, %v721, %v3243
        %v3388 = vsel %vm2380, %v721, %v3244
        %v3389 = vsel %vm2381, %v722, %v3245
        %v3390 = vsel %vm2382, %v722, %v3246
        %v3391 = vsel %vm2383, %v722, %v3247
        %v3392 = vsel %vm2384, %v722, %v3248
        %v3393 = vsel %vm2385, %v722, %v3249
        %v3394 = vsel %vm2386, %v722, %v3250
        %v3395 = vsel %vm2387, %v722, %v3251
        %v3396 = vsel %vm2388, %v722, %v3252
        %v3397 = vsel %vm2389, %v722, %v3253
        %v3398 = vsel %vm2390, %v722, %v3254
        %v3399 = vsel %vm2391, %v722, %v3255
        %v3400 = vsel %vm2392, %v722, %v3256
        %v3401 = vsel %vm2393, %v722, %v3257
        %v3402 = vsel %vm2394, %v722, %v3258
        %v3403 = vsel %vm2395, %v722, %v3259
        %v3404 = vsel %vm2396, %v722, %v3260
        %v3405 = vsel %vm2397, %v723, %v3261
        %v3406 = vsel %vm2398, %v723, %v3262
        %v3407 = vsel %vm2399, %v723, %v3263
        %v3408 = vsel %vm2400, %v723, %v3264
        %v3409 = vsel %vm2401, %v723, %v3265
        %v3410 = vsel %vm2402, %v723, %v3266
        %v3411 = vsel %vm2403, %v723, %v3267
        %v3412 = vsel %vm2404, %v723, %v3268
        %v3413 = vsel %vm2405, %v723, %v3269
        %v3414 = vsel %vm2406, %v723, %v3270
        %v3415 = vsel %vm2407, %v723, %v3271
        %v3416 = vsel %vm2408, %v723, %v3272
        %v3417 = vsel %vm2409, %v723, %v3273
        %v3418 = vsel %vm2410, %v723, %v3274
        %v3419 = vsel %vm2411, %v723, %v3275
        %v3420 = vsel %vm2412, %v723, %v3276
        %v3421 = vsel %vm2413, %v724, %v3277
        %v3422 = vsel %vm2414, %v724, %v3278
        %v3423 = vsel %vm2415, %v724, %v3279
        %v3424 = vsel %vm2416, %v724, %v3280
        %v3425 = vsel %vm2417, %v724, %v3281
        %v3426 = vsel %vm2418, %v724, %v3282
        %v3427 = vsel %vm2419, %v724, %v3283
        %v3428 = vsel %vm2420, %v724, %v3284
        %v3429 = vsel %vm2421, %v724, %v3285
        %v3430 = vsel %vm2422, %v724, %v3286
        %v3431 = vsel %vm2423, %v724, %v3287
        %v3432 = vsel %vm2424, %v724, %v3288
        %v3433 = vsel %vm2425, %v724, %v3289
        %v3434 = vsel %vm2426, %v724, %v3290
        %v3435 = vsel %vm2427, %v724, %v3291
        %v3436 = vsel %vm2428, %v724, %v3292
        %v3437 = vsel %vm2429, %v725, %v3293
        %v3438 = vsel %vm2430, %v725, %v3294
        %v3439 = vsel %vm2431, %v725, %v3295
        %v3440 = vsel %vm2432, %v725, %v3296
        %v3441 = vsel %vm2433, %v725, %v3297
        %v3442 = vsel %vm2434, %v725, %v3298
        %v3443 = vsel %vm2435, %v725, %v3299
        %v3444 = vsel %vm2436, %v725, %v3300
        %v3445 = vsel %vm2437, %v725, %v3301
        %v3446 = vsel %vm2438, %v725, %v3302
        %v3447 = vsel %vm2439, %v725, %v3303
        %v3448 = vsel %vm2440, %v725, %v3304
        %v3449 = vsel %vm2441, %v725, %v3305
        %v3450 = vsel %vm2442, %v725, %v3306
        %v3451 = vsel %vm2443, %v725, %v3307
        %v3452 = vsel %vm2444, %v725, %v3308
        %v3453 = vsel %vm2445, %v726, %v3309
        %v3454 = vsel %vm2446, %v726, %v3310
        %v3455 = vsel %vm2447, %v726, %v3311
        %v3456 = vsel %vm2448, %v726, %v3312
        %v3457 = vsel %vm2449, %v726, %v3313
        %v3458 = vsel %vm2450, %v726, %v3314
        %v3459 = vsel %vm2451, %v726, %v3315
        %v3460 = vsel %vm2452, %v726, %v3316
        %v3461 = vsel %vm2453, %v726, %v3317
        %v3462 = vsel %vm2454, %v726, %v3318
        %v3463 = vsel %vm2455, %v726, %v3319
        %v3464 = vsel %vm2456, %v726, %v3320
        %v3465 = vsel %vm2457, %v726, %v3321
        %v3466 = vsel %vm2458, %v726, %v3322
        %v3467 = vsel %vm2459, %v726, %v3323
        %v3468 = vsel %vm2460, %v726, %v3324
        %v3469 = vsel %vm2461, %v727, %v3325
        %v3470 = vsel %vm2462, %v727, %v3326
        %v3471 = vsel %vm2463, %v727, %v3327
        %v3472 = vsel %vm2464, %v727, %v3328
        %v3473 = vsel %vm2465, %v727, %v3329
        %v3474 = vsel %vm2466, %v727, %v3330
        %v3475 = vsel %vm2467, %v727, %v3331
        %v3476 = vsel %vm2468, %v727, %v3332
        %v3477 = vsel %vm2469, %v727, %v3333
        %v3478 = vsel %vm2470, %v727, %v3334
        %v3479 = vsel %vm2471, %v727, %v3335
        %v3480 = vsel %vm2472, %v727, %v3336
        %v3481 = vsel %vm2473, %v727, %v3337
        %v3482 = vsel %vm2474, %v727, %v3338
        %v3483 = vsel %vm2475, %v727, %v3339
        %v3484 = vsel %vm2476, %v727, %v3340
        %v3485 = vsel %vm2477, %v728, %v3341
        %v3486 = vsel %vm2478, %v728, %v3342
        %v3487 = vsel %vm2479, %v728, %v3343
        %v3488 = vsel %vm2480, %v728, %v3344
        %v3489 = vsel %vm2481, %v728, %v3345
        %v3490 = vsel %vm2482, %v728, %v3346
        %v3491 = vsel %vm2483, %v728, %v3347
        %v3492 = vsel %vm2484, %v728, %v3348
        %v3493 = vsel %vm2485, %v728, %v3349
        %v3494 = vsel %vm2486, %v728, %v3350
        %v3495 = vsel %vm2487, %v728, %v3351
        %v3496 = vsel %vm2488, %v728, %v3352
        %v3497 = vsel %vm2489, %v728, %v3353
        %v3498 = vsel %vm2490, %v728, %v3354
        %v3499 = vsel %vm2491, %v728, %v3355
        %v3500 = vsel %vm2492, %v728, %v3356
        %v3501 = vpack.c.bf16 %v3358, %v3357
        %v3502 = vpack.c.bf16 %v3360, %v3359
        %v3503 = vpack.c.bf16 %v3362, %v3361
        %v3504 = vpack.c.bf16 %v3364, %v3363
        %v3505 = vpack.c.bf16 %v3366, %v3365
        %v3506 = vpack.c.bf16 %v3368, %v3367
        %v3507 = vpack.c.bf16 %v3370, %v3369
        %v3508 = vpack.c.bf16 %v3372, %v3371
        %v3509 = vpack.c.bf16 %v3374, %v3373
        %v3510 = vpack.c.bf16 %v3376, %v3375
        %v3511 = vpack.c.bf16 %v3378, %v3377
        %v3512 = vpack.c.bf16 %v3380, %v3379
        %v3513 = vpack.c.bf16 %v3382, %v3381
        %v3514 = vpack.c.bf16 %v3384, %v3383
        %v3515 = vpack.c.bf16 %v3386, %v3385
        %v3516 = vpack.c.bf16 %v3388, %v3387
        %v3517 = vpack.c.bf16 %v3390, %v3389
        %v3518 = vpack.c.bf16 %v3392, %v3391
        %v3519 = vpack.c.bf16 %v3394, %v3393
        %v3520 = vpack.c.bf16 %v3396, %v3395
        %v3521 = vpack.c.bf16 %v3398, %v3397
        %v3522 = vpack.c.bf16 %v3400, %v3399
        %v3523 = vpack.c.bf16 %v3402, %v3401
        %v3524 = vpack.c.bf16 %v3404, %v3403
        %v3525 = vpack.c.bf16 %v3406, %v3405
        %v3526 = vpack.c.bf16 %v3408, %v3407
        %v3527 = vpack.c.bf16 %v3410, %v3409
        %v3528 = vpack.c.bf16 %v3412, %v3411
        %v3529 = vpack.c.bf16 %v3414, %v3413
        %v3530 = vpack.c.bf16 %v3416, %v3415
        %v3531 = vpack.c.bf16 %v3418, %v3417
        %v3532 = vpack.c.bf16 %v3420, %v3419
        %v3533 = vpack.c.bf16 %v3422, %v3421
        %v3534 = vpack.c.bf16 %v3424, %v3423
        %v3535 = vpack.c.bf16 %v3426, %v3425
        %v3536 = vpack.c.bf16 %v3428, %v3427
        %v3537 = vpack.c.bf16 %v3430, %v3429
        %v3538 = vpack.c.bf16 %v3432, %v3431
        %v3539 = vpack.c.bf16 %v3434, %v3433
        %v3540 = vpack.c.bf16 %v3436, %v3435
        %v3541 = vpack.c.bf16 %v3438, %v3437
        %v3542 = vpack.c.bf16 %v3440, %v3439
        %v3543 = vpack.c.bf16 %v3442, %v3441
        %v3544 = vpack.c.bf16 %v3444, %v3443
        %v3545 = vpack.c.bf16 %v3446, %v3445
        %v3546 = vpack.c.bf16 %v3448, %v3447
        %v3547 = vpack.c.bf16 %v3450, %v3449
        %v3548 = vpack.c.bf16 %v3452, %v3451
        %v3549 = vpack.c.bf16 %v3454, %v3453
        %v3550 = vpack.c.bf16 %v3456, %v3455
        %v3551 = vpack.c.bf16 %v3458, %v3457
        %v3552 = vpack.c.bf16 %v3460, %v3459
        %v3553 = vpack.c.bf16 %v3462, %v3461
        %v3554 = vpack.c.bf16 %v3464, %v3463
        %v3555 = vpack.c.bf16 %v3466, %v3465
        %v3556 = vpack.c.bf16 %v3468, %v3467
        %v3557 = vpack.c.bf16 %v3470, %v3469
        %v3558 = vpack.c.bf16 %v3472, %v3471
        %v3559 = vpack.c.bf16 %v3474, %v3473
        %v3560 = vpack.c.bf16 %v3476, %v3475
        %v3561 = vpack.c.bf16 %v3478, %v3477
        %v3562 = vpack.c.bf16 %v3480, %v3479
        %v3563 = vpack.c.bf16 %v3482, %v3481
        %v3564 = vpack.c.bf16 %v3484, %v3483
        %v3565 = vpack.c.bf16 %v3486, %v3485
        %v3566 = vpack.c.bf16 %v3488, %v3487
        %v3567 = vpack.c.bf16 %v3490, %v3489
        %v3568 = vpack.c.bf16 %v3492, %v3491
        %v3569 = vpack.c.bf16 %v3494, %v3493
        %v3570 = vpack.c.bf16 %v3496, %v3495
        %v3571 = vpack.c.bf16 %v3498, %v3497
        %v3572 = vpack.c.bf16 %v3500, %v3499
        %s3573 = scalar_lea.vmem %s351, 36
        %v3574 = vld [vmem:[%s3573] sm:$0xff]
        %v3575 = vld [vmem:[%s3573 + $0x8] sm:$0xff]
        %v3576 = vld [vmem:[%s3573 + $0x10] sm:$0xff]
        %v3577 = vld [vmem:[%s3573 + $0x18] sm:$0xff]
        %v3578 = vld [vmem:[%s3573 + $0x20] sm:$0xf]
        %v3584 = vunpack.c.l.b16 %v3574
        %v3585 = vunpack.c.h.b16 %v3574
        %v3586 = vunpack.c.l.b16 %v3575
        %v3587 = vunpack.c.h.b16 %v3575
        %v3588 = vunpack.c.l.b16 %v3576
        %v3589 = vunpack.c.h.b16 %v3576
        %v3590 = vunpack.c.l.b16 %v3577
        %v3591 = vunpack.c.h.b16 %v3577
        %v3592 = vunpack.c.l.b16 %v3578
        %v3593 = vpack.c.b16 %v3584, %v3584
        %v3594 = vpack.c.b16 %v3585, %v3585
        %v3595 = vpack.c.b16 %v3586, %v3586
        %v3596 = vpack.c.b16 %v3587, %v3587
        %v3597 = vpack.c.b16 %v3588, %v3588
        %v3598 = vpack.c.b16 %v3589, %v3589
        %v3599 = vpack.c.b16 %v3590, %v3590
        %v3600 = vpack.c.b16 %v3591, %v3591
        %v3601 = vpack.c.b16 %v3592, %v3592
        %3611 = vmatpush.bf16.msra.mxu0 %v3508
        %3612 = vmatpush.bf16.msra.mxu0 %v3507
        %3613 = vmatpush.bf16.msra.mxu0 %v3506
        %3614 = vmatpush.bf16.msra.mxu0 %v3505
        %3615 = vmatpush.bf16.msra.mxu0 %v3504
        %3616 = vmatpush.bf16.msra.mxu0 %v3503
        %3617 = vmatpush.bf16.msra.mxu0 %v3502
        %3618 = vmatpush.bf16.msra.mxu0 %v3501
        %3619 = vmatmul.bf16.gmra.mxu0 %v3593
        %v3620 = vpop.f32.mrf.mxu0
        %v3621 = vadd.f32 0.0, %v3620
        %v3622 = vpop.f32.mrf.mxu0
        %3623 = vdwg.mxu0
        %3624 = vmatpush.bf16.msra.mxu0 %v3516
        %3625 = vmatpush.bf16.msra.mxu0 %v3515
        %3626 = vmatpush.bf16.msra.mxu0 %v3514
        %3627 = vmatpush.bf16.msra.mxu0 %v3513
        %3628 = vmatpush.bf16.msra.mxu0 %v3512
        %3629 = vmatpush.bf16.msra.mxu0 %v3511
        %3630 = vmatpush.bf16.msra.mxu0 %v3510
        %3631 = vmatpush.bf16.msra.mxu0 %v3509
        %3632 = vmatmul.bf16.gmra.mxu0 %v3594
        %v3633 = vpop.f32.mrf.mxu0
        %v3634 = vadd.f32 %v3621, %v3633
        %v3635 = vpop.f32.mrf.mxu0
        %3636 = vdwg.mxu0
        %3637 = vmatpush.bf16.msra.mxu0 %v3524
        %3638 = vmatpush.bf16.msra.mxu0 %v3523
        %3639 = vmatpush.bf16.msra.mxu0 %v3522
        %3640 = vmatpush.bf16.msra.mxu0 %v3521
        %3641 = vmatpush.bf16.msra.mxu0 %v3520
        %3642 = vmatpush.bf16.msra.mxu0 %v3519
        %3643 = vmatpush.bf16.msra.mxu0 %v3518
        %3644 = vmatpush.bf16.msra.mxu0 %v3517
        %3645 = vmatmul.bf16.gmra.mxu0 %v3595
        %v3646 = vpop.f32.mrf.mxu0
        %v3647 = vadd.f32 %v3634, %v3646
        %v3648 = vpop.f32.mrf.mxu0
        %3649 = vdwg.mxu0
        %3650 = vmatpush.bf16.msra.mxu0 %v3532
        %3651 = vmatpush.bf16.msra.mxu0 %v3531
        %3652 = vmatpush.bf16.msra.mxu0 %v3530
        %3653 = vmatpush.bf16.msra.mxu0 %v3529
        %3654 = vmatpush.bf16.msra.mxu0 %v3528
        %3655 = vmatpush.bf16.msra.mxu0 %v3527
        %3656 = vmatpush.bf16.msra.mxu0 %v3526
        %3657 = vmatpush.bf16.msra.mxu0 %v3525
        %3658 = vmatmul.bf16.gmra.mxu0 %v3596
        %v3659 = vpop.f32.mrf.mxu0
        %v3660 = vadd.f32 %v3647, %v3659
        %v3661 = vpop.f32.mrf.mxu0
        %3662 = vdwg.mxu0
        %3663 = vmatpush.bf16.msra.mxu0 %v3540
        %3664 = vmatpush.bf16.msra.mxu0 %v3539
        %3665 = vmatpush.bf16.msra.mxu0 %v3538
        %3666 = vmatpush.bf16.msra.mxu0 %v3537
        %3667 = vmatpush.bf16.msra.mxu0 %v3536
        %3668 = vmatpush.bf16.msra.mxu0 %v3535
        %3669 = vmatpush.bf16.msra.mxu0 %v3534
        %3670 = vmatpush.bf16.msra.mxu0 %v3533
        %3671 = vmatmul.bf16.gmra.mxu0 %v3597
        %v3672 = vpop.f32.mrf.mxu0
        %v3673 = vadd.f32 %v3660, %v3672
        %v3674 = vpop.f32.mrf.mxu0
        %3675 = vdwg.mxu0
        %3676 = vmatpush.bf16.msra.mxu0 %v3548
        %3677 = vmatpush.bf16.msra.mxu0 %v3547
        %3678 = vmatpush.bf16.msra.mxu0 %v3546
        %3679 = vmatpush.bf16.msra.mxu0 %v3545
        %3680 = vmatpush.bf16.msra.mxu0 %v3544
        %3681 = vmatpush.bf16.msra.mxu0 %v3543
        %3682 = vmatpush.bf16.msra.mxu0 %v3542
        %3683 = vmatpush.bf16.msra.mxu0 %v3541
        %3684 = vmatmul.bf16.gmra.mxu0 %v3598
        %v3685 = vpop.f32.mrf.mxu0
        %v3686 = vadd.f32 %v3673, %v3685
        %v3687 = vpop.f32.mrf.mxu0
        %3688 = vdwg.mxu0
        %3689 = vmatpush.bf16.msra.mxu0 %v3556
        %3690 = vmatpush.bf16.msra.mxu0 %v3555
        %3691 = vmatpush.bf16.msra.mxu0 %v3554
        %3692 = vmatpush.bf16.msra.mxu0 %v3553
        %3693 = vmatpush.bf16.msra.mxu0 %v3552
        %3694 = vmatpush.bf16.msra.mxu0 %v3551
        %3695 = vmatpush.bf16.msra.mxu0 %v3550
        %3696 = vmatpush.bf16.msra.mxu0 %v3549
        %3697 = vmatmul.bf16.gmra.mxu0 %v3599
        %v3698 = vpop.f32.mrf.mxu0
        %v3699 = vadd.f32 %v3686, %v3698
        %v3700 = vpop.f32.mrf.mxu0
        %3701 = vdwg.mxu0
        %3702 = vmatpush.bf16.msra.mxu0 %v3564
        %3703 = vmatpush.bf16.msra.mxu0 %v3563
        %3704 = vmatpush.bf16.msra.mxu0 %v3562
        %3705 = vmatpush.bf16.msra.mxu0 %v3561
        %3706 = vmatpush.bf16.msra.mxu0 %v3560
        %3707 = vmatpush.bf16.msra.mxu0 %v3559
        %3708 = vmatpush.bf16.msra.mxu0 %v3558
        %3709 = vmatpush.bf16.msra.mxu0 %v3557
        %3710 = vmatmul.bf16.gmra.mxu0 %v3600
        %v3711 = vpop.f32.mrf.mxu0
        %v3712 = vadd.f32 %v3699, %v3711
        %v3713 = vpop.f32.mrf.mxu0
        %3714 = vdwg.mxu0
        %3715 = vmatpush.bf16.msra.mxu0 %v3572
        %3716 = vmatpush.bf16.msra.mxu0 %v3571
        %3717 = vmatpush.bf16.msra.mxu0 %v3570
        %3718 = vmatpush.bf16.msra.mxu0 %v3569
        %3719 = vmatpush.bf16.msra.mxu0 %v3568
        %3720 = vmatpush.bf16.msra.mxu0 %v3567
        %3721 = vmatpush.bf16.msra.mxu0 %v3566
        %3722 = vmatpush.bf16.msra.mxu0 %v3565
        %3723 = vmatmul.bf16.gmra.mxu0 %v3601
        %v3724 = vpop.f32.mrf.mxu0
        %v3725 = vadd.f32 %v3712, %v3724
        %v3726 = vpop.f32.mrf.mxu0
        %3727 = vdwg.mxu0
        %v3728 = vadd.f32 %v2204, %v3725
        %v3729 = vmax.f32 %v3728, 0.0
        %3730 = vst [vmem:[%s346] sm:$0xff] %v3729
        %s3731 = sand.u32 %s185, 1
        %s3732 = scalar_lea.sflag [#allocation4], %s3731
        %s3733 = sand.u32 %s185, 1
        %s3734 = smul.addr %s3733, 8
        %s3735 = scalar_lea.vmem [#allocation3], %s3734
        // Predicated region
        $region83: #{tpu_custom_call.1} parent=77 // pred_check
          %p3736 = pneg %p195
        $region84: #{tpu_custom_call.1} parent=77 // pred_check_branch
          %3738 = sbr.rel (%p3736) target = $region86
        $region85: #{tpu_custom_call.1} parent=77 // pred_region
          %3740 = vsyncadd %s3732, 0
          %s3741 = smul.addr %s24, 2
          %s3742 = sadd.s32 %s25, %s3741
          %s3743 = smul.addr %s3742, 8
          %s3744 = scalar_lea.hbm %s6, %s3743
          %s3746 = sshll.u32 %s3735, 4
          %s3747 = int_to_ptr.vmem [resolvable:$true] %s3746
          %s3748 = sshll.u32 %s3744, 4
          %s3749 = int_to_ptr.hbm [resolvable:$true] %s3748
          %3751 = dma.vmem_to_hbm [thread:$0]  %s3747, 128, %s3749, %s3732
        $region86: #{tpu_custom_call.1} parent=77 // pred_fallthru
          _
      $region78: #{tpu_custom_call.1} parent=5 // pred_fallthru
        _
      %p3752 = scmp.le.s32.totalorder 2, %s15
      // Predicated region
      $region87: #{tpu_custom_call.1} parent=5 // pred_check
        %p3753 = pneg %p3752
      $region88: #{tpu_custom_call.1} parent=5 // pred_check_branch
        %3755 = sbr.rel (%p3753) target = $region90
      $region89: #{tpu_custom_call.1} parent=5 // pred_region
        %s3756 = ssub.s32 %s15, 2
        // Predicated region
        $region91: #{tpu_custom_call.1} parent=89 // pred_check
          %p3757 = pneg %p201
        $region92: #{tpu_custom_call.1} parent=89 // pred_check_branch
          %3759 = sbr.rel (%p3757) target = $region94
        $region93: #{tpu_custom_call.1} parent=89 // pred_region
          %s3760 = sand.u32 %s186, 1
          %s3761 = scalar_lea.sflag [#allocation4], %s3760
          %s3762 = sand.u32 %s186, 1
          %s3763 = smul.addr %s3762, 8
          %s3764 = scalar_lea.vmem [#allocation3], %s3763
          %3766 = dma.done %s3761, 128
        $region94: #{tpu_custom_call.1} parent=89 // pred_fallthru
          _
      $region90: #{tpu_custom_call.1} parent=5 // pred_fallthru
        _
    $region6: #{tpu_custom_call.1} parent=1 // loop_footer
      %s19 = sadd.s32 1, %s15
    $region7: #{tpu_custom_call.1} parent=1 // loop_footer_branch
      %14 = sbr.rel target = $region3
    $region8: #{tpu_custom_call.1} parent=1 // loop_exit
      _
    %3767 = vsyncpa [#allocation4], 1
    %s3768 = scalar_lea.sflag [#allocation4], 1
    %3769 = vsyncpa %s3768, 1

</llo_original>
